<compile_context>
chip_gen: v7x
topology: tpu7x:2x2x1
jax: 0.10.0
libtpu: 0.0.40
codegen_flags: <defaults>
</compile_context>

<pallas_src>
import functools

import jax
import jax.numpy as jnp
import numpy as np
from jax import lax
from jax.experimental import pallas as pl
from jax.experimental.pallas import tpu as pltpu

KSIZE = 7
PAD = 3
BN_EPS = 1e-5


def _cbam_kernel(x_ref, w1t_ref, w2t_ref, wsp_ref, bn_ref, out_ref, *, H, W):
    Nb, C, HW = x_ref.shape
    # Flat zero-pad per side; rounded to a multiple of 64 lanes so the padded
    # buffer (2*PADF + HW) is a whole number of 128-lane vregs when HW is.
    PADF = ((PAD * W + PAD + 63) // 64) * 64
    assert PADF >= PAD * W + PAD  # zero margin otherwise for the largest tap shift

    x = x_ref[...].astype(jnp.float32)                             # (Nb, C, HW)

    # ---------------- Channel attention (shared MLP on the MXU) ----------------
    avg = jnp.sum(x, axis=2) * (1.0 / HW)                          # (Nb, C)  AdaptiveAvgPool2d(1)
    mxp = jnp.max(x, axis=2)                                       # (Nb, C)  AdaptiveMaxPool2d(1)
    stats = jnp.concatenate([avg, mxp], axis=0)                    # (2*Nb, C) one relayout-free pack
    h = jnp.maximum(
        jnp.dot(stats, w1t_ref[...], preferred_element_type=jnp.float32,
                precision=lax.Precision.HIGHEST), 0.0)             # (2*Nb, Cr)
    logits = jnp.dot(h, w2t_ref[...], preferred_element_type=jnp.float32,
                     precision=lax.Precision.HIGHEST)              # (2*Nb, C)
    ca = jax.nn.sigmoid(logits[:Nb] + logits[Nb:])                 # (Nb, C)  mlp(avg)+mlp(max)

    # x1 = x * ca goes straight into out_ref; the channel maps are read back from
    # it so no second block-sized temporary stays live across the conv below.
    out_ref[...] = (x * ca[:, :, None]).astype(out_ref.dtype)
    x1 = out_ref[...].astype(jnp.float32)                          # (Nb, C, HW) VMEM reload

    # ---------------- Spatial attention (sublane-packed 7x7 conv) ----------------
    max_map = jnp.max(x1, axis=1)                                  # (Nb, HW) max over channels
    mean_map = jnp.sum(x1, axis=1) * (1.0 / C)                     # (Nb, HW) mean over channels

    zpad = jnp.zeros((Nb, PADF), jnp.float32)
    # cat order = [max, mean], matching torch.cat([max_out, avg_out], dim=1)
    padded = (jnp.concatenate([zpad, max_map, zpad], axis=1),      # conv input channel 0
              jnp.concatenate([zpad, mean_map, zpad], axis=1))     # conv input channel 1

    col = lax.broadcasted_iota(jnp.int32, (1, HW), 1) % W          # column index of each lane

    acc0 = jnp.zeros((Nb, HW), jnp.float32)
    acc1 = jnp.zeros((Nb, HW), jnp.float32)
    for kj in range(KSIZE):
        dkj = kj - PAD
        # Vertical (row) over/underflow lands in the flat zero pad; only the
        # horizontal wrap across image columns needs masking (hoisted per kj).
        col_ok = jnp.logical_and(col + dkj >= 0, col + dkj < W)
        part0 = jnp.zeros((Nb, HW), jnp.float32)
        part1 = jnp.zeros((Nb, HW), jnp.float32)
        for c in range(2):
            for ki in range(KSIZE):
                dki = ki - PAD
                start = PADF + dki * W + dkj
                win = padded[c][:, start:start + HW]               # (Nb, HW) static lane window
                wv = wsp_ref[c * KSIZE * KSIZE + ki * KSIZE + kj]  # scalar from SMEM
                if ki % 2 == 0:
                    part0 = part0 + wv * win
                else:
                    part1 = part1 + wv * win
        masked = jnp.where(col_ok, part0 + part1, 0.0)
        if kj % 2 == 0:
            acc0 = acc0 + masked
        else:
            acc1 = acc1 + masked
    conv = acc0 + acc1                                             # (Nb, HW)

    gamma = bn_ref[0]
    beta = bn_ref[1]
    r_mean = bn_ref[2]
    r_var = bn_ref[3]
    attn = jax.nn.sigmoid((conv - r_mean) * lax.rsqrt(r_var + BN_EPS) * gamma + beta)

    # Final in-place scale of the already-stored x*ca block.
    out_ref[...] = (out_ref[...].astype(jnp.float32) * attn[:, None, :]).astype(out_ref.dtype)


def _pick_batch_block(N, C, HW, max_bytes=2 << 20, min_steps=4):
    """Batch-block size (samples): biggest block <= max_bytes, but keep >= min_steps
    grid steps when N allows it (pipelining overlap + v7x dual-TC sharding)."""
    per_sample = C * HW * 4                      # f32 bytes
    nb = max(1, min(N, max_bytes // per_sample))
    if N >= min_steps:
        nb = min(nb, max(1, N // min_steps))
    if nb >= 8:
        nb -= nb % 8                             # full sublane packs in the spatial path
    return max(1, nb)


def cbam_pallas(x, w1, w2, wsp, bn_params):
    """x: (N, C, H, W) f32; w1: (C//r, C); w2: (C, C//r); wsp: (2, 7, 7);
    bn_params: (4,) = [gamma, beta, running_mean, running_var] (eval-mode BN)."""
    N, C, H, W = x.shape
    Cr = w1.shape[0]
    HW = H * W

    x3 = x.reshape(N, C, HW)            # lane-dense view (H*W on the lane axis)
    wsp_flat = wsp.reshape(-1)          # (98,) scalars -> SMEM
    w1t = jnp.transpose(w1)             # (C, Cr) so the MLP is (2Nb,C)@(C,Cr)
    w2t = jnp.transpose(w2)             # (Cr, C)

    Nb = _pick_batch_block(N, C, HW)
    grid_n = pl.cdiv(N, Nb)
    Np = grid_n * Nb
    if Np != N:
        # Ragged batch tail: samples are independent, so zero-pad and slice off.
        x3 = jnp.pad(x3, ((0, Np - N), (0, 0), (0, 0)))

    kernel = functools.partial(_cbam_kernel, H=H, W=W)

    grid_spec = pltpu.PrefetchScalarGridSpec(
        num_scalar_prefetch=0,
        grid=(grid_n,),
        in_specs=[
            pl.BlockSpec((Nb, C, HW), lambda n: (n, 0, 0)),
            pl.BlockSpec((C, Cr), lambda n: (0, 0)),
            pl.BlockSpec((Cr, C), lambda n: (0, 0)),
            pl.BlockSpec(memory_space=pltpu.MemorySpace.SMEM),
            pl.BlockSpec(memory_space=pltpu.MemorySpace.SMEM),
        ],
        out_specs=pl.BlockSpec((Nb, C, HW), lambda n: (n, 0, 0)),
    )

    cost = pl.CostEstimate(
        flops=Np * (4 * KSIZE * KSIZE * HW + 8 * C * Cr + 10 * C * HW),
        transcendentals=Np * (C + HW),
        bytes_accessed=2 * Np * C * HW * 4 + 8 * C * Cr + (2 * KSIZE * KSIZE + 4) * 4,
    )

    out3 = pl.pallas_call(
        kernel,
        out_shape=jax.ShapeDtypeStruct((Np, C, HW), x.dtype),
        grid_spec=grid_spec,
        compiler_params=pltpu.CompilerParams(
            dimension_semantics=("parallel",),
            vmem_limit_bytes=48 * 1024 * 1024,
        ),
        cost_estimate=cost,
    )(x3, w1t, w2t, wsp_flat, bn_params)

    return out3[:N].reshape(N, C, H, W)


def cbam_ref(x, w1, w2, wsp, bn_params):
    """Pure-JAX reference mirroring the PyTorch forward (eval-mode BN)."""
    gamma, beta, rm, rv = bn_params
    hi = lax.Precision.HIGHEST

    avg = jnp.mean(x, axis=(2, 3), keepdims=True)
    mx = jnp.max(x, axis=(2, 3), keepdims=True)

    def mlp(v):
        h = jnp.maximum(jnp.einsum("rc,ncij->nrij", w1, v, precision=hi), 0.0)
        return jnp.einsum("cr,nrij->ncij", w2, h, precision=hi)

    ca = jax.nn.sigmoid(mlp(avg) + mlp(mx))
    x1 = x * ca

    feat = jnp.concatenate(
        [jnp.max(x1, axis=1, keepdims=True), jnp.mean(x1, axis=1, keepdims=True)], axis=1
    )
    conv = lax.conv_general_dilated(
        feat,
        wsp[None],  # (1, 2, 7, 7)
        window_strides=(1, 1),
        padding=((PAD, PAD), (PAD, PAD)),
        dimension_numbers=("NCHW", "OIHW", "NCHW"),
        precision=hi,
    )
    bn = (conv - rm) * lax.rsqrt(rv + BN_EPS) * gamma + beta
    return x1 * jax.nn.sigmoid(bn)


if __name__ == "__main__":
    N, C, H, W = 4, 64, 16, 16
    reduction = 16
    Cr = C // reduction

    key = jax.random.PRNGKey(0)
    kx, k1, k2, k3 = jax.random.split(key, 4)
    x = jax.random.normal(kx, (N, C, H, W), dtype=jnp.float32)
    # Deterministic synthetic parameters (shapes follow the PyTorch __init__).
    w1 = 0.1 * jax.random.normal(k1, (Cr, C), dtype=jnp.float32)             # Conv2d(C, C//r, 1)
    w2 = 0.1 * jax.random.normal(k2, (C, Cr), dtype=jnp.float32)             # Conv2d(C//r, C, 1)
    wsp = 0.1 * jax.random.normal(k3, (2, KSIZE, KSIZE), dtype=jnp.float32)  # Conv2d(2, 1, 7)
    bn_params = jnp.array([1.25, 0.1, 0.05, 0.9], dtype=jnp.float32)         # gamma, beta, mean, var

    out = cbam_pallas(x, w1, w2, wsp, bn_params)
    jax.block_until_ready(out)

    ref = cbam_ref(x, w1, w2, wsp, bn_params)
    # MXU dots run at HIGHEST precision now, so only accumulation-order noise remains.
    np.testing.assert_allclose(np.asarray(out), np.asarray(ref), rtol=1e-4, atol=1e-5)

    print("KERNEL_OK")
</pallas_src>

<mosaic_0001>
module attributes {stable_mosaic.version = 11 : i64} {
  func.func @_cbam_kernel(%arg0: i32, %arg1: memref<1x64x256xf32, #tpu.memory_space<vmem>>, %arg2: memref<64x4xf32, #tpu.memory_space<vmem>>, %arg3: memref<4x64xf32, #tpu.memory_space<vmem>>, %arg4: memref<98xf32, #tpu.memory_space<smem>>, %arg5: memref<4xf32, #tpu.memory_space<smem>>, %arg6: memref<1x64x256xf32, #tpu.memory_space<vmem>>) attributes {dimension_semantics = [#tpu.dimension_semantics<parallel>], iteration_bounds = array<i64: 4>, scalar_prefetch = 0 : i64, scratch_operands = 0 : i64, tpu.core_type = #tpu.core_type<tc>, window_params = [{transform_indices = @transform_0, window_bounds = array<i64: 1, 64, 256>}, {pipeline_mode = #tpu.pipeline_mode<synchronous>, transform_indices = @transform_1, window_bounds = array<i64: 64, 4>}, {pipeline_mode = #tpu.pipeline_mode<synchronous>, transform_indices = @transform_2, window_bounds = array<i64: 4, 64>}, {transform_indices = @transform_3, window_bounds = array<i64: 98>}, {transform_indices = @transform_4, window_bounds = array<i64: 4>}, {transform_indices = @transform_5, window_bounds = array<i64: 1, 64, 256>}]} {
    %c0 = arith.constant 0 : index
    %c0_0 = arith.constant 0 : index
    %c0_1 = arith.constant 0 : index
    %0 = vector.load %arg1[%c0, %c0_0, %c0_1] : memref<1x64x256xf32, #tpu.memory_space<vmem>>, vector<1x64x256xf32>
    %cst = arith.constant dense<0.000000e+00> : vector<1x64xf32>
    %1 = vector.multi_reduction <add>, %0, %cst [2] : vector<1x64x256xf32> to vector<1x64xf32>
    %cst_2 = arith.constant 3.906250e-03 : f32
    %2 = vector.broadcast %cst_2 : f32 to vector<1x64xf32>
    %3 = arith.mulf %1, %2 : vector<1x64xf32>
    %cst_3 = arith.constant dense<0xFF800000> : vector<1x64xf32>
    %4 = vector.multi_reduction <maximumf>, %0, %cst_3 [2] : vector<1x64x256xf32> to vector<1x64xf32>
    %5 = tpu.concatenate %3, %4 in 0 : vector<1x64xf32>, vector<1x64xf32> -> vector<2x64xf32>
    %c0_4 = arith.constant 0 : index
    %c0_5 = arith.constant 0 : index
    %6 = vector.load %arg2[%c0_4, %c0_5] : memref<64x4xf32, #tpu.memory_space<vmem>>, vector<64x4xf32>
    %cst_6 = arith.constant dense<0.000000e+00> : vector<2x4xf32>
    %7 = tpu.matmul %5, %6, %cst_6 {dimension_numbers = #tpu.dot_dimension_numbers<[1], [0], [0], [1], [0, 0, 1, 1], [], []>, precision = #tpu.contract_precision<fp32>} : vector<2x64xf32>, vector<64x4xf32>, vector<2x4xf32> -> vector<2x4xf32>
    %cst_7 = arith.constant 0.000000e+00 : f32
    %8 = vector.broadcast %cst_7 : f32 to vector<2x4xf32>
    %9 = arith.maximumf %7, %8 : vector<2x4xf32>
    %c0_8 = arith.constant 0 : index
    %c0_9 = arith.constant 0 : index
    %10 = vector.load %arg3[%c0_8, %c0_9] : memref<4x64xf32, #tpu.memory_space<vmem>>, vector<4x64xf32>
    %cst_10 = arith.constant dense<0.000000e+00> : vector<2x64xf32>
    %11 = tpu.matmul %9, %10, %cst_10 {dimension_numbers = #tpu.dot_dimension_numbers<[1], [0], [0], [1], [0, 0, 1, 1], [], []>, precision = #tpu.contract_precision<fp32>} : vector<2x4xf32>, vector<4x64xf32>, vector<2x64xf32> -> vector<2x64xf32>
    %12 = vector.extract_strided_slice %11 {offsets = [0, 0], sizes = [1, 64], strides = [1, 1]} : vector<2x64xf32> to vector<1x64xf32>
    %13 = vector.extract_strided_slice %11 {offsets = [1, 0], sizes = [1, 64], strides = [1, 1]} : vector<2x64xf32> to vector<1x64xf32>
    %14 = arith.addf %12, %13 : vector<1x64xf32>
    %15 = arith.negf %14 : vector<1x64xf32>
    %16 = math.exp %15 : vector<1x64xf32>
    %cst_11 = arith.constant 1.000000e+00 : f32
    %17 = vector.broadcast %cst_11 : f32 to vector<1x64xf32>
    %18 = arith.addf %17, %16 : vector<1x64xf32>
    %19 = arith.divf %17, %18 : vector<1x64xf32>
    %20 = vector.shape_cast %19 : vector<1x64xf32> to vector<1x64x1xf32>
    %21 = vector.broadcast %20 : vector<1x64x1xf32> to vector<1x64x256xf32>
    %22 = arith.mulf %0, %21 : vector<1x64x256xf32>
    %c0_12 = arith.constant 0 : index
    %c0_13 = arith.constant 0 : index
    %c0_14 = arith.constant 0 : index
    %23 = vector.load %arg6[%c0_12, %c0_13, %c0_14] : memref<1x64x256xf32, #tpu.memory_space<vmem>>, vector<1x64x256xf32>
    tpu.vector_store %arg6[%c0_12, %c0_13, %c0_14], %22 {strides = array<i32>} : memref<1x64x256xf32, #tpu.memory_space<vmem>>, vector<1x64x256xf32>,
    %c0_15 = arith.constant 0 : index
    %c0_16 = arith.constant 0 : index
    %c0_17 = arith.constant 0 : index
    %24 = vector.load %arg6[%c0_15, %c0_16, %c0_17] : memref<1x64x256xf32, #tpu.memory_space<vmem>>, vector<1x64x256xf32>
    %cst_18 = arith.constant dense<0xFF800000> : vector<1x256xf32>
    %25 = vector.multi_reduction <maximumf>, %24, %cst_18 [1] : vector<1x64x256xf32> to vector<1x256xf32>
    %cst_19 = arith.constant dense<0.000000e+00> : vector<1x256xf32>
    %26 = vector.multi_reduction <add>, %24, %cst_19 [1] : vector<1x64x256xf32> to vector<1x256xf32>
    %cst_20 = arith.constant 1.562500e-02 : f32
    %27 = vector.broadcast %cst_20 : f32 to vector<1x256xf32>
    %28 = arith.mulf %26, %27 : vector<1x256xf32>
    %cst_21 = arith.constant 0.000000e+00 : f32
    %29 = vector.broadcast %cst_21 : f32 to vector<1x64xf32>
    %30 = tpu.concatenate %29, %25, %29 in 1 : vector<1x64xf32>, vector<1x256xf32>, vector<1x64xf32> -> vector<1x384xf32>
    %31 = tpu.concatenate %29, %28, %29 in 1 : vector<1x64xf32>, vector<1x256xf32>, vector<1x64xf32> -> vector<1x384xf32>
    %32 = tpu.iota {dimensions = array<i32: 1>} : vector<1x256xi32>
    %c16_i32 = arith.constant 16 : i32
    %c0_i32 = arith.constant 0 : i32
    %33 = arith.cmpi eq, %c16_i32, %c0_i32 : i32
    %c1_i32 = arith.constant 1 : i32
    %34 = arith.select %33, %c1_i32, %c16_i32 : i32
    %35 = vector.broadcast %34 : i32 to vector<1x256xi32>
    %36 = arith.remsi %32, %35 : vector<1x256xi32>
    %c0_i32_22 = arith.constant 0 : i32
    %37 = vector.broadcast %c0_i32_22 : i32 to vector<1x256xi32>
    %38 = arith.cmpi ne, %36, %37 : vector<1x256xi32>
    %c0_i32_23 = arith.constant 0 : i32
    %39 = vector.broadcast %c0_i32_23 : i32 to vector<1x256xi32>
    %40 = arith.cmpi slt, %36, %39 : vector<1x256xi32>
    %c0_i32_24 = arith.constant 0 : i32
    %41 = arith.cmpi slt, %34, %c0_i32_24 : i32
    %42 = vector.broadcast %41 : i1 to vector<1x256xi1>
    %43 = vector.broadcast %42 : vector<1x256xi1> to vector<1x256xi1>
    %44 = arith.xori %40, %43 : vector<1x256xi1>
    %45 = arith.andi %44, %38 : vector<1x256xi1>
    %46 = vector.broadcast %34 : i32 to vector<1x256xi32>
    %47 = arith.addi %36, %46 : vector<1x256xi32>
    %48 = arith.select %45, %47, %36 : vector<1x256xi1>, vector<1x256xi32>
    %cst_25 = arith.constant 0.000000e+00 : f32
    %49 = vector.broadcast %cst_25 : f32 to vector<1x256xf32>
    %cst_26 = arith.constant 0.000000e+00 : f32
    %50 = vector.broadcast %cst_26 : f32 to vector<1x256xf32>
    %c-3_i32 = arith.constant -3 : i32
    %51 = vector.broadcast %c-3_i32 : i32 to vector<1x256xi32>
    %52 = arith.addi %48, %51 : vector<1x256xi32>
    %c0_i32_27 = arith.constant 0 : i32
    %53 = vector.broadcast %c0_i32_27 : i32 to vector<1x256xi32>
    %54 = arith.cmpi sge, %52, %53 : vector<1x256xi32>
    %c-3_i32_28 = arith.constant -3 : i32
    %55 = vector.broadcast %c-3_i32_28 : i32 to vector<1x256xi32>
    %56 = arith.addi %48, %55 : vector<1x256xi32>
    %c16_i32_29 = arith.constant 16 : i32
    %57 = vector.broadcast %c16_i32_29 : i32 to vector<1x256xi32>
    %58 = arith.cmpi slt, %56, %57 : vector<1x256xi32>
    %59 = arith.andi %54, %58 : vector<1x256xi1>
    %cst_30 = arith.constant 0.000000e+00 : f32
    %60 = vector.broadcast %cst_30 : f32 to vector<1x256xf32>
    %cst_31 = arith.constant 0.000000e+00 : f32
    %61 = vector.broadcast %cst_31 : f32 to vector<1x256xf32>
    %62 = vector.extract_strided_slice %30 {offsets = [0, 13], sizes = [1, 256], strides = [1, 1]} : vector<1x384xf32> to vector<1x256xf32>
    %c0_32 = arith.constant 0 : index
    %63 = memref.load %arg4[%c0_32] : memref<98xf32, #tpu.memory_space<smem>>
    %64 = vector.broadcast %63 : f32 to vector<1x256xf32>
    %65 = arith.mulf %64, %62 : vector<1x256xf32>
    %66 = arith.addf %60, %65 : vector<1x256xf32>
    %67 = vector.extract_strided_slice %30 {offsets = [0, 29], sizes = [1, 256], strides = [1, 1]} : vector<1x384xf32> to vector<1x256xf32>
    %c7 = arith.constant 7 : index
    %68 = memref.load %arg4[%c7] : memref<98xf32, #tpu.memory_space<smem>>
    %69 = vector.broadcast %68 : f32 to vector<1x256xf32>
    %70 = arith.mulf %69, %67 : vector<1x256xf32>
    %71 = arith.addf %61, %70 : vector<1x256xf32>
    %72 = vector.extract_strided_slice %30 {offsets = [0, 45], sizes = [1, 256], strides = [1, 1]} : vector<1x384xf32> to vector<1x256xf32>
    %c14 = arith.constant 14 : index
    %73 = memref.load %arg4[%c14] : memref<98xf32, #tpu.memory_space<smem>>
    %74 = vector.broadcast %73 : f32 to vector<1x256xf32>
    %75 = arith.mulf %74, %72 : vector<1x256xf32>
    %76 = arith.addf %66, %75 : vector<1x256xf32>
    %77 = vector.extract_strided_slice %30 {offsets = [0, 61], sizes = [1, 256], strides = [1, 1]} : vector<1x384xf32> to vector<1x256xf32>
    %c21 = arith.constant 21 : index
    %78 = memref.load %arg4[%c21] : memref<98xf32, #tpu.memory_space<smem>>
    %79 = vector.broadcast %78 : f32 to vector<1x256xf32>
    %80 = arith.mulf %79, %77 : vector<1x256xf32>
    %81 = arith.addf %71, %80 : vector<1x256xf32>
    %82 = vector.extract_strided_slice %30 {offsets = [0, 77], sizes = [1, 256], strides = [1, 1]} : vector<1x384xf32> to vector<1x256xf32>
    %c28 = arith.constant 28 : index
    %83 = memref.load %arg4[%c28] : memref<98xf32, #tpu.memory_space<smem>>
    %84 = vector.broadcast %83 : f32 to vector<1x256xf32>
    %85 = arith.mulf %84, %82 : vector<1x256xf32>
    %86 = arith.addf %76, %85 : vector<1x256xf32>
    %87 = vector.extract_strided_slice %30 {offsets = [0, 93], sizes = [1, 256], strides = [1, 1]} : vector<1x384xf32> to vector<1x256xf32>
    %c35 = arith.constant 35 : index
    %88 = memref.load %arg4[%c35] : memref<98xf32, #tpu.memory_space<smem>>
    %89 = vector.broadcast %88 : f32 to vector<1x256xf32>
    %90 = arith.mulf %89, %87 : vector<1x256xf32>
    %91 = arith.addf %81, %90 : vector<1x256xf32>
    %92 = vector.extract_strided_slice %30 {offsets = [0, 109], sizes = [1, 256], strides = [1, 1]} : vector<1x384xf32> to vector<1x256xf32>
    %c42 = arith.constant 42 : index
    %93 = memref.load %arg4[%c42] : memref<98xf32, #tpu.memory_space<smem>>
    %94 = vector.broadcast %93 : f32 to vector<1x256xf32>
    %95 = arith.mulf %94, %92 : vector<1x256xf32>
    %96 = arith.addf %86, %95 : vector<1x256xf32>
    %97 = vector.extract_strided_slice %31 {offsets = [0, 13], sizes = [1, 256], strides = [1, 1]} : vector<1x384xf32> to vector<1x256xf32>
    %c49 = arith.constant 49 : index
    %98 = memref.load %arg4[%c49] : memref<98xf32, #tpu.memory_space<smem>>
    %99 = vector.broadcast %98 : f32 to vector<1x256xf32>
    %100 = arith.mulf %99, %97 : vector<1x256xf32>
    %101 = arith.addf %96, %100 : vector<1x256xf32>
    %102 = vector.extract_strided_slice %31 {offsets = [0, 29], sizes = [1, 256], strides = [1, 1]} : vector<1x384xf32> to vector<1x256xf32>
    %c56 = arith.constant 56 : index
    %103 = memref.load %arg4[%c56] : memref<98xf32, #tpu.memory_space<smem>>
    %104 = vector.broadcast %103 : f32 to vector<1x256xf32>
    %105 = arith.mulf %104, %102 : vector<1x256xf32>
    %106 = arith.addf %91, %105 : vector<1x256xf32>
    %107 = vector.extract_strided_slice %31 {offsets = [0, 45], sizes = [1, 256], strides = [1, 1]} : vector<1x384xf32> to vector<1x256xf32>
    %c63 = arith.constant 63 : index
    %108 = memref.load %arg4[%c63] : memref<98xf32, #tpu.memory_space<smem>>
    %109 = vector.broadcast %108 : f32 to vector<1x256xf32>
    %110 = arith.mulf %109, %107 : vector<1x256xf32>
    %111 = arith.addf %101, %110 : vector<1x256xf32>
    %112 = vector.extract_strided_slice %31 {offsets = [0, 61], sizes = [1, 256], strides = [1, 1]} : vector<1x384xf32> to vector<1x256xf32>
    %c70 = arith.constant 70 : index
    %113 = memref.load %arg4[%c70] : memref<98xf32, #tpu.memory_space<smem>>
    %114 = vector.broadcast %113 : f32 to vector<1x256xf32>
    %115 = arith.mulf %114, %112 : vector<1x256xf32>
    %116 = arith.addf %106, %115 : vector<1x256xf32>
    %117 = vector.extract_strided_slice %31 {offsets = [0, 77], sizes = [1, 256], strides = [1, 1]} : vector<1x384xf32> to vector<1x256xf32>
    %c77 = arith.constant 77 : index
    %118 = memref.load %arg4[%c77] : memref<98xf32, #tpu.memory_space<smem>>
    %119 = vector.broadcast %118 : f32 to vector<1x256xf32>
    %120 = arith.mulf %119, %117 : vector<1x256xf32>
    %121 = arith.addf %111, %120 : vector<1x256xf32>
    %122 = vector.extract_strided_slice %31 {offsets = [0, 93], sizes = [1, 256], strides = [1, 1]} : vector<1x384xf32> to vector<1x256xf32>
    %c84 = arith.constant 84 : index
    %123 = memref.load %arg4[%c84] : memref<98xf32, #tpu.memory_space<smem>>
    %124 = vector.broadcast %123 : f32 to vector<1x256xf32>
    %125 = arith.mulf %124, %122 : vector<1x256xf32>
    %126 = arith.addf %116, %125 : vector<1x256xf32>
    %127 = vector.extract_strided_slice %31 {offsets = [0, 109], sizes = [1, 256], strides = [1, 1]} : vector<1x384xf32> to vector<1x256xf32>
    %c91 = arith.constant 91 : index
    %128 = memref.load %arg4[%c91] : memref<98xf32, #tpu.memory_space<smem>>
    %129 = vector.broadcast %128 : f32 to vector<1x256xf32>
    %130 = arith.mulf %129, %127 : vector<1x256xf32>
    %131 = arith.addf %121, %130 : vector<1x256xf32>
    %132 = arith.addf %131, %126 : vector<1x256xf32>
    %cst_33 = arith.constant 0.000000e+00 : f32
    %133 = vector.broadcast %cst_33 : f32 to vector<1x256xf32>
    %134 = arith.select %59, %132, %133 : vector<1x256xi1>, vector<1x256xf32>
    %135 = arith.addf %49, %134 : vector<1x256xf32>
    %c-2_i32 = arith.constant -2 : i32
    %136 = vector.broadcast %c-2_i32 : i32 to vector<1x256xi32>
    %137 = arith.addi %48, %136 : vector<1x256xi32>
    %c0_i32_34 = arith.constant 0 : i32
    %138 = vector.broadcast %c0_i32_34 : i32 to vector<1x256xi32>
    %139 = arith.cmpi sge, %137, %138 : vector<1x256xi32>
    %c-2_i32_35 = arith.constant -2 : i32
    %140 = vector.broadcast %c-2_i32_35 : i32 to vector<1x256xi32>
    %141 = arith.addi %48, %140 : vector<1x256xi32>
    %c16_i32_36 = arith.constant 16 : i32
    %142 = vector.broadcast %c16_i32_36 : i32 to vector<1x256xi32>
    %143 = arith.cmpi slt, %141, %142 : vector<1x256xi32>
    %144 = arith.andi %139, %143 : vector<1x256xi1>
    %cst_37 = arith.constant 0.000000e+00 : f32
    %145 = vector.broadcast %cst_37 : f32 to vector<1x256xf32>
    %cst_38 = arith.constant 0.000000e+00 : f32
    %146 = vector.broadcast %cst_38 : f32 to vector<1x256xf32>
    %147 = vector.extract_strided_slice %30 {offsets = [0, 14], sizes = [1, 256], strides = [1, 1]} : vector<1x384xf32> to vector<1x256xf32>
    %c1 = arith.constant 1 : index
    %148 = memref.load %arg4[%c1] : memref<98xf32, #tpu.memory_space<smem>>
    %149 = vector.broadcast %148 : f32 to vector<1x256xf32>
    %150 = arith.mulf %149, %147 : vector<1x256xf32>
    %151 = arith.addf %145, %150 : vector<1x256xf32>
    %152 = vector.extract_strided_slice %30 {offsets = [0, 30], sizes = [1, 256], strides = [1, 1]} : vector<1x384xf32> to vector<1x256xf32>
    %c8 = arith.constant 8 : index
    %153 = memref.load %arg4[%c8] : memref<98xf32, #tpu.memory_space<smem>>
    %154 = vector.broadcast %153 : f32 to vector<1x256xf32>
    %155 = arith.mulf %154, %152 : vector<1x256xf32>
    %156 = arith.addf %146, %155 : vector<1x256xf32>
    %157 = vector.extract_strided_slice %30 {offsets = [0, 46], sizes = [1, 256], strides = [1, 1]} : vector<1x384xf32> to vector<1x256xf32>
    %c15 = arith.constant 15 : index
    %158 = memref.load %arg4[%c15] : memref<98xf32, #tpu.memory_space<smem>>
    %159 = vector.broadcast %158 : f32 to vector<1x256xf32>
    %160 = arith.mulf %159, %157 : vector<1x256xf32>
    %161 = arith.addf %151, %160 : vector<1x256xf32>
    %162 = vector.extract_strided_slice %30 {offsets = [0, 62], sizes = [1, 256], strides = [1, 1]} : vector<1x384xf32> to vector<1x256xf32>
    %c22 = arith.constant 22 : index
    %163 = memref.load %arg4[%c22] : memref<98xf32, #tpu.memory_space<smem>>
    %164 = vector.broadcast %163 : f32 to vector<1x256xf32>
    %165 = arith.mulf %164, %162 : vector<1x256xf32>
    %166 = arith.addf %156, %165 : vector<1x256xf32>
    %167 = vector.extract_strided_slice %30 {offsets = [0, 78], sizes = [1, 256], strides = [1, 1]} : vector<1x384xf32> to vector<1x256xf32>
    %c29 = arith.constant 29 : index
    %168 = memref.load %arg4[%c29] : memref<98xf32, #tpu.memory_space<smem>>
    %169 = vector.broadcast %168 : f32 to vector<1x256xf32>
    %170 = arith.mulf %169, %167 : vector<1x256xf32>
    %171 = arith.addf %161, %170 : vector<1x256xf32>
    %172 = vector.extract_strided_slice %30 {offsets = [0, 94], sizes = [1, 256], strides = [1, 1]} : vector<1x384xf32> to vector<1x256xf32>
    %c36 = arith.constant 36 : index
    %173 = memref.load %arg4[%c36] : memref<98xf32, #tpu.memory_space<smem>>
    %174 = vector.broadcast %173 : f32 to vector<1x256xf32>
    %175 = arith.mulf %174, %172 : vector<1x256xf32>
    %176 = arith.addf %166, %175 : vector<1x256xf32>
    %177 = vector.extract_strided_slice %30 {offsets = [0, 110], sizes = [1, 256], strides = [1, 1]} : vector<1x384xf32> to vector<1x256xf32>
    %c43 = arith.constant 43 : index
    %178 = memref.load %arg4[%c43] : memref<98xf32, #tpu.memory_space<smem>>
    %179 = vector.broadcast %178 : f32 to vector<1x256xf32>
    %180 = arith.mulf %179, %177 : vector<1x256xf32>
    %181 = arith.addf %171, %180 : vector<1x256xf32>
    %182 = vector.extract_strided_slice %31 {offsets = [0, 14], sizes = [1, 256], strides = [1, 1]} : vector<1x384xf32> to vector<1x256xf32>
    %c50 = arith.constant 50 : index
    %183 = memref.load %arg4[%c50] : memref<98xf32, #tpu.memory_space<smem>>
    %184 = vector.broadcast %183 : f32 to vector<1x256xf32>
    %185 = arith.mulf %184, %182 : vector<1x256xf32>
    %186 = arith.addf %181, %185 : vector<1x256xf32>
    %187 = vector.extract_strided_slice %31 {offsets = [0, 30], sizes = [1, 256], strides = [1, 1]} : vector<1x384xf32> to vector<1x256xf32>
    %c57 = arith.constant 57 : index
    %188 = memref.load %arg4[%c57] : memref<98xf32, #tpu.memory_space<smem>>
    %189 = vector.broadcast %188 : f32 to vector<1x256xf32>
    %190 = arith.mulf %189, %187 : vector<1x256xf32>
    %191 = arith.addf %176, %190 : vector<1x256xf32>
    %192 = vector.extract_strided_slice %31 {offsets = [0, 46], sizes = [1, 256], strides = [1, 1]} : vector<1x384xf32> to vector<1x256xf32>
    %c64 = arith.constant 64 : index
    %193 = memref.load %arg4[%c64] : memref<98xf32, #tpu.memory_space<smem>>
    %194 = vector.broadcast %193 : f32 to vector<1x256xf32>
    %195 = arith.mulf %194, %192 : vector<1x256xf32>
    %196 = arith.addf %186, %195 : vector<1x256xf32>
    %197 = vector.extract_strided_slice %31 {offsets = [0, 62], sizes = [1, 256], strides = [1, 1]} : vector<1x384xf32> to vector<1x256xf32>
    %c71 = arith.constant 71 : index
    %198 = memref.load %arg4[%c71] : memref<98xf32, #tpu.memory_space<smem>>
    %199 = vector.broadcast %198 : f32 to vector<1x256xf32>
    %200 = arith.mulf %199, %197 : vector<1x256xf32>
    %201 = arith.addf %191, %200 : vector<1x256xf32>
    %202 = vector.extract_strided_slice %31 {offsets = [0, 78], sizes = [1, 256], strides = [1, 1]} : vector<1x384xf32> to vector<1x256xf32>
    %c78 = arith.constant 78 : index
    %203 = memref.load %arg4[%c78] : memref<98xf32, #tpu.memory_space<smem>>
    %204 = vector.broadcast %203 : f32 to vector<1x256xf32>
    %205 = arith.mulf %204, %202 : vector<1x256xf32>
    %206 = arith.addf %196, %205 : vector<1x256xf32>
    %207 = vector.extract_strided_slice %31 {offsets = [0, 94], sizes = [1, 256], strides = [1, 1]} : vector<1x384xf32> to vector<1x256xf32>
    %c85 = arith.constant 85 : index
    %208 = memref.load %arg4[%c85] : memref<98xf32, #tpu.memory_space<smem>>
    %209 = vector.broadcast %208 : f32 to vector<1x256xf32>
    %210 = arith.mulf %209, %207 : vector<1x256xf32>
    %211 = arith.addf %201, %210 : vector<1x256xf32>
    %212 = vector.extract_strided_slice %31 {offsets = [0, 110], sizes = [1, 256], strides = [1, 1]} : vector<1x384xf32> to vector<1x256xf32>
    %c92 = arith.constant 92 : index
    %213 = memref.load %arg4[%c92] : memref<98xf32, #tpu.memory_space<smem>>
    %214 = vector.broadcast %213 : f32 to vector<1x256xf32>
    %215 = arith.mulf %214, %212 : vector<1x256xf32>
    %216 = arith.addf %206, %215 : vector<1x256xf32>
    %217 = arith.addf %216, %211 : vector<1x256xf32>
    %cst_39 = arith.constant 0.000000e+00 : f32
    %218 = vector.broadcast %cst_39 : f32 to vector<1x256xf32>
    %219 = arith.select %144, %217, %218 : vector<1x256xi1>, vector<1x256xf32>
    %220 = arith.addf %50, %219 : vector<1x256xf32>
    %c-1_i32 = arith.constant -1 : i32
    %221 = vector.broadcast %c-1_i32 : i32 to vector<1x256xi32>
    %222 = arith.addi %48, %221 : vector<1x256xi32>
    %c0_i32_40 = arith.constant 0 : i32
    %223 = vector.broadcast %c0_i32_40 : i32 to vector<1x256xi32>
    %224 = arith.cmpi sge, %222, %223 : vector<1x256xi32>
    %c-1_i32_41 = arith.constant -1 : i32
    %225 = vector.broadcast %c-1_i32_41 : i32 to vector<1x256xi32>
    %226 = arith.addi %48, %225 : vector<1x256xi32>
    %c16_i32_42 = arith.constant 16 : i32
    %227 = vector.broadcast %c16_i32_42 : i32 to vector<1x256xi32>
    %228 = arith.cmpi slt, %226, %227 : vector<1x256xi32>
    %229 = arith.andi %224, %228 : vector<1x256xi1>
    %cst_43 = arith.constant 0.000000e+00 : f32
    %230 = vector.broadcast %cst_43 : f32 to vector<1x256xf32>
    %cst_44 = arith.constant 0.000000e+00 : f32
    %231 = vector.broadcast %cst_44 : f32 to vector<1x256xf32>
    %232 = vector.extract_strided_slice %30 {offsets = [0, 15], sizes = [1, 256], strides = [1, 1]} : vector<1x384xf32> to vector<1x256xf32>
    %c2 = arith.constant 2 : index
    %233 = memref.load %arg4[%c2] : memref<98xf32, #tpu.memory_space<smem>>
    %234 = vector.broadcast %233 : f32 to vector<1x256xf32>
    %235 = arith.mulf %234, %232 : vector<1x256xf32>
    %236 = arith.addf %230, %235 : vector<1x256xf32>
    %237 = vector.extract_strided_slice %30 {offsets = [0, 31], sizes = [1, 256], strides = [1, 1]} : vector<1x384xf32> to vector<1x256xf32>
    %c9 = arith.constant 9 : index
    %238 = memref.load %arg4[%c9] : memref<98xf32, #tpu.memory_space<smem>>
    %239 = vector.broadcast %238 : f32 to vector<1x256xf32>
    %240 = arith.mulf %239, %237 : vector<1x256xf32>
    %241 = arith.addf %231, %240 : vector<1x256xf32>
    %242 = vector.extract_strided_slice %30 {offsets = [0, 47], sizes = [1, 256], strides = [1, 1]} : vector<1x384xf32> to vector<1x256xf32>
    %c16 = arith.constant 16 : index
    %243 = memref.load %arg4[%c16] : memref<98xf32, #tpu.memory_space<smem>>
    %244 = vector.broadcast %243 : f32 to vector<1x256xf32>
    %245 = arith.mulf %244, %242 : vector<1x256xf32>
    %246 = arith.addf %236, %245 : vector<1x256xf32>
    %247 = vector.extract_strided_slice %30 {offsets = [0, 63], sizes = [1, 256], strides = [1, 1]} : vector<1x384xf32> to vector<1x256xf32>
    %c23 = arith.constant 23 : index
    %248 = memref.load %arg4[%c23] : memref<98xf32, #tpu.memory_space<smem>>
    %249 = vector.broadcast %248 : f32 to vector<1x256xf32>
    %250 = arith.mulf %249, %247 : vector<1x256xf32>
    %251 = arith.addf %241, %250 : vector<1x256xf32>
    %252 = vector.extract_strided_slice %30 {offsets = [0, 79], sizes = [1, 256], strides = [1, 1]} : vector<1x384xf32> to vector<1x256xf32>
    %c30 = arith.constant 30 : index
    %253 = memref.load %arg4[%c30] : memref<98xf32, #tpu.memory_space<smem>>
    %254 = vector.broadcast %253 : f32 to vector<1x256xf32>
    %255 = arith.mulf %254, %252 : vector<1x256xf32>
    %256 = arith.addf %246, %255 : vector<1x256xf32>
    %257 = vector.extract_strided_slice %30 {offsets = [0, 95], sizes = [1, 256], strides = [1, 1]} : vector<1x384xf32> to vector<1x256xf32>
    %c37 = arith.constant 37 : index
    %258 = memref.load %arg4[%c37] : memref<98xf32, #tpu.memory_space<smem>>
    %259 = vector.broadcast %258 : f32 to vector<1x256xf32>
    %260 = arith.mulf %259, %257 : vector<1x256xf32>
    %261 = arith.addf %251, %260 : vector<1x256xf32>
    %262 = vector.extract_strided_slice %30 {offsets = [0, 111], sizes = [1, 256], strides = [1, 1]} : vector<1x384xf32> to vector<1x256xf32>
    %c44 = arith.constant 44 : index
    %263 = memref.load %arg4[%c44] : memref<98xf32, #tpu.memory_space<smem>>
    %264 = vector.broadcast %263 : f32 to vector<1x256xf32>
    %265 = arith.mulf %264, %262 : vector<1x256xf32>
    %266 = arith.addf %256, %265 : vector<1x256xf32>
    %267 = vector.extract_strided_slice %31 {offsets = [0, 15], sizes = [1, 256], strides = [1, 1]} : vector<1x384xf32> to vector<1x256xf32>
    %c51 = arith.constant 51 : index
    %268 = memref.load %arg4[%c51] : memref<98xf32, #tpu.memory_space<smem>>
    %269 = vector.broadcast %268 : f32 to vector<1x256xf32>
    %270 = arith.mulf %269, %267 : vector<1x256xf32>
    %271 = arith.addf %266, %270 : vector<1x256xf32>
    %272 = vector.extract_strided_slice %31 {offsets = [0, 31], sizes = [1, 256], strides = [1, 1]} : vector<1x384xf32> to vector<1x256xf32>
    %c58 = arith.constant 58 : index
    %273 = memref.load %arg4[%c58] : memref<98xf32, #tpu.memory_space<smem>>
    %274 = vector.broadcast %273 : f32 to vector<1x256xf32>
    %275 = arith.mulf %274, %272 : vector<1x256xf32>
    %276 = arith.addf %261, %275 : vector<1x256xf32>
    %277 = vector.extract_strided_slice %31 {offsets = [0, 47], sizes = [1, 256], strides = [1, 1]} : vector<1x384xf32> to vector<1x256xf32>
    %c65 = arith.constant 65 : index
    %278 = memref.load %arg4[%c65] : memref<98xf32, #tpu.memory_space<smem>>
    %279 = vector.broadcast %278 : f32 to vector<1x256xf32>
    %280 = arith.mulf %279, %277 : vector<1x256xf32>
    %281 = arith.addf %271, %280 : vector<1x256xf32>
    %282 = vector.extract_strided_slice %31 {offsets = [0, 63], sizes = [1, 256], strides = [1, 1]} : vector<1x384xf32> to vector<1x256xf32>
    %c72 = arith.constant 72 : index
    %283 = memref.load %arg4[%c72] : memref<98xf32, #tpu.memory_space<smem>>
    %284 = vector.broadcast %283 : f32 to vector<1x256xf32>
    %285 = arith.mulf %284, %282 : vector<1x256xf32>
    %286 = arith.addf %276, %285 : vector<1x256xf32>
    %287 = vector.extract_strided_slice %31 {offsets = [0, 79], sizes = [1, 256], strides = [1, 1]} : vector<1x384xf32> to vector<1x256xf32>
    %c79 = arith.constant 79 : index
    %288 = memref.load %arg4[%c79] : memref<98xf32, #tpu.memory_space<smem>>
    %289 = vector.broadcast %288 : f32 to vector<1x256xf32>
    %290 = arith.mulf %289, %287 : vector<1x256xf32>
    %291 = arith.addf %281, %290 : vector<1x256xf32>
    %292 = vector.extract_strided_slice %31 {offsets = [0, 95], sizes = [1, 256], strides = [1, 1]} : vector<1x384xf32> to vector<1x256xf32>
    %c86 = arith.constant 86 : index
    %293 = memref.load %arg4[%c86] : memref<98xf32, #tpu.memory_space<smem>>
    %294 = vector.broadcast %293 : f32 to vector<1x256xf32>
    %295 = arith.mulf %294, %292 : vector<1x256xf32>
    %296 = arith.addf %286, %295 : vector<1x256xf32>
    %297 = vector.extract_strided_slice %31 {offsets = [0, 111], sizes = [1, 256], strides = [1, 1]} : vector<1x384xf32> to vector<1x256xf32>
    %c93 = arith.constant 93 : index
    %298 = memref.load %arg4[%c93] : memref<98xf32, #tpu.memory_space<smem>>
    %299 = vector.broadcast %298 : f32 to vector<1x256xf32>
    %300 = arith.mulf %299, %297 : vector<1x256xf32>
    %301 = arith.addf %291, %300 : vector<1x256xf32>
    %302 = arith.addf %301, %296 : vector<1x256xf32>
    %cst_45 = arith.constant 0.000000e+00 : f32
    %303 = vector.broadcast %cst_45 : f32 to vector<1x256xf32>
    %304 = arith.select %229, %302, %303 : vector<1x256xi1>, vector<1x256xf32>
    %305 = arith.addf %135, %304 : vector<1x256xf32>
    %c0_i32_46 = arith.constant 0 : i32
    %306 = vector.broadcast %c0_i32_46 : i32 to vector<1x256xi32>
    %307 = arith.addi %48, %306 : vector<1x256xi32>
    %c0_i32_47 = arith.constant 0 : i32
    %308 = vector.broadcast %c0_i32_47 : i32 to vector<1x256xi32>
    %309 = arith.cmpi sge, %307, %308 : vector<1x256xi32>
    %c0_i32_48 = arith.constant 0 : i32
    %310 = vector.broadcast %c0_i32_48 : i32 to vector<1x256xi32>
    %311 = arith.addi %48, %310 : vector<1x256xi32>
    %c16_i32_49 = arith.constant 16 : i32
    %312 = vector.broadcast %c16_i32_49 : i32 to vector<1x256xi32>
    %313 = arith.cmpi slt, %311, %312 : vector<1x256xi32>
    %314 = arith.andi %309, %313 : vector<1x256xi1>
    %cst_50 = arith.constant 0.000000e+00 : f32
    %315 = vector.broadcast %cst_50 : f32 to vector<1x256xf32>
    %cst_51 = arith.constant 0.000000e+00 : f32
    %316 = vector.broadcast %cst_51 : f32 to vector<1x256xf32>
    %317 = vector.extract_strided_slice %30 {offsets = [0, 16], sizes = [1, 256], strides = [1, 1]} : vector<1x384xf32> to vector<1x256xf32>
    %c3 = arith.constant 3 : index
    %318 = memref.load %arg4[%c3] : memref<98xf32, #tpu.memory_space<smem>>
    %319 = vector.broadcast %318 : f32 to vector<1x256xf32>
    %320 = arith.mulf %319, %317 : vector<1x256xf32>
    %321 = arith.addf %315, %320 : vector<1x256xf32>
    %322 = vector.extract_strided_slice %30 {offsets = [0, 32], sizes = [1, 256], strides = [1, 1]} : vector<1x384xf32> to vector<1x256xf32>
    %c10 = arith.constant 10 : index
    %323 = memref.load %arg4[%c10] : memref<98xf32, #tpu.memory_space<smem>>
    %324 = vector.broadcast %323 : f32 to vector<1x256xf32>
    %325 = arith.mulf %324, %322 : vector<1x256xf32>
    %326 = arith.addf %316, %325 : vector<1x256xf32>
    %327 = vector.extract_strided_slice %30 {offsets = [0, 48], sizes = [1, 256], strides = [1, 1]} : vector<1x384xf32> to vector<1x256xf32>
    %c17 = arith.constant 17 : index
    %328 = memref.load %arg4[%c17] : memref<98xf32, #tpu.memory_space<smem>>
    %329 = vector.broadcast %328 : f32 to vector<1x256xf32>
    %330 = arith.mulf %329, %327 : vector<1x256xf32>
    %331 = arith.addf %321, %330 : vector<1x256xf32>
    %332 = vector.extract_strided_slice %30 {offsets = [0, 64], sizes = [1, 256], strides = [1, 1]} : vector<1x384xf32> to vector<1x256xf32>
    %c24 = arith.constant 24 : index
    %333 = memref.load %arg4[%c24] : memref<98xf32, #tpu.memory_space<smem>>
    %334 = vector.broadcast %333 : f32 to vector<1x256xf32>
    %335 = arith.mulf %334, %332 : vector<1x256xf32>
    %336 = arith.addf %326, %335 : vector<1x256xf32>
    %337 = vector.extract_strided_slice %30 {offsets = [0, 80], sizes = [1, 256], strides = [1, 1]} : vector<1x384xf32> to vector<1x256xf32>
    %c31 = arith.constant 31 : index
    %338 = memref.load %arg4[%c31] : memref<98xf32, #tpu.memory_space<smem>>
    %339 = vector.broadcast %338 : f32 to vector<1x256xf32>
    %340 = arith.mulf %339, %337 : vector<1x256xf32>
    %341 = arith.addf %331, %340 : vector<1x256xf32>
    %342 = vector.extract_strided_slice %30 {offsets = [0, 96], sizes = [1, 256], strides = [1, 1]} : vector<1x384xf32> to vector<1x256xf32>
    %c38 = arith.constant 38 : index
    %343 = memref.load %arg4[%c38] : memref<98xf32, #tpu.memory_space<smem>>
    %344 = vector.broadcast %343 : f32 to vector<1x256xf32>
    %345 = arith.mulf %344, %342 : vector<1x256xf32>
    %346 = arith.addf %336, %345 : vector<1x256xf32>
    %347 = vector.extract_strided_slice %30 {offsets = [0, 112], sizes = [1, 256], strides = [1, 1]} : vector<1x384xf32> to vector<1x256xf32>
    %c45 = arith.constant 45 : index
    %348 = memref.load %arg4[%c45] : memref<98xf32, #tpu.memory_space<smem>>
    %349 = vector.broadcast %348 : f32 to vector<1x256xf32>
    %350 = arith.mulf %349, %347 : vector<1x256xf32>
    %351 = arith.addf %341, %350 : vector<1x256xf32>
    %352 = vector.extract_strided_slice %31 {offsets = [0, 16], sizes = [1, 256], strides = [1, 1]} : vector<1x384xf32> to vector<1x256xf32>
    %c52 = arith.constant 52 : index
    %353 = memref.load %arg4[%c52] : memref<98xf32, #tpu.memory_space<smem>>
    %354 = vector.broadcast %353 : f32 to vector<1x256xf32>
    %355 = arith.mulf %354, %352 : vector<1x256xf32>
    %356 = arith.addf %351, %355 : vector<1x256xf32>
    %357 = vector.extract_strided_slice %31 {offsets = [0, 32], sizes = [1, 256], strides = [1, 1]} : vector<1x384xf32> to vector<1x256xf32>
    %c59 = arith.constant 59 : index
    %358 = memref.load %arg4[%c59] : memref<98xf32, #tpu.memory_space<smem>>
    %359 = vector.broadcast %358 : f32 to vector<1x256xf32>
    %360 = arith.mulf %359, %357 : vector<1x256xf32>
    %361 = arith.addf %346, %360 : vector<1x256xf32>
    %362 = vector.extract_strided_slice %31 {offsets = [0, 48], sizes = [1, 256], strides = [1, 1]} : vector<1x384xf32> to vector<1x256xf32>
    %c66 = arith.constant 66 : index
    %363 = memref.load %arg4[%c66] : memref<98xf32, #tpu.memory_space<smem>>
    %364 = vector.broadcast %363 : f32 to vector<1x256xf32>
    %365 = arith.mulf %364, %362 : vector<1x256xf32>
    %366 = arith.addf %356, %365 : vector<1x256xf32>
    %367 = vector.extract_strided_slice %31 {offsets = [0, 64], sizes = [1, 256], strides = [1, 1]} : vector<1x384xf32> to vector<1x256xf32>
    %c73 = arith.constant 73 : index
    %368 = memref.load %arg4[%c73] : memref<98xf32, #tpu.memory_space<smem>>
    %369 = vector.broadcast %368 : f32 to vector<1x256xf32>
    %370 = arith.mulf %369, %367 : vector<1x256xf32>
    %371 = arith.addf %361, %370 : vector<1x256xf32>
    %372 = vector.extract_strided_slice %31 {offsets = [0, 80], sizes = [1, 256], strides = [1, 1]} : vector<1x384xf32> to vector<1x256xf32>
    %c80 = arith.constant 80 : index
    %373 = memref.load %arg4[%c80] : memref<98xf32, #tpu.memory_space<smem>>
    %374 = vector.broadcast %373 : f32 to vector<1x256xf32>
    %375 = arith.mulf %374, %372 : vector<1x256xf32>
    %376 = arith.addf %366, %375 : vector<1x256xf32>
    %377 = vector.extract_strided_slice %31 {offsets = [0, 96], sizes = [1, 256], strides = [1, 1]} : vector<1x384xf32> to vector<1x256xf32>
    %c87 = arith.constant 87 : index
    %378 = memref.load %arg4[%c87] : memref<98xf32, #tpu.memory_space<smem>>
    %379 = vector.broadcast %378 : f32 to vector<1x256xf32>
    %380 = arith.mulf %379, %377 : vector<1x256xf32>
    %381 = arith.addf %371, %380 : vector<1x256xf32>
    %382 = vector.extract_strided_slice %31 {offsets = [0, 112], sizes = [1, 256], strides = [1, 1]} : vector<1x384xf32> to vector<1x256xf32>
    %c94 = arith.constant 94 : index
    %383 = memref.load %arg4[%c94] : memref<98xf32, #tpu.memory_space<smem>>
    %384 = vector.broadcast %383 : f32 to vector<1x256xf32>
    %385 = arith.mulf %384, %382 : vector<1x256xf32>
    %386 = arith.addf %376, %385 : vector<1x256xf32>
    %387 = arith.addf %386, %381 : vector<1x256xf32>
    %cst_52 = arith.constant 0.000000e+00 : f32
    %388 = vector.broadcast %cst_52 : f32 to vector<1x256xf32>
    %389 = arith.select %314, %387, %388 : vector<1x256xi1>, vector<1x256xf32>
    %390 = arith.addf %220, %389 : vector<1x256xf32>
    %c1_i32_53 = arith.constant 1 : i32
    %391 = vector.broadcast %c1_i32_53 : i32 to vector<1x256xi32>
    %392 = arith.addi %48, %391 : vector<1x256xi32>
    %c0_i32_54 = arith.constant 0 : i32
    %393 = vector.broadcast %c0_i32_54 : i32 to vector<1x256xi32>
    %394 = arith.cmpi sge, %392, %393 : vector<1x256xi32>
    %c1_i32_55 = arith.constant 1 : i32
    %395 = vector.broadcast %c1_i32_55 : i32 to vector<1x256xi32>
    %396 = arith.addi %48, %395 : vector<1x256xi32>
    %c16_i32_56 = arith.constant 16 : i32
    %397 = vector.broadcast %c16_i32_56 : i32 to vector<1x256xi32>
    %398 = arith.cmpi slt, %396, %397 : vector<1x256xi32>
    %399 = arith.andi %394, %398 : vector<1x256xi1>
    %cst_57 = arith.constant 0.000000e+00 : f32
    %400 = vector.broadcast %cst_57 : f32 to vector<1x256xf32>
    %cst_58 = arith.constant 0.000000e+00 : f32
    %401 = vector.broadcast %cst_58 : f32 to vector<1x256xf32>
    %402 = vector.extract_strided_slice %30 {offsets = [0, 17], sizes = [1, 256], strides = [1, 1]} : vector<1x384xf32> to vector<1x256xf32>
    %c4 = arith.constant 4 : index
    %403 = memref.load %arg4[%c4] : memref<98xf32, #tpu.memory_space<smem>>
    %404 = vector.broadcast %403 : f32 to vector<1x256xf32>
    %405 = arith.mulf %404, %402 : vector<1x256xf32>
    %406 = arith.addf %400, %405 : vector<1x256xf32>
    %407 = vector.extract_strided_slice %30 {offsets = [0, 33], sizes = [1, 256], strides = [1, 1]} : vector<1x384xf32> to vector<1x256xf32>
    %c11 = arith.constant 11 : index
    %408 = memref.load %arg4[%c11] : memref<98xf32, #tpu.memory_space<smem>>
    %409 = vector.broadcast %408 : f32 to vector<1x256xf32>
    %410 = arith.mulf %409, %407 : vector<1x256xf32>
    %411 = arith.addf %401, %410 : vector<1x256xf32>
    %412 = vector.extract_strided_slice %30 {offsets = [0, 49], sizes = [1, 256], strides = [1, 1]} : vector<1x384xf32> to vector<1x256xf32>
    %c18 = arith.constant 18 : index
    %413 = memref.load %arg4[%c18] : memref<98xf32, #tpu.memory_space<smem>>
    %414 = vector.broadcast %413 : f32 to vector<1x256xf32>
    %415 = arith.mulf %414, %412 : vector<1x256xf32>
    %416 = arith.addf %406, %415 : vector<1x256xf32>
    %417 = vector.extract_strided_slice %30 {offsets = [0, 65], sizes = [1, 256], strides = [1, 1]} : vector<1x384xf32> to vector<1x256xf32>
    %c25 = arith.constant 25 : index
    %418 = memref.load %arg4[%c25] : memref<98xf32, #tpu.memory_space<smem>>
    %419 = vector.broadcast %418 : f32 to vector<1x256xf32>
    %420 = arith.mulf %419, %417 : vector<1x256xf32>
    %421 = arith.addf %411, %420 : vector<1x256xf32>
    %422 = vector.extract_strided_slice %30 {offsets = [0, 81], sizes = [1, 256], strides = [1, 1]} : vector<1x384xf32> to vector<1x256xf32>
    %c32 = arith.constant 32 : index
    %423 = memref.load %arg4[%c32] : memref<98xf32, #tpu.memory_space<smem>>
    %424 = vector.broadcast %423 : f32 to vector<1x256xf32>
    %425 = arith.mulf %424, %422 : vector<1x256xf32>
    %426 = arith.addf %416, %425 : vector<1x256xf32>
    %427 = vector.extract_strided_slice %30 {offsets = [0, 97], sizes = [1, 256], strides = [1, 1]} : vector<1x384xf32> to vector<1x256xf32>
    %c39 = arith.constant 39 : index
    %428 = memref.load %arg4[%c39] : memref<98xf32, #tpu.memory_space<smem>>
    %429 = vector.broadcast %428 : f32 to vector<1x256xf32>
    %430 = arith.mulf %429, %427 : vector<1x256xf32>
    %431 = arith.addf %421, %430 : vector<1x256xf32>
    %432 = vector.extract_strided_slice %30 {offsets = [0, 113], sizes = [1, 256], strides = [1, 1]} : vector<1x384xf32> to vector<1x256xf32>
    %c46 = arith.constant 46 : index
    %433 = memref.load %arg4[%c46] : memref<98xf32, #tpu.memory_space<smem>>
    %434 = vector.broadcast %433 : f32 to vector<1x256xf32>
    %435 = arith.mulf %434, %432 : vector<1x256xf32>
    %436 = arith.addf %426, %435 : vector<1x256xf32>
    %437 = vector.extract_strided_slice %31 {offsets = [0, 17], sizes = [1, 256], strides = [1, 1]} : vector<1x384xf32> to vector<1x256xf32>
    %c53 = arith.constant 53 : index
    %438 = memref.load %arg4[%c53] : memref<98xf32, #tpu.memory_space<smem>>
    %439 = vector.broadcast %438 : f32 to vector<1x256xf32>
    %440 = arith.mulf %439, %437 : vector<1x256xf32>
    %441 = arith.addf %436, %440 : vector<1x256xf32>
    %442 = vector.extract_strided_slice %31 {offsets = [0, 33], sizes = [1, 256], strides = [1, 1]} : vector<1x384xf32> to vector<1x256xf32>
    %c60 = arith.constant 60 : index
    %443 = memref.load %arg4[%c60] : memref<98xf32, #tpu.memory_space<smem>>
    %444 = vector.broadcast %443 : f32 to vector<1x256xf32>
    %445 = arith.mulf %444, %442 : vector<1x256xf32>
    %446 = arith.addf %431, %445 : vector<1x256xf32>
    %447 = vector.extract_strided_slice %31 {offsets = [0, 49], sizes = [1, 256], strides = [1, 1]} : vector<1x384xf32> to vector<1x256xf32>
    %c67 = arith.constant 67 : index
    %448 = memref.load %arg4[%c67] : memref<98xf32, #tpu.memory_space<smem>>
    %449 = vector.broadcast %448 : f32 to vector<1x256xf32>
    %450 = arith.mulf %449, %447 : vector<1x256xf32>
    %451 = arith.addf %441, %450 : vector<1x256xf32>
    %452 = vector.extract_strided_slice %31 {offsets = [0, 65], sizes = [1, 256], strides = [1, 1]} : vector<1x384xf32> to vector<1x256xf32>
    %c74 = arith.constant 74 : index
    %453 = memref.load %arg4[%c74] : memref<98xf32, #tpu.memory_space<smem>>
    %454 = vector.broadcast %453 : f32 to vector<1x256xf32>
    %455 = arith.mulf %454, %452 : vector<1x256xf32>
    %456 = arith.addf %446, %455 : vector<1x256xf32>
    %457 = vector.extract_strided_slice %31 {offsets = [0, 81], sizes = [1, 256], strides = [1, 1]} : vector<1x384xf32> to vector<1x256xf32>
    %c81 = arith.constant 81 : index
    %458 = memref.load %arg4[%c81] : memref<98xf32, #tpu.memory_space<smem>>
    %459 = vector.broadcast %458 : f32 to vector<1x256xf32>
    %460 = arith.mulf %459, %457 : vector<1x256xf32>
    %461 = arith.addf %451, %460 : vector<1x256xf32>
    %462 = vector.extract_strided_slice %31 {offsets = [0, 97], sizes = [1, 256], strides = [1, 1]} : vector<1x384xf32> to vector<1x256xf32>
    %c88 = arith.constant 88 : index
    %463 = memref.load %arg4[%c88] : memref<98xf32, #tpu.memory_space<smem>>
    %464 = vector.broadcast %463 : f32 to vector<1x256xf32>
    %465 = arith.mulf %464, %462 : vector<1x256xf32>
    %466 = arith.addf %456, %465 : vector<1x256xf32>
    %467 = vector.extract_strided_slice %31 {offsets = [0, 113], sizes = [1, 256], strides = [1, 1]} : vector<1x384xf32> to vector<1x256xf32>
    %c95 = arith.constant 95 : index
    %468 = memref.load %arg4[%c95] : memref<98xf32, #tpu.memory_space<smem>>
    %469 = vector.broadcast %468 : f32 to vector<1x256xf32>
    %470 = arith.mulf %469, %467 : vector<1x256xf32>
    %471 = arith.addf %461, %470 : vector<1x256xf32>
    %472 = arith.addf %471, %466 : vector<1x256xf32>
    %cst_59 = arith.constant 0.000000e+00 : f32
    %473 = vector.broadcast %cst_59 : f32 to vector<1x256xf32>
    %474 = arith.select %399, %472, %473 : vector<1x256xi1>, vector<1x256xf32>
    %475 = arith.addf %305, %474 : vector<1x256xf32>
    %c2_i32 = arith.constant 2 : i32
    %476 = vector.broadcast %c2_i32 : i32 to vector<1x256xi32>
    %477 = arith.addi %48, %476 : vector<1x256xi32>
    %c0_i32_60 = arith.constant 0 : i32
    %478 = vector.broadcast %c0_i32_60 : i32 to vector<1x256xi32>
    %479 = arith.cmpi sge, %477, %478 : vector<1x256xi32>
    %c2_i32_61 = arith.constant 2 : i32
    %480 = vector.broadcast %c2_i32_61 : i32 to vector<1x256xi32>
    %481 = arith.addi %48, %480 : vector<1x256xi32>
    %c16_i32_62 = arith.constant 16 : i32
    %482 = vector.broadcast %c16_i32_62 : i32 to vector<1x256xi32>
    %483 = arith.cmpi slt, %481, %482 : vector<1x256xi32>
    %484 = arith.andi %479, %483 : vector<1x256xi1>
    %cst_63 = arith.constant 0.000000e+00 : f32
    %485 = vector.broadcast %cst_63 : f32 to vector<1x256xf32>
    %cst_64 = arith.constant 0.000000e+00 : f32
    %486 = vector.broadcast %cst_64 : f32 to vector<1x256xf32>
    %487 = vector.extract_strided_slice %30 {offsets = [0, 18], sizes = [1, 256], strides = [1, 1]} : vector<1x384xf32> to vector<1x256xf32>
    %c5 = arith.constant 5 : index
    %488 = memref.load %arg4[%c5] : memref<98xf32, #tpu.memory_space<smem>>
    %489 = vector.broadcast %488 : f32 to vector<1x256xf32>
    %490 = arith.mulf %489, %487 : vector<1x256xf32>
    %491 = arith.addf %485, %490 : vector<1x256xf32>
    %492 = vector.extract_strided_slice %30 {offsets = [0, 34], sizes = [1, 256], strides = [1, 1]} : vector<1x384xf32> to vector<1x256xf32>
    %c12 = arith.constant 12 : index
    %493 = memref.load %arg4[%c12] : memref<98xf32, #tpu.memory_space<smem>>
    %494 = vector.broadcast %493 : f32 to vector<1x256xf32>
    %495 = arith.mulf %494, %492 : vector<1x256xf32>
    %496 = arith.addf %486, %495 : vector<1x256xf32>
    %497 = vector.extract_strided_slice %30 {offsets = [0, 50], sizes = [1, 256], strides = [1, 1]} : vector<1x384xf32> to vector<1x256xf32>
    %c19 = arith.constant 19 : index
    %498 = memref.load %arg4[%c19] : memref<98xf32, #tpu.memory_space<smem>>
    %499 = vector.broadcast %498 : f32 to vector<1x256xf32>
    %500 = arith.mulf %499, %497 : vector<1x256xf32>
    %501 = arith.addf %491, %500 : vector<1x256xf32>
    %502 = vector.extract_strided_slice %30 {offsets = [0, 66], sizes = [1, 256], strides = [1, 1]} : vector<1x384xf32> to vector<1x256xf32>
    %c26 = arith.constant 26 : index
    %503 = memref.load %arg4[%c26] : memref<98xf32, #tpu.memory_space<smem>>
    %504 = vector.broadcast %503 : f32 to vector<1x256xf32>
    %505 = arith.mulf %504, %502 : vector<1x256xf32>
    %506 = arith.addf %496, %505 : vector<1x256xf32>
    %507 = vector.extract_strided_slice %30 {offsets = [0, 82], sizes = [1, 256], strides = [1, 1]} : vector<1x384xf32> to vector<1x256xf32>
    %c33 = arith.constant 33 : index
    %508 = memref.load %arg4[%c33] : memref<98xf32, #tpu.memory_space<smem>>
    %509 = vector.broadcast %508 : f32 to vector<1x256xf32>
    %510 = arith.mulf %509, %507 : vector<1x256xf32>
    %511 = arith.addf %501, %510 : vector<1x256xf32>
    %512 = vector.extract_strided_slice %30 {offsets = [0, 98], sizes = [1, 256], strides = [1, 1]} : vector<1x384xf32> to vector<1x256xf32>
    %c40 = arith.constant 40 : index
    %513 = memref.load %arg4[%c40] : memref<98xf32, #tpu.memory_space<smem>>
    %514 = vector.broadcast %513 : f32 to vector<1x256xf32>
    %515 = arith.mulf %514, %512 : vector<1x256xf32>
    %516 = arith.addf %506, %515 : vector<1x256xf32>
    %517 = vector.extract_strided_slice %30 {offsets = [0, 114], sizes = [1, 256], strides = [1, 1]} : vector<1x384xf32> to vector<1x256xf32>
    %c47 = arith.constant 47 : index
    %518 = memref.load %arg4[%c47] : memref<98xf32, #tpu.memory_space<smem>>
    %519 = vector.broadcast %518 : f32 to vector<1x256xf32>
    %520 = arith.mulf %519, %517 : vector<1x256xf32>
    %521 = arith.addf %511, %520 : vector<1x256xf32>
    %522 = vector.extract_strided_slice %31 {offsets = [0, 18], sizes = [1, 256], strides = [1, 1]} : vector<1x384xf32> to vector<1x256xf32>
    %c54 = arith.constant 54 : index
    %523 = memref.load %arg4[%c54] : memref<98xf32, #tpu.memory_space<smem>>
    %524 = vector.broadcast %523 : f32 to vector<1x256xf32>
    %525 = arith.mulf %524, %522 : vector<1x256xf32>
    %526 = arith.addf %521, %525 : vector<1x256xf32>
    %527 = vector.extract_strided_slice %31 {offsets = [0, 34], sizes = [1, 256], strides = [1, 1]} : vector<1x384xf32> to vector<1x256xf32>
    %c61 = arith.constant 61 : index
    %528 = memref.load %arg4[%c61] : memref<98xf32, #tpu.memory_space<smem>>
    %529 = vector.broadcast %528 : f32 to vector<1x256xf32>
    %530 = arith.mulf %529, %527 : vector<1x256xf32>
    %531 = arith.addf %516, %530 : vector<1x256xf32>
    %532 = vector.extract_strided_slice %31 {offsets = [0, 50], sizes = [1, 256], strides = [1, 1]} : vector<1x384xf32> to vector<1x256xf32>
    %c68 = arith.constant 68 : index
    %533 = memref.load %arg4[%c68] : memref<98xf32, #tpu.memory_space<smem>>
    %534 = vector.broadcast %533 : f32 to vector<1x256xf32>
    %535 = arith.mulf %534, %532 : vector<1x256xf32>
    %536 = arith.addf %526, %535 : vector<1x256xf32>
    %537 = vector.extract_strided_slice %31 {offsets = [0, 66], sizes = [1, 256], strides = [1, 1]} : vector<1x384xf32> to vector<1x256xf32>
    %c75 = arith.constant 75 : index
    %538 = memref.load %arg4[%c75] : memref<98xf32, #tpu.memory_space<smem>>
    %539 = vector.broadcast %538 : f32 to vector<1x256xf32>
    %540 = arith.mulf %539, %537 : vector<1x256xf32>
    %541 = arith.addf %531, %540 : vector<1x256xf32>
    %542 = vector.extract_strided_slice %31 {offsets = [0, 82], sizes = [1, 256], strides = [1, 1]} : vector<1x384xf32> to vector<1x256xf32>
    %c82 = arith.constant 82 : index
    %543 = memref.load %arg4[%c82] : memref<98xf32, #tpu.memory_space<smem>>
    %544 = vector.broadcast %543 : f32 to vector<1x256xf32>
    %545 = arith.mulf %544, %542 : vector<1x256xf32>
    %546 = arith.addf %536, %545 : vector<1x256xf32>
    %547 = vector.extract_strided_slice %31 {offsets = [0, 98], sizes = [1, 256], strides = [1, 1]} : vector<1x384xf32> to vector<1x256xf32>
    %c89 = arith.constant 89 : index
    %548 = memref.load %arg4[%c89] : memref<98xf32, #tpu.memory_space<smem>>
    %549 = vector.broadcast %548 : f32 to vector<1x256xf32>
    %550 = arith.mulf %549, %547 : vector<1x256xf32>
    %551 = arith.addf %541, %550 : vector<1x256xf32>
    %552 = vector.extract_strided_slice %31 {offsets = [0, 114], sizes = [1, 256], strides = [1, 1]} : vector<1x384xf32> to vector<1x256xf32>
    %c96 = arith.constant 96 : index
    %553 = memref.load %arg4[%c96] : memref<98xf32, #tpu.memory_space<smem>>
    %554 = vector.broadcast %553 : f32 to vector<1x256xf32>
    %555 = arith.mulf %554, %552 : vector<1x256xf32>
    %556 = arith.addf %546, %555 : vector<1x256xf32>
    %557 = arith.addf %556, %551 : vector<1x256xf32>
    %cst_65 = arith.constant 0.000000e+00 : f32
    %558 = vector.broadcast %cst_65 : f32 to vector<1x256xf32>
    %559 = arith.select %484, %557, %558 : vector<1x256xi1>, vector<1x256xf32>
    %560 = arith.addf %390, %559 : vector<1x256xf32>
    %c3_i32 = arith.constant 3 : i32
    %561 = vector.broadcast %c3_i32 : i32 to vector<1x256xi32>
    %562 = arith.addi %48, %561 : vector<1x256xi32>
    %c0_i32_66 = arith.constant 0 : i32
    %563 = vector.broadcast %c0_i32_66 : i32 to vector<1x256xi32>
    %564 = arith.cmpi sge, %562, %563 : vector<1x256xi32>
    %c3_i32_67 = arith.constant 3 : i32
    %565 = vector.broadcast %c3_i32_67 : i32 to vector<1x256xi32>
    %566 = arith.addi %48, %565 : vector<1x256xi32>
    %c16_i32_68 = arith.constant 16 : i32
    %567 = vector.broadcast %c16_i32_68 : i32 to vector<1x256xi32>
    %568 = arith.cmpi slt, %566, %567 : vector<1x256xi32>
    %569 = arith.andi %564, %568 : vector<1x256xi1>
    %cst_69 = arith.constant 0.000000e+00 : f32
    %570 = vector.broadcast %cst_69 : f32 to vector<1x256xf32>
    %cst_70 = arith.constant 0.000000e+00 : f32
    %571 = vector.broadcast %cst_70 : f32 to vector<1x256xf32>
    %572 = vector.extract_strided_slice %30 {offsets = [0, 19], sizes = [1, 256], strides = [1, 1]} : vector<1x384xf32> to vector<1x256xf32>
    %c6 = arith.constant 6 : index
    %573 = memref.load %arg4[%c6] : memref<98xf32, #tpu.memory_space<smem>>
    %574 = vector.broadcast %573 : f32 to vector<1x256xf32>
    %575 = arith.mulf %574, %572 : vector<1x256xf32>
    %576 = arith.addf %570, %575 : vector<1x256xf32>
    %577 = vector.extract_strided_slice %30 {offsets = [0, 35], sizes = [1, 256], strides = [1, 1]} : vector<1x384xf32> to vector<1x256xf32>
    %c13 = arith.constant 13 : index
    %578 = memref.load %arg4[%c13] : memref<98xf32, #tpu.memory_space<smem>>
    %579 = vector.broadcast %578 : f32 to vector<1x256xf32>
    %580 = arith.mulf %579, %577 : vector<1x256xf32>
    %581 = arith.addf %571, %580 : vector<1x256xf32>
    %582 = vector.extract_strided_slice %30 {offsets = [0, 51], sizes = [1, 256], strides = [1, 1]} : vector<1x384xf32> to vector<1x256xf32>
    %c20 = arith.constant 20 : index
    %583 = memref.load %arg4[%c20] : memref<98xf32, #tpu.memory_space<smem>>
    %584 = vector.broadcast %583 : f32 to vector<1x256xf32>
    %585 = arith.mulf %584, %582 : vector<1x256xf32>
    %586 = arith.addf %576, %585 : vector<1x256xf32>
    %587 = vector.extract_strided_slice %30 {offsets = [0, 67], sizes = [1, 256], strides = [1, 1]} : vector<1x384xf32> to vector<1x256xf32>
    %c27 = arith.constant 27 : index
    %588 = memref.load %arg4[%c27] : memref<98xf32, #tpu.memory_space<smem>>
    %589 = vector.broadcast %588 : f32 to vector<1x256xf32>
    %590 = arith.mulf %589, %587 : vector<1x256xf32>
    %591 = arith.addf %581, %590 : vector<1x256xf32>
    %592 = vector.extract_strided_slice %30 {offsets = [0, 83], sizes = [1, 256], strides = [1, 1]} : vector<1x384xf32> to vector<1x256xf32>
    %c34 = arith.constant 34 : index
    %593 = memref.load %arg4[%c34] : memref<98xf32, #tpu.memory_space<smem>>
    %594 = vector.broadcast %593 : f32 to vector<1x256xf32>
    %595 = arith.mulf %594, %592 : vector<1x256xf32>
    %596 = arith.addf %586, %595 : vector<1x256xf32>
    %597 = vector.extract_strided_slice %30 {offsets = [0, 99], sizes = [1, 256], strides = [1, 1]} : vector<1x384xf32> to vector<1x256xf32>
    %c41 = arith.constant 41 : index
    %598 = memref.load %arg4[%c41] : memref<98xf32, #tpu.memory_space<smem>>
    %599 = vector.broadcast %598 : f32 to vector<1x256xf32>
    %600 = arith.mulf %599, %597 : vector<1x256xf32>
    %601 = arith.addf %591, %600 : vector<1x256xf32>
    %602 = vector.extract_strided_slice %30 {offsets = [0, 115], sizes = [1, 256], strides = [1, 1]} : vector<1x384xf32> to vector<1x256xf32>
    %c48 = arith.constant 48 : index
    %603 = memref.load %arg4[%c48] : memref<98xf32, #tpu.memory_space<smem>>
    %604 = vector.broadcast %603 : f32 to vector<1x256xf32>
    %605 = arith.mulf %604, %602 : vector<1x256xf32>
    %606 = arith.addf %596, %605 : vector<1x256xf32>
    %607 = vector.extract_strided_slice %31 {offsets = [0, 19], sizes = [1, 256], strides = [1, 1]} : vector<1x384xf32> to vector<1x256xf32>
    %c55 = arith.constant 55 : index
    %608 = memref.load %arg4[%c55] : memref<98xf32, #tpu.memory_space<smem>>
    %609 = vector.broadcast %608 : f32 to vector<1x256xf32>
    %610 = arith.mulf %609, %607 : vector<1x256xf32>
    %611 = arith.addf %606, %610 : vector<1x256xf32>
    %612 = vector.extract_strided_slice %31 {offsets = [0, 35], sizes = [1, 256], strides = [1, 1]} : vector<1x384xf32> to vector<1x256xf32>
    %c62 = arith.constant 62 : index
    %613 = memref.load %arg4[%c62] : memref<98xf32, #tpu.memory_space<smem>>
    %614 = vector.broadcast %613 : f32 to vector<1x256xf32>
    %615 = arith.mulf %614, %612 : vector<1x256xf32>
    %616 = arith.addf %601, %615 : vector<1x256xf32>
    %617 = vector.extract_strided_slice %31 {offsets = [0, 51], sizes = [1, 256], strides = [1, 1]} : vector<1x384xf32> to vector<1x256xf32>
    %c69 = arith.constant 69 : index
    %618 = memref.load %arg4[%c69] : memref<98xf32, #tpu.memory_space<smem>>
    %619 = vector.broadcast %618 : f32 to vector<1x256xf32>
    %620 = arith.mulf %619, %617 : vector<1x256xf32>
    %621 = arith.addf %611, %620 : vector<1x256xf32>
    %622 = vector.extract_strided_slice %31 {offsets = [0, 67], sizes = [1, 256], strides = [1, 1]} : vector<1x384xf32> to vector<1x256xf32>
    %c76 = arith.constant 76 : index
    %623 = memref.load %arg4[%c76] : memref<98xf32, #tpu.memory_space<smem>>
    %624 = vector.broadcast %623 : f32 to vector<1x256xf32>
    %625 = arith.mulf %624, %622 : vector<1x256xf32>
    %626 = arith.addf %616, %625 : vector<1x256xf32>
    %627 = vector.extract_strided_slice %31 {offsets = [0, 83], sizes = [1, 256], strides = [1, 1]} : vector<1x384xf32> to vector<1x256xf32>
    %c83 = arith.constant 83 : index
    %628 = memref.load %arg4[%c83] : memref<98xf32, #tpu.memory_space<smem>>
    %629 = vector.broadcast %628 : f32 to vector<1x256xf32>
    %630 = arith.mulf %629, %627 : vector<1x256xf32>
    %631 = arith.addf %621, %630 : vector<1x256xf32>
    %632 = vector.extract_strided_slice %31 {offsets = [0, 99], sizes = [1, 256], strides = [1, 1]} : vector<1x384xf32> to vector<1x256xf32>
    %c90 = arith.constant 90 : index
    %633 = memref.load %arg4[%c90] : memref<98xf32, #tpu.memory_space<smem>>
    %634 = vector.broadcast %633 : f32 to vector<1x256xf32>
    %635 = arith.mulf %634, %632 : vector<1x256xf32>
    %636 = arith.addf %626, %635 : vector<1x256xf32>
    %637 = vector.extract_strided_slice %31 {offsets = [0, 115], sizes = [1, 256], strides = [1, 1]} : vector<1x384xf32> to vector<1x256xf32>
    %c97 = arith.constant 97 : index
    %638 = memref.load %arg4[%c97] : memref<98xf32, #tpu.memory_space<smem>>
    %639 = vector.broadcast %638 : f32 to vector<1x256xf32>
    %640 = arith.mulf %639, %637 : vector<1x256xf32>
    %641 = arith.addf %631, %640 : vector<1x256xf32>
    %642 = arith.addf %641, %636 : vector<1x256xf32>
    %cst_71 = arith.constant 0.000000e+00 : f32
    %643 = vector.broadcast %cst_71 : f32 to vector<1x256xf32>
    %644 = arith.select %569, %642, %643 : vector<1x256xi1>, vector<1x256xf32>
    %645 = arith.addf %475, %644 : vector<1x256xf32>
    %646 = arith.addf %645, %560 : vector<1x256xf32>
    %c0_72 = arith.constant 0 : index
    %647 = memref.load %arg5[%c0_72] : memref<4xf32, #tpu.memory_space<smem>>
    %c1_73 = arith.constant 1 : index
    %648 = memref.load %arg5[%c1_73] : memref<4xf32, #tpu.memory_space<smem>>
    %c2_74 = arith.constant 2 : index
    %649 = memref.load %arg5[%c2_74] : memref<4xf32, #tpu.memory_space<smem>>
    %c3_75 = arith.constant 3 : index
    %650 = memref.load %arg5[%c3_75] : memref<4xf32, #tpu.memory_space<smem>>
    %651 = vector.broadcast %649 : f32 to vector<1x256xf32>
    %652 = arith.subf %646, %651 : vector<1x256xf32>
    %cst_76 = arith.constant 9.99999974E-6 : f32
    %653 = arith.addf %650, %cst_76 : f32
    %654 = math.rsqrt %653 : f32
    %655 = vector.broadcast %654 : f32 to vector<1x256xf32>
    %656 = arith.mulf %652, %655 : vector<1x256xf32>
    %657 = vector.broadcast %647 : f32 to vector<1x256xf32>
    %658 = arith.mulf %656, %657 : vector<1x256xf32>
    %659 = vector.broadcast %648 : f32 to vector<1x256xf32>
    %660 = arith.addf %658, %659 : vector<1x256xf32>
    %661 = arith.negf %660 : vector<1x256xf32>
    %662 = math.exp %661 : vector<1x256xf32>
    %cst_77 = arith.constant 1.000000e+00 : f32
    %663 = vector.broadcast %cst_77 : f32 to vector<1x256xf32>
    %664 = arith.addf %663, %662 : vector<1x256xf32>
    %665 = arith.divf %663, %664 : vector<1x256xf32>
    %c0_78 = arith.constant 0 : index
    %c0_79 = arith.constant 0 : index
    %c0_80 = arith.constant 0 : index
    %666 = vector.load %arg6[%c0_78, %c0_79, %c0_80] : memref<1x64x256xf32, #tpu.memory_space<vmem>>, vector<1x64x256xf32>
    %667 = vector.shape_cast %665 : vector<1x256xf32> to vector<1x1x256xf32>
    %668 = vector.broadcast %667 : vector<1x1x256xf32> to vector<1x64x256xf32>
    %669 = arith.mulf %666, %668 : vector<1x64x256xf32>
    %c0_81 = arith.constant 0 : index
    %c0_82 = arith.constant 0 : index
    %c0_83 = arith.constant 0 : index
    %670 = vector.load %arg6[%c0_81, %c0_82, %c0_83] : memref<1x64x256xf32, #tpu.memory_space<vmem>>, vector<1x64x256xf32>
    tpu.vector_store %arg6[%c0_81, %c0_82, %c0_83], %669 {strides = array<i32>} : memref<1x64x256xf32, #tpu.memory_space<vmem>>, vector<1x64x256xf32>,
    return
  }
  func.func @transform_0(%arg0: i32) -> (i32, i32, i32) {
    %c0_i32 = arith.constant 0 : i32
    %c0_i32_0 = arith.constant 0 : i32
    %c0_i32_1 = arith.constant 0 : i32
    return %arg0, %c0_i32, %c0_i32_0 : i32, i32, i32
  }
  func.func @transform_1(%arg0: i32) -> (i32, i32) {
    %c0_i32 = arith.constant 0 : i32
    %c0_i32_0 = arith.constant 0 : i32
    %c0_i32_1 = arith.constant 0 : i32
    return %c0_i32, %c0_i32_0 : i32, i32
  }
  func.func @transform_2(%arg0: i32) -> (i32, i32) {
    %c0_i32 = arith.constant 0 : i32
    %c0_i32_0 = arith.constant 0 : i32
    %c0_i32_1 = arith.constant 0 : i32
    return %c0_i32, %c0_i32_0 : i32, i32
  }
  func.func @transform_3(%arg0: i32) -> i32 {
    %c0_i32 = arith.constant 0 : i32
    %c0_i32_0 = arith.constant 0 : i32
    return %c0_i32 : i32
  }
  func.func @transform_4(%arg0: i32) -> i32 {
    %c0_i32 = arith.constant 0 : i32
    %c0_i32_0 = arith.constant 0 : i32
    return %c0_i32 : i32
  }
  func.func @transform_5(%arg0: i32) -> (i32, i32, i32) {
    %c0_i32 = arith.constant 0 : i32
    %c0_i32_0 = arith.constant 0 : i32
    %c0_i32_1 = arith.constant 0 : i32
    return %arg0, %c0_i32, %c0_i32_0 : i32, i32, i32
  }
}

</mosaic_0001>

<llo_original>
// kernel: tpu_custom_call.1
$region0: #{tpu_custom_call.1}
  #allocation0 [shape = 'u32[]', space=smem, size = 0x4, offset = 0x4, fixed_abs, tag = 'smem constant byte address 0x4 - core index']
  #allocation1 [shape = 'u32[144,128]{1,0:T(1,128)}', space=vmem, size = 0x12000, scoped, tag = 'internal scratch']
  %s0 = inlined_call_operand.hbm [shape: f32[4,64,256], index: 0, kind: input, shape index: {}]
  %s1 = inlined_call_operand.vmem [shape: f32[64,4], index: 1, kind: input, shape index: {}]
  %s2 = inlined_call_operand.vmem [shape: f32[4,64], index: 2, kind: input, shape index: {}]
  %s3 = inlined_call_operand.vmem [shape: f32[98], index: 3, kind: input, shape index: {}]
  %s4 = inlined_call_operand.vmem [shape: f32[4], index: 4, kind: input, shape index: {}]
  %s5 = inlined_call_operand.hbm [shape: f32[4,64,256], index: 5, kind: output, shape index: {}]
  %s6 = sld [smem:[#allocation0]]
  $region65: #{tpu_custom_call.1} parent=0
    _
  %s8 = ssub.s32 1, %s6
  %s9 = scalar_select 0, %s8, %s6
  $region1: #{tpu_custom_call.1} parent=0
    #allocation2 [shape = 'u8[131072]{0}', space=vmem, size = 0x20000, scoped, tag = 'input window, operand 0']
    #allocation3 [shape = 's32[2]{0}', space=sflag, size = 0x8, scoped, tag = 'scoped memory for tpu_custom_call.1']
    #allocation4 [shape = 's32[2]{0}', space=sflag, size = 0x8, scoped, tag = 'scoped memory for tpu_custom_call.1']
    #allocation5 [shape = 's32[2]{0}', space=sflag, size = 0x8, scoped, tag = 'scoped memory for tpu_custom_call.1']
    #allocation6 [shape = 'u8[512]{0}', space=smem, size = 0x200, scoped, tag = 'input window, operand 3, single buffered']
    #allocation7 [shape = 'u8[512]{0}', space=smem, size = 0x200, scoped, tag = 'input window, operand 4, single buffered']
    #allocation8 [shape = 's32[1]{0}', space=sflag, size = 0x4, scoped, tag = 'scoped memory for tpu_custom_call.1']
    #allocation9 [shape = 'u8[131072]{0}', space=vmem, size = 0x20000, scoped, tag = 'output window, operand 0']
    %10 = vsyncpa [#allocation3], 0
    %s11 = scalar_lea.sflag [#allocation3], 1
    %12 = vsyncpa %s11, 0
    %13 = vsyncpa [#allocation5], 0
    %14 = vsyncpa [#allocation8], 0
    %15 = vsyncpa [#allocation4], 0
    %s16 = scalar_lea.sflag [#allocation4], 1
    %17 = vsyncpa %s16, 0
    loop: start=0, step=1, limit=6
    $region2: #{tpu_custom_call.1} parent=1 // loop_pre_header
      _
    $region3: #{tpu_custom_call.1} parent=1 // loop_header
      %s19 = sphi 0, %s23
      %p20 = scmp.ge.s32.totalorder %s19, 6
      %s29 = sphi 0, %s31
      %s32 = sphi 0, %s29
      %s33 = sphi 0, %s32
      %s49 = sphi 0, %s33
      %s53 = sphi 0, %s53
      %s55 = sphi 0, %s53
      %s56 = sphi 0, %s55
      %s70 = sphi 0, %s56
      %s74 = sphi 0, %s74
      %s76 = sphi 0, %s74
      %s77 = sphi 0, %s76
      %s91 = sphi 0, %s77
      %s95 = sphi 0, %s95
      %s97 = sphi 0, %s95
      %s98 = sphi 0, %s97
      %s112 = sphi 0, %s98
      %s116 = sphi 0, %s116
      %s118 = sphi 0, %s116
      %s119 = sphi 0, %s118
      %s133 = sphi 0, %s119
      %s139 = sphi 0, %s141
      %s142 = sphi 0, %s139
      %s143 = sphi 0, %s142
      %s159 = sphi 0, %s143
    $region4: #{tpu_custom_call.1} parent=1 // loop_header_branch
      %22 = sbr.rel (%p20) target = $region8
    $region5: #{tpu_custom_call.1} parent=1 // loop_body
      %s24 = ssub.s32 %s19, 1
      %s25 = ssub.s32 %s19, 2
      %s26 = sadd.s32 %s19, 1
      %s27 = ssub.s32 %s19, %s26
      %p28 = scmp.eq.s32.totalorder %s27, 0
      %s30 = sadd.s32 %s29, 1
      %s31 = scalar_select %p28, %s29, %s30
      %p34 = pneg %p28
      %p35 = scmp.eq.s32.totalorder %s19, 3
      %p36 = por %p34, %p35
      %p37 = scmp.ne.s32.totalorder %s29, %s32
      %p38 = scmp.eq.s32.totalorder %s19, 0
      %p39 = por %p37, %p38
      %p40 = scmp.ne.s32.totalorder %s29, %s32
      %p41 = scmp.eq.s32.totalorder %s24, 3
      %p42 = por %p40, %p41
      %p43 = scmp.ne.s32.totalorder %s32, %s33
      %p44 = scmp.eq.s32.totalorder %s24, 0
      %p45 = por %p43, %p44
      %p46 = scmp.ne.s32.totalorder %s32, %s33
      %p47 = scmp.eq.s32.totalorder %s25, 3
      %p48 = por %p46, %p47
      %p50 = scmp.ne.s32.totalorder %s33, %s49
      %p51 = scmp.eq.s32.totalorder %s25, 0
      %p52 = por %p50, %p51
      %s54 = sadd.s32 %s53, 1
      %p57 = scmp.eq.s32.totalorder %s19, 3
      %p58 = scmp.ne.s32.totalorder %s53, %s55
      %p59 = scmp.eq.s32.totalorder %s19, 0
      %p60 = por %p58, %p59
      %p61 = scmp.ne.s32.totalorder %s53, %s55
      %p62 = scmp.eq.s32.totalorder %s24, 3
      %p63 = por %p61, %p62
      %p64 = scmp.ne.s32.totalorder %s55, %s56
      %p65 = scmp.eq.s32.totalorder %s24, 0
      %p66 = por %p64, %p65
      %p67 = scmp.ne.s32.totalorder %s55, %s56
      %p68 = scmp.eq.s32.totalorder %s25, 3
      %p69 = por %p67, %p68
      %p71 = scmp.ne.s32.totalorder %s56, %s70
      %p72 = scmp.eq.s32.totalorder %s25, 0
      %p73 = por %p71, %p72
      %s75 = sadd.s32 %s74, 1
      %p78 = scmp.eq.s32.totalorder %s19, 3
      %p79 = scmp.ne.s32.totalorder %s74, %s76
      %p80 = scmp.eq.s32.totalorder %s19, 0
      %p81 = por %p79, %p80
      %p82 = scmp.ne.s32.totalorder %s74, %s76
      %p83 = scmp.eq.s32.totalorder %s24, 3
      %p84 = por %p82, %p83
      %p85 = scmp.ne.s32.totalorder %s76, %s77
      %p86 = scmp.eq.s32.totalorder %s24, 0
      %p87 = por %p85, %p86
      %p88 = scmp.ne.s32.totalorder %s76, %s77
      %p89 = scmp.eq.s32.totalorder %s25, 3
      %p90 = por %p88, %p89
      %p92 = scmp.ne.s32.totalorder %s77, %s91
      %p93 = scmp.eq.s32.totalorder %s25, 0
      %p94 = por %p92, %p93
      %s96 = sadd.s32 %s95, 1
      %p99 = scmp.eq.s32.totalorder %s19, 3
      %p100 = scmp.ne.s32.totalorder %s95, %s97
      %p101 = scmp.eq.s32.totalorder %s19, 0
      %p102 = por %p100, %p101
      %p103 = scmp.ne.s32.totalorder %s95, %s97
      %p104 = scmp.eq.s32.totalorder %s24, 3
      %p105 = por %p103, %p104
      %p106 = scmp.ne.s32.totalorder %s97, %s98
      %p107 = scmp.eq.s32.totalorder %s24, 0
      %p108 = por %p106, %p107
      %p109 = scmp.ne.s32.totalorder %s97, %s98
      %p110 = scmp.eq.s32.totalorder %s25, 3
      %p111 = por %p109, %p110
      %p113 = scmp.ne.s32.totalorder %s98, %s112
      %p114 = scmp.eq.s32.totalorder %s25, 0
      %p115 = por %p113, %p114
      %s117 = sadd.s32 %s116, 1
      %p120 = scmp.eq.s32.totalorder %s19, 3
      %p121 = scmp.ne.s32.totalorder %s116, %s118
      %p122 = scmp.eq.s32.totalorder %s19, 0
      %p123 = por %p121, %p122
      %p124 = scmp.ne.s32.totalorder %s116, %s118
      %p125 = scmp.eq.s32.totalorder %s24, 3
      %p126 = por %p124, %p125
      %p127 = scmp.ne.s32.totalorder %s118, %s119
      %p128 = scmp.eq.s32.totalorder %s24, 0
      %p129 = por %p127, %p128
      %p130 = scmp.ne.s32.totalorder %s118, %s119
      %p131 = scmp.eq.s32.totalorder %s25, 3
      %p132 = por %p130, %p131
      %p134 = scmp.ne.s32.totalorder %s119, %s133
      %p135 = scmp.eq.s32.totalorder %s25, 0
      %p136 = por %p134, %p135
      %s137 = ssub.s32 %s19, %s26
      %p138 = scmp.eq.s32.totalorder %s137, 0
      %s140 = sadd.s32 %s139, 1
      %s141 = scalar_select %p138, %s139, %s140
      %p144 = pneg %p138
      %p145 = scmp.eq.s32.totalorder %s19, 3
      %p146 = por %p144, %p145
      %p147 = scmp.ne.s32.totalorder %s139, %s142
      %p148 = scmp.eq.s32.totalorder %s19, 0
      %p149 = por %p147, %p148
      %p150 = scmp.ne.s32.totalorder %s139, %s142
      %p151 = scmp.eq.s32.totalorder %s24, 3
      %p152 = por %p150, %p151
      %p153 = scmp.ne.s32.totalorder %s142, %s143
      %p154 = scmp.eq.s32.totalorder %s24, 0
      %p155 = por %p153, %p154
      %p156 = scmp.ne.s32.totalorder %s142, %s143
      %p157 = scmp.eq.s32.totalorder %s25, 3
      %p158 = por %p156, %p157
      %p160 = scmp.ne.s32.totalorder %s143, %s159
      %p161 = scmp.eq.s32.totalorder %s25, 0
      %p162 = por %p160, %p161
      %p163 = scmp.le.s32.totalorder 1, %s19
      %p164 = scmp.lt.s32.totalorder %s19, 5
      %p165 = pnand %p163, %p164
      %p166 = pneg %p165
      // Predicated region
      $region9: #{tpu_custom_call.1} parent=5 // pred_check
        _
      $region10: #{tpu_custom_call.1} parent=5 // pred_check_branch
        %168 = sbr.rel (%p165) target = $region12
      $region11: #{tpu_custom_call.1} parent=5 // pred_region
        %s169 = ssub.s32 %s19, 1
        // Predicated region
        $region13: #{tpu_custom_call.1} parent=11 // pred_check
          %p170 = pneg %p66
        $region14: #{tpu_custom_call.1} parent=11 // pred_check_branch
          %172 = sbr.rel (%p170) target = $region16
        $region15: #{tpu_custom_call.1} parent=11 // pred_region
          _
        $region16: #{tpu_custom_call.1} parent=11 // pred_fallthru
          _
        // Predicated region
        $region17: #{tpu_custom_call.1} parent=11 // pred_check
          %p173 = pneg %p87
        $region18: #{tpu_custom_call.1} parent=11 // pred_check_branch
          %175 = sbr.rel (%p173) target = $region20
        $region19: #{tpu_custom_call.1} parent=11 // pred_region
          _
        $region20: #{tpu_custom_call.1} parent=11 // pred_fallthru
          _
        // Predicated region
        $region21: #{tpu_custom_call.1} parent=11 // pred_check
          %p176 = pneg %p108
        $region22: #{tpu_custom_call.1} parent=11 // pred_check_branch
          %178 = sbr.rel (%p176) target = $region24
        $region23: #{tpu_custom_call.1} parent=11 // pred_region
          %s180 = ssub.s32 16, 16
          %181 = vsyncadd [#allocation5], %s180
          %s183 = sshll.u32 %s3, 4
          %s184 = int_to_ptr.vmem [resolvable:$true] %s183
          %186 = dma.vmem_to_smem %s184, 16, [#allocation6], [#allocation5]
        $region24: #{tpu_custom_call.1} parent=11 // pred_fallthru
          _
        // Predicated region
        $region25: #{tpu_custom_call.1} parent=11 // pred_check
          %p187 = pneg %p129
        $region26: #{tpu_custom_call.1} parent=11 // pred_check_branch
          %189 = sbr.rel (%p187) target = $region28
        $region27: #{tpu_custom_call.1} parent=11 // pred_region
          %s191 = ssub.s32 16, 16
          %192 = vsyncadd [#allocation8], %s191
          %s194 = sshll.u32 %s4, 4
          %s195 = int_to_ptr.vmem [resolvable:$true] %s194
          %197 = dma.vmem_to_smem %s195, 16, [#allocation7], [#allocation8]
        $region28: #{tpu_custom_call.1} parent=11 // pred_fallthru
          _
      $region12: #{tpu_custom_call.1} parent=5 // pred_fallthru
        _
      %p198 = scmp.lt.s32.totalorder %s19, 4
      // Predicated region
      $region29: #{tpu_custom_call.1} parent=5 // pred_check
        %p199 = pneg %p198
      $region30: #{tpu_custom_call.1} parent=5 // pred_check_branch
        %201 = sbr.rel (%p199) target = $region32
      $region31: #{tpu_custom_call.1} parent=5 // pred_region
        // Predicated region
        $region33: #{tpu_custom_call.1} parent=31 // pred_check
          %p202 = pneg %p39
        $region34: #{tpu_custom_call.1} parent=31 // pred_check_branch
          %204 = sbr.rel (%p202) target = $region36
        $region35: #{tpu_custom_call.1} parent=31 // pred_region
          %s205 = sand.u32 %s29, 1
          %s206 = scalar_lea.sflag [#allocation3], %s205
          %s207 = sand.u32 %s29, 1
          %s208 = smul.addr %s207, 128
          %s209 = scalar_lea.vmem [#allocation2], %s208
          %s211 = ssub.s32 2048, 2048
          %212 = vsyncadd %s206, %s211
          %s213 = smul.addr %s19, 16
          %s214 = smul.addr %s213, 128
          %s215 = scalar_lea.hbm %s0, %s214
          %s216 = sshll.u32 %s209, 4
          %s217 = int_to_ptr.vmem [resolvable:$true] %s216
          %222 = dma.hbm_to_vmem [thread:$0]  %s215, 2048, %s217, %s206, 256, 256, 16
        $region36: #{tpu_custom_call.1} parent=31 // pred_fallthru
          _
      $region32: #{tpu_custom_call.1} parent=5 // pred_fallthru
        _
      %p223 = scmp.le.s32.totalorder 1, %s19
      %p224 = scmp.lt.s32.totalorder %s19, 5
      %p225 = pnand %p223, %p224
      %p226 = pneg %p225
      // Predicated region
      $region37: #{tpu_custom_call.1} parent=5 // pred_check
        _
      $region38: #{tpu_custom_call.1} parent=5 // pred_check_branch
        %228 = sbr.rel (%p225) target = $region40
      $region39: #{tpu_custom_call.1} parent=5 // pred_region
        %s229 = ssub.s32 %s19, 1
        %s230 = sand.u32 %s32, 1
        %s231 = scalar_lea.sflag [#allocation3], %s230
        %s232 = sand.u32 %s32, 1
        %s233 = smul.addr %s232, 128
        %s234 = scalar_lea.vmem [#allocation2], %s233
        // Predicated region
        $region41: #{tpu_custom_call.1} parent=39 // pred_check
          %p235 = pneg %p45
        $region42: #{tpu_custom_call.1} parent=39 // pred_check_branch
          %237 = sbr.rel (%p235) target = $region44
        $region43: #{tpu_custom_call.1} parent=39 // pred_region
          %238 = dma.done %s231, 2048
        $region44: #{tpu_custom_call.1} parent=39 // pred_fallthru
          _
        // Predicated region
        $region45: #{tpu_custom_call.1} parent=39 // pred_check
          %p239 = pneg %p108
        $region46: #{tpu_custom_call.1} parent=39 // pred_check_branch
          %241 = sbr.rel (%p239) target = $region48
        $region47: #{tpu_custom_call.1} parent=39 // pred_region
          %242 = dma.done [#allocation5], 16
        $region48: #{tpu_custom_call.1} parent=39 // pred_fallthru
          _
        // Predicated region
        $region49: #{tpu_custom_call.1} parent=39 // pred_check
          %p243 = pneg %p129
        $region50: #{tpu_custom_call.1} parent=39 // pred_check_branch
          %245 = sbr.rel (%p243) target = $region52
        $region51: #{tpu_custom_call.1} parent=39 // pred_region
          %246 = dma.done [#allocation8], 16
        $region52: #{tpu_custom_call.1} parent=39 // pred_fallthru
          _
        %247 = sfence
        %s248 = sand.u32 %s32, 1
        %s249 = scalar_lea.sflag [#allocation3], %s248
        %s250 = sand.u32 %s32, 1
        %s251 = smul.addr %s250, 128
        %s252 = scalar_lea.vmem [#allocation2], %s251
        %p253 = pneg %p45
        %p254 = pneg %p42
        %p255 = pneg %p66
        %p256 = pneg %p63
        %p257 = pneg %p87
        %p258 = pneg %p84
        %p259 = pneg %p108
        %p260 = pneg %p105
        %p261 = pneg %p129
        %p262 = pneg %p126
        %p263 = pneg %p155
        %p264 = pneg %p152
        %s265 = sand.u32 %s142, 1
        %s266 = scalar_lea.sflag [#allocation4], %s265
        %s267 = sand.u32 %s142, 1
        %s268 = smul.addr %s267, 128
        %s269 = scalar_lea.vmem [#allocation9], %s268
        %v270 = vld [vmem:[%s234] sm:$0xff]
        %v271 = vld [vmem:[%s234 + $0x8] sm:$0xff]
        %v272 = vld [vmem:[%s234 + $0x10] sm:$0xff]
        %v273 = vld [vmem:[%s234 + $0x18] sm:$0xff]
        %v274 = vld [vmem:[%s234 + $0x20] sm:$0xff]
        %v275 = vld [vmem:[%s234 + $0x28] sm:$0xff]
        %v276 = vld [vmem:[%s234 + $0x30] sm:$0xff]
        %v277 = vld [vmem:[%s234 + $0x38] sm:$0xff]
        %v278 = vld [vmem:[%s234 + $0x40] sm:$0xff]
        %v279 = vld [vmem:[%s234 + $0x48] sm:$0xff]
        %v280 = vld [vmem:[%s234 + $0x50] sm:$0xff]
        %v281 = vld [vmem:[%s234 + $0x58] sm:$0xff]
        %v282 = vld [vmem:[%s234 + $0x60] sm:$0xff]
        %v283 = vld [vmem:[%s234 + $0x68] sm:$0xff]
        %v284 = vld [vmem:[%s234 + $0x70] sm:$0xff]
        %v285 = vld [vmem:[%s234 + $0x78] sm:$0xff]
        %v286 = vadd.f32 %v270, %v271
        %287 = vadd.xlane.f32.xlu0 %v286
        %v288 = vpop.xlane.xlu0 %287
        %v289 = vadd.f32 %v272, %v273
        %290 = vadd.xlane.f32.xlu0 %v289
        %v291 = vpop.xlane.xlu0 %290
        %v292 = vadd.f32 %v274, %v275
        %293 = vadd.xlane.f32.xlu0 %v292
        %v294 = vpop.xlane.xlu0 %293
        %v295 = vadd.f32 %v276, %v277
        %296 = vadd.xlane.f32.xlu0 %v295
        %v297 = vpop.xlane.xlu0 %296
        %v298 = vadd.f32 %v278, %v279
        %299 = vadd.xlane.f32.xlu0 %v298
        %v300 = vpop.xlane.xlu0 %299
        %v301 = vadd.f32 %v280, %v281
        %302 = vadd.xlane.f32.xlu0 %v301
        %v303 = vpop.xlane.xlu0 %302
        %v304 = vadd.f32 %v282, %v283
        %305 = vadd.xlane.f32.xlu0 %v304
        %v306 = vpop.xlane.xlu0 %305
        %v307 = vadd.f32 %v284, %v285
        %308 = vadd.xlane.f32.xlu0 %v307
        %v309 = vpop.xlane.xlu0 %308
        %v310 = vmul.f32 %v288, 0.00390625
        %v311 = vmul.f32 %v291, 0.00390625
        %v312 = vmul.f32 %v294, 0.00390625
        %v313 = vmul.f32 %v297, 0.00390625
        %v314 = vmul.f32 %v300, 0.00390625
        %v315 = vmul.f32 %v303, 0.00390625
        %v316 = vmul.f32 %v306, 0.00390625
        %v317 = vmul.f32 %v309, 0.00390625
        %v318 = vmax.f32 %v270, %v271
        %319 = vmax.xlane.f32.xlu0 %v318
        %v320 = vpop.xlane.xlu0 %319
        %v321 = vmax.f32 %v272, %v273
        %322 = vmax.xlane.f32.xlu0 %v321
        %v323 = vpop.xlane.xlu0 %322
        %v324 = vmax.f32 %v274, %v275
        %325 = vmax.xlane.f32.xlu0 %v324
        %v326 = vpop.xlane.xlu0 %325
        %v327 = vmax.f32 %v276, %v277
        %328 = vmax.xlane.f32.xlu0 %v327
        %v329 = vpop.xlane.xlu0 %328
        %v330 = vmax.f32 %v278, %v279
        %331 = vmax.xlane.f32.xlu0 %v330
        %v332 = vpop.xlane.xlu0 %331
        %v333 = vmax.f32 %v280, %v281
        %334 = vmax.xlane.f32.xlu0 %v333
        %v335 = vpop.xlane.xlu0 %334
        %v336 = vmax.f32 %v282, %v283
        %337 = vmax.xlane.f32.xlu0 %v336
        %v338 = vpop.xlane.xlu0 %337
        %v339 = vmax.f32 %v284, %v285
        %340 = vmax.xlane.f32.xlu0 %v339
        %v341 = vpop.xlane.xlu0 %340
        %v350 = vlaneseq
        %v351 = vand.u32 %v350, 127
        %v352 = vlaneseq
        %v353 = vshrl.u32 %v352, 7
        %v354 = vsub.s32 %v351, %v353
        %v355 = vrot.slane %v310, %v354
        %v356 = vadd.s32 %v351, 4294967288
        %v357 = vlaneseq
        %v358 = vshrl.u32 %v357, 7
        %v359 = vsub.s32 %v356, %v358
        %v360 = vrot.slane %v311, %v359
        %vm361 = vcmask 130112
        %v362 = vsel %vm361, %v360, %v355
        %v363 = vadd.s32 %v351, 4294967280
        %v364 = vlaneseq
        %v365 = vshrl.u32 %v364, 7
        %v366 = vsub.s32 %v363, %v365
        %v367 = vrot.slane %v312, %v366
        %vm368 = vcmask 195712
        %v369 = vsel %vm368, %v367, %v362
        %v370 = vadd.s32 %v351, 4294967272
        %v371 = vlaneseq
        %v372 = vshrl.u32 %v371, 7
        %v373 = vsub.s32 %v370, %v372
        %v374 = vrot.slane %v313, %v373
        %vm375 = vcmask 261312
        %v376 = vsel %vm375, %v374, %v369
        %v377 = vadd.s32 %v351, 4294967264
        %v378 = vlaneseq
        %v379 = vshrl.u32 %v378, 7
        %v380 = vsub.s32 %v377, %v379
        %v381 = vrot.slane %v314, %v380
        %vm382 = vcmask 326912
        %v383 = vsel %vm382, %v381, %v376
        %v384 = vadd.s32 %v351, 4294967256
        %v385 = vlaneseq
        %v386 = vshrl.u32 %v385, 7
        %v387 = vsub.s32 %v384, %v386
        %v388 = vrot.slane %v315, %v387
        %vm389 = vcmask 392512
        %v390 = vsel %vm389, %v388, %v383
        %v391 = vadd.s32 %v351, 4294967248
        %v392 = vlaneseq
        %v393 = vshrl.u32 %v392, 7
        %v394 = vsub.s32 %v391, %v393
        %v395 = vrot.slane %v316, %v394
        %vm396 = vcmask 458112
        %v397 = vsel %vm396, %v395, %v390
        %v398 = vadd.s32 %v351, 4294967240
        %v399 = vlaneseq
        %v400 = vshrl.u32 %v399, 7
        %v401 = vsub.s32 %v398, %v400
        %v402 = vrot.slane %v317, %v401
        %vm403 = vcmask 523712
        %v404 = vsel %vm403, %v402, %v397
        %v414 = vlaneseq
        %v415 = vshrl.u32 %v414, 7
        %v416 = vsub.s32 %v351, %v415
        %v417 = vrot.slane %v320, %v416
        %v418 = vlaneseq
        %v419 = vshrl.u32 %v418, 7
        %v420 = vsub.s32 %v356, %v419
        %v421 = vrot.slane %v323, %v420
        %v422 = vsel %vm361, %v421, %v417
        %v423 = vlaneseq
        %v424 = vshrl.u32 %v423, 7
        %v425 = vsub.s32 %v363, %v424
        %v426 = vrot.slane %v326, %v425
        %v427 = vsel %vm368, %v426, %v422
        %v428 = vlaneseq
        %v429 = vshrl.u32 %v428, 7
        %v430 = vsub.s32 %v370, %v429
        %v431 = vrot.slane %v329, %v430
        %v432 = vsel %vm375, %v431, %v427
        %v433 = vlaneseq
        %v434 = vshrl.u32 %v433, 7
        %v435 = vsub.s32 %v377, %v434
        %v436 = vrot.slane %v332, %v435
        %v437 = vsel %vm382, %v436, %v432
        %v438 = vlaneseq
        %v439 = vshrl.u32 %v438, 7
        %v440 = vsub.s32 %v384, %v439
        %v441 = vrot.slane %v335, %v440
        %v442 = vsel %vm389, %v441, %v437
        %v443 = vlaneseq
        %v444 = vshrl.u32 %v443, 7
        %v445 = vsub.s32 %v391, %v444
        %v446 = vrot.slane %v338, %v445
        %v447 = vsel %vm396, %v446, %v442
        %v448 = vlaneseq
        %v449 = vshrl.u32 %v448, 7
        %v450 = vsub.s32 %v398, %v449
        %v451 = vrot.slane %v341, %v450
        %v452 = vsel %vm403, %v451, %v447
        %vm454 = vcmask 1040384
        %v455 = vsel %vm454, %v404, %v452
        %v456 = vld [vmem:[%s1] sm:$0xff]
        %v457 = vld [vmem:[%s1 + $0x8] sm:$0xff]
        %v458 = vld [vmem:[%s1 + $0x10] sm:$0xff]
        %v459 = vld [vmem:[%s1 + $0x18] sm:$0xff]
        %v460 = vld [vmem:[%s1 + $0x20] sm:$0xff]
        %v461 = vld [vmem:[%s1 + $0x28] sm:$0xff]
        %v462 = vld [vmem:[%s1 + $0x30] sm:$0xff]
        %v463 = vld [vmem:[%s1 + $0x38] sm:$0xff]
        %vm464 = vcmask 523264
        %v466 = vsel %vm464, %v455, 0
        %468 = vmatprep.subr.mxu0 0.0
        %v469 = vand.u32 %v456, 4294901760
        %470 = vmatpush1.msra.mxu0 %v469
        %471 = vmatprep.subr.mxu0 0.0
        %v472 = vand.u32 %v457, 4294901760
        %473 = vmatpush1.msra.mxu0 %v472
        %474 = vmatprep.subr.mxu0 0.0
        %v475 = vand.u32 %v458, 4294901760
        %476 = vmatpush1.msra.mxu0 %v475
        %477 = vmatprep.subr.mxu0 0.0
        %v478 = vand.u32 %v459, 4294901760
        %479 = vmatpush1.msra.mxu0 %v478
        %480 = vmatprep.subr.mxu0 0.0
        %v481 = vand.u32 %v460, 4294901760
        %482 = vmatpush1.msra.mxu0 %v481
        %483 = vmatprep.subr.mxu0 0.0
        %v484 = vand.u32 %v461, 4294901760
        %485 = vmatpush1.msra.mxu0 %v484
        %486 = vmatprep.subr.mxu0 0.0
        %v487 = vand.u32 %v462, 4294901760
        %488 = vmatpush1.msra.mxu0 %v487
        %489 = vmatprep.subr.mxu0 0.0
        %v490 = vand.u32 %v463, 4294901760
        %491 = vmatpush1.msra.mxu0 %v490
        %492 = vmatprep.subr.mxu0 0.0
        %493 = vmatpush1.msra.mxu0 0.0
        %494 = vmatprep.subr.mxu0 0.0
        %495 = vmatpush1.msra.mxu0 0.0
        %496 = vmatprep.subr.mxu0 0.0
        %497 = vmatpush1.msra.mxu0 0.0
        %498 = vmatprep.subr.mxu0 0.0
        %499 = vmatpush1.msra.mxu0 0.0
        %500 = vmatprep.subr.mxu0 0.0
        %501 = vmatpush1.msra.mxu0 0.0
        %502 = vmatprep.subr.mxu0 0.0
        %503 = vmatpush1.msra.mxu0 0.0
        %504 = vmatprep.subr.mxu0 0.0
        %505 = vmatpush1.msra.mxu0 0.0
        %506 = vmatprep.subr.mxu0 0.0
        %507 = vmatpush1.msra.mxu0 0.0
        %508 = vmatprep.subr.mxu0 0.0
        %509 = vmatpush1.msra.mxu0 0.0
        %510 = vmatprep.subr.mxu0 0.0
        %511 = vmatpush1.msra.mxu0 0.0
        %512 = vmatprep.subr.mxu0 0.0
        %513 = vmatpush1.msra.mxu0 0.0
        %514 = vmatprep.subr.mxu0 0.0
        %515 = vmatpush1.msra.mxu0 0.0
        %516 = vmatprep.subr.mxu0 0.0
        %517 = vmatpush1.msra.mxu0 0.0
        %518 = vmatprep.subr.mxu0 0.0
        %519 = vmatpush1.msra.mxu0 0.0
        %520 = vmatprep.subr.mxu0 0.0
        %521 = vmatpush1.msra.mxu0 0.0
        %522 = vmatprep.subr.mxu0 0.0
        %523 = vmatpush1.msra.mxu0 0.0
        %524 = vmatprep.subr.mxu0 0.0
        %525 = vmatpush1.msra.mxu0 0.0
        %526 = vmatprep.subr.mxu0 0.0
        %527 = vmatpush1.msra.mxu0 0.0
        %528 = vmatprep.subr.mxu0 0.0
        %529 = vmatpush1.msra.mxu0 0.0
        %530 = vmatprep.subr.mxu0 0.0
        %531 = vmatpush1.msra.mxu0 0.0
        %532 = vmatprep.subr.mxu0 0.0
        %533 = vmatpush1.msra.mxu0 0.0
        %534 = vmatprep.subr.mxu0 0.0
        %535 = vmatpush1.msra.mxu0 0.0
        %536 = vmatprep.subr.mxu0 0.0
        %537 = vmatpush1.msra.mxu0 0.0
        %538 = vmatprep.subr.mxu0 0.0
        %539 = vmatpush1.msra.mxu0 0.0
        %540 = vmatprep.mubr.f32.mxu0 0.0
        %v541 = vand.u32 %v466, 4294901760
        %v542 = vsub.f32 %v466, %v541
        %v543 = vand.u32 %v542, 4294901760
        %v544 = vsub.f32 %v542, %v543
        %v545 = vand.u32 %v544, 4294901760
        %546 = vmatmul.mubr.f32.gmra.mrb[0].mxu0 %v545
        %v547 = vpop.f32.mrb[0].mxu0
        %v548 = vadd.f32 0.0, %v547
        %v549 = vpop.f32.mrb[0].mxu0
        %550 = vdwg.mxu0
        %551 = vmatprep.subr.mxu0 0.0
        %v552 = vand.u32 %v456, 4294901760
        %v553 = vsub.f32 %v456, %v552
        %v554 = vand.u32 %v553, 4294901760
        %v555 = vsub.f32 %v553, %v554
        %v556 = vand.u32 %v555, 4294901760
        %557 = vmatpush1.msra.mxu0 %v556
        %558 = vmatprep.subr.mxu0 0.0
        %v559 = vand.u32 %v457, 4294901760
        %v560 = vsub.f32 %v457, %v559
        %v561 = vand.u32 %v560, 4294901760
        %v562 = vsub.f32 %v560, %v561
        %v563 = vand.u32 %v562, 4294901760
        %564 = vmatpush1.msra.mxu0 %v563
        %565 = vmatprep.subr.mxu0 0.0
        %v566 = vand.u32 %v458, 4294901760
        %v567 = vsub.f32 %v458, %v566
        %v568 = vand.u32 %v567, 4294901760
        %v569 = vsub.f32 %v567, %v568
        %v570 = vand.u32 %v569, 4294901760
        %571 = vmatpush1.msra.mxu0 %v570
        %572 = vmatprep.subr.mxu0 0.0
        %v573 = vand.u32 %v459, 4294901760
        %v574 = vsub.f32 %v459, %v573
        %v575 = vand.u32 %v574, 4294901760
        %v576 = vsub.f32 %v574, %v575
        %v577 = vand.u32 %v576, 4294901760
        %578 = vmatpush1.msra.mxu0 %v577
        %579 = vmatprep.subr.mxu0 0.0
        %v580 = vand.u32 %v460, 4294901760
        %v581 = vsub.f32 %v460, %v580
        %v582 = vand.u32 %v581, 4294901760
        %v583 = vsub.f32 %v581, %v582
        %v584 = vand.u32 %v583, 4294901760
        %585 = vmatpush1.msra.mxu0 %v584
        %586 = vmatprep.subr.mxu0 0.0
        %v587 = vand.u32 %v461, 4294901760
        %v588 = vsub.f32 %v461, %v587
        %v589 = vand.u32 %v588, 4294901760
        %v590 = vsub.f32 %v588, %v589
        %v591 = vand.u32 %v590, 4294901760
        %592 = vmatpush1.msra.mxu0 %v591
        %593 = vmatprep.subr.mxu0 0.0
        %v594 = vand.u32 %v462, 4294901760
        %v595 = vsub.f32 %v462, %v594
        %v596 = vand.u32 %v595, 4294901760
        %v597 = vsub.f32 %v595, %v596
        %v598 = vand.u32 %v597, 4294901760
        %599 = vmatpush1.msra.mxu0 %v598
        %600 = vmatprep.subr.mxu0 0.0
        %v601 = vand.u32 %v463, 4294901760
        %v602 = vsub.f32 %v463, %v601
        %v603 = vand.u32 %v602, 4294901760
        %v604 = vsub.f32 %v602, %v603
        %v605 = vand.u32 %v604, 4294901760
        %606 = vmatpush1.msra.mxu0 %v605
        %607 = vmatprep.subr.mxu0 0.0
        %608 = vmatpush1.msra.mxu0 0.0
        %609 = vmatprep.subr.mxu0 0.0
        %610 = vmatpush1.msra.mxu0 0.0
        %611 = vmatprep.subr.mxu0 0.0
        %612 = vmatpush1.msra.mxu0 0.0
        %613 = vmatprep.subr.mxu0 0.0
        %614 = vmatpush1.msra.mxu0 0.0
        %615 = vmatprep.subr.mxu0 0.0
        %616 = vmatpush1.msra.mxu0 0.0
        %617 = vmatprep.subr.mxu0 0.0
        %618 = vmatpush1.msra.mxu0 0.0
        %619 = vmatprep.subr.mxu0 0.0
        %620 = vmatpush1.msra.mxu0 0.0
        %621 = vmatprep.subr.mxu0 0.0
        %622 = vmatpush1.msra.mxu0 0.0
        %623 = vmatprep.subr.mxu0 0.0
        %624 = vmatpush1.msra.mxu0 0.0
        %625 = vmatprep.subr.mxu0 0.0
        %626 = vmatpush1.msra.mxu0 0.0
        %627 = vmatprep.subr.mxu0 0.0
        %628 = vmatpush1.msra.mxu0 0.0
        %629 = vmatprep.subr.mxu0 0.0
        %630 = vmatpush1.msra.mxu0 0.0
        %631 = vmatprep.subr.mxu0 0.0
        %632 = vmatpush1.msra.mxu0 0.0
        %633 = vmatprep.subr.mxu0 0.0
        %634 = vmatpush1.msra.mxu0 0.0
        %635 = vmatprep.subr.mxu0 0.0
        %636 = vmatpush1.msra.mxu0 0.0
        %637 = vmatprep.subr.mxu0 0.0
        %638 = vmatpush1.msra.mxu0 0.0
        %639 = vmatprep.subr.mxu0 0.0
        %640 = vmatpush1.msra.mxu0 0.0
        %641 = vmatprep.subr.mxu0 0.0
        %642 = vmatpush1.msra.mxu0 0.0
        %643 = vmatprep.subr.mxu0 0.0
        %644 = vmatpush1.msra.mxu0 0.0
        %645 = vmatprep.subr.mxu0 0.0
        %646 = vmatpush1.msra.mxu0 0.0
        %647 = vmatprep.subr.mxu0 0.0
        %648 = vmatpush1.msra.mxu0 0.0
        %649 = vmatprep.subr.mxu0 0.0
        %650 = vmatpush1.msra.mxu0 0.0
        %651 = vmatprep.subr.mxu0 0.0
        %652 = vmatpush1.msra.mxu0 0.0
        %653 = vmatprep.subr.mxu0 0.0
        %654 = vmatpush1.msra.mxu0 0.0
        %655 = vmatprep.mubr.f32.mxu0 0.0
        %v656 = vand.u32 %v466, 4294901760
        %657 = vmatmul.mubr.f32.gmra.mrb[0].mxu0 %v656
        %v658 = vpop.f32.mrb[0].mxu0
        %v659 = vadd.f32 %v548, %v658
        %v660 = vpop.f32.mrb[0].mxu0
        %661 = vdwg.mxu0
        %662 = vmatprep.subr.mxu0 0.0
        %v663 = vand.u32 %v456, 4294901760
        %v664 = vsub.f32 %v456, %v663
        %665 = vmatpush1.msra.mxu0 %v664
        %666 = vmatprep.subr.mxu0 0.0
        %v667 = vand.u32 %v457, 4294901760
        %v668 = vsub.f32 %v457, %v667
        %669 = vmatpush1.msra.mxu0 %v668
        %670 = vmatprep.subr.mxu0 0.0
        %v671 = vand.u32 %v458, 4294901760
        %v672 = vsub.f32 %v458, %v671
        %673 = vmatpush1.msra.mxu0 %v672
        %674 = vmatprep.subr.mxu0 0.0
        %v675 = vand.u32 %v459, 4294901760
        %v676 = vsub.f32 %v459, %v675
        %677 = vmatpush1.msra.mxu0 %v676
        %678 = vmatprep.subr.mxu0 0.0
        %v679 = vand.u32 %v460, 4294901760
        %v680 = vsub.f32 %v460, %v679
        %681 = vmatpush1.msra.mxu0 %v680
        %682 = vmatprep.subr.mxu0 0.0
        %v683 = vand.u32 %v461, 4294901760
        %v684 = vsub.f32 %v461, %v683
        %685 = vmatpush1.msra.mxu0 %v684
        %686 = vmatprep.subr.mxu0 0.0
        %v687 = vand.u32 %v462, 4294901760
        %v688 = vsub.f32 %v462, %v687
        %689 = vmatpush1.msra.mxu0 %v688
        %690 = vmatprep.subr.mxu0 0.0
        %v691 = vand.u32 %v463, 4294901760
        %v692 = vsub.f32 %v463, %v691
        %693 = vmatpush1.msra.mxu0 %v692
        %694 = vmatprep.subr.mxu0 0.0
        %695 = vmatpush1.msra.mxu0 0.0
        %696 = vmatprep.subr.mxu0 0.0
        %697 = vmatpush1.msra.mxu0 0.0
        %698 = vmatprep.subr.mxu0 0.0
        %699 = vmatpush1.msra.mxu0 0.0
        %700 = vmatprep.subr.mxu0 0.0
        %701 = vmatpush1.msra.mxu0 0.0
        %702 = vmatprep.subr.mxu0 0.0
        %703 = vmatpush1.msra.mxu0 0.0
        %704 = vmatprep.subr.mxu0 0.0
        %705 = vmatpush1.msra.mxu0 0.0
        %706 = vmatprep.subr.mxu0 0.0
        %707 = vmatpush1.msra.mxu0 0.0
        %708 = vmatprep.subr.mxu0 0.0
        %709 = vmatpush1.msra.mxu0 0.0
        %710 = vmatprep.subr.mxu0 0.0
        %711 = vmatpush1.msra.mxu0 0.0
        %712 = vmatprep.subr.mxu0 0.0
        %713 = vmatpush1.msra.mxu0 0.0
        %714 = vmatprep.subr.mxu0 0.0
        %715 = vmatpush1.msra.mxu0 0.0
        %716 = vmatprep.subr.mxu0 0.0
        %717 = vmatpush1.msra.mxu0 0.0
        %718 = vmatprep.subr.mxu0 0.0
        %719 = vmatpush1.msra.mxu0 0.0
        %720 = vmatprep.subr.mxu0 0.0
        %721 = vmatpush1.msra.mxu0 0.0
        %722 = vmatprep.subr.mxu0 0.0
        %723 = vmatpush1.msra.mxu0 0.0
        %724 = vmatprep.subr.mxu0 0.0
        %725 = vmatpush1.msra.mxu0 0.0
        %726 = vmatprep.subr.mxu0 0.0
        %727 = vmatpush1.msra.mxu0 0.0
        %728 = vmatprep.subr.mxu0 0.0
        %729 = vmatpush1.msra.mxu0 0.0
        %730 = vmatprep.subr.mxu0 0.0
        %731 = vmatpush1.msra.mxu0 0.0
        %732 = vmatprep.subr.mxu0 0.0
        %733 = vmatpush1.msra.mxu0 0.0
        %734 = vmatprep.subr.mxu0 0.0
        %735 = vmatpush1.msra.mxu0 0.0
        %736 = vmatprep.subr.mxu0 0.0
        %737 = vmatpush1.msra.mxu0 0.0
        %738 = vmatprep.subr.mxu0 0.0
        %739 = vmatpush1.msra.mxu0 0.0
        %740 = vmatprep.subr.mxu0 0.0
        %741 = vmatpush1.msra.mxu0 0.0
        %742 = vmatprep.mubr.f32.mxu0 0.0
        %v743 = vand.u32 %v466, 4294901760
        %v744 = vsub.f32 %v466, %v743
        %745 = vmatmul.mubr.f32.gmra.mrb[0].mxu0 %v744
        %v746 = vpop.f32.mrb[0].mxu0
        %v747 = vadd.f32 %v659, %v746
        %v748 = vpop.f32.mrb[0].mxu0
        %749 = vdwg.mxu0
        %750 = vmatprep.subr.mxu0 0.0
        %v751 = vand.u32 %v456, 4294901760
        %752 = vmatpush1.msra.mxu0 %v751
        %753 = vmatprep.subr.mxu0 0.0
        %v754 = vand.u32 %v457, 4294901760
        %755 = vmatpush1.msra.mxu0 %v754
        %756 = vmatprep.subr.mxu0 0.0
        %v757 = vand.u32 %v458, 4294901760
        %758 = vmatpush1.msra.mxu0 %v757
        %759 = vmatprep.subr.mxu0 0.0
        %v760 = vand.u32 %v459, 4294901760
        %761 = vmatpush1.msra.mxu0 %v760
        %762 = vmatprep.subr.mxu0 0.0
        %v763 = vand.u32 %v460, 4294901760
        %764 = vmatpush1.msra.mxu0 %v763
        %765 = vmatprep.subr.mxu0 0.0
        %v766 = vand.u32 %v461, 4294901760
        %767 = vmatpush1.msra.mxu0 %v766
        %768 = vmatprep.subr.mxu0 0.0
        %v769 = vand.u32 %v462, 4294901760
        %770 = vmatpush1.msra.mxu0 %v769
        %771 = vmatprep.subr.mxu0 0.0
        %v772 = vand.u32 %v463, 4294901760
        %773 = vmatpush1.msra.mxu0 %v772
        %774 = vmatprep.subr.mxu0 0.0
        %775 = vmatpush1.msra.mxu0 0.0
        %776 = vmatprep.subr.mxu0 0.0
        %777 = vmatpush1.msra.mxu0 0.0
        %778 = vmatprep.subr.mxu0 0.0
        %779 = vmatpush1.msra.mxu0 0.0
        %780 = vmatprep.subr.mxu0 0.0
        %781 = vmatpush1.msra.mxu0 0.0
        %782 = vmatprep.subr.mxu0 0.0
        %783 = vmatpush1.msra.mxu0 0.0
        %784 = vmatprep.subr.mxu0 0.0
        %785 = vmatpush1.msra.mxu0 0.0
        %786 = vmatprep.subr.mxu0 0.0
        %787 = vmatpush1.msra.mxu0 0.0
        %788 = vmatprep.subr.mxu0 0.0
        %789 = vmatpush1.msra.mxu0 0.0
        %790 = vmatprep.subr.mxu0 0.0
        %791 = vmatpush1.msra.mxu0 0.0
        %792 = vmatprep.subr.mxu0 0.0
        %793 = vmatpush1.msra.mxu0 0.0
        %794 = vmatprep.subr.mxu0 0.0
        %795 = vmatpush1.msra.mxu0 0.0
        %796 = vmatprep.subr.mxu0 0.0
        %797 = vmatpush1.msra.mxu0 0.0
        %798 = vmatprep.subr.mxu0 0.0
        %799 = vmatpush1.msra.mxu0 0.0
        %800 = vmatprep.subr.mxu0 0.0
        %801 = vmatpush1.msra.mxu0 0.0
        %802 = vmatprep.subr.mxu0 0.0
        %803 = vmatpush1.msra.mxu0 0.0
        %804 = vmatprep.subr.mxu0 0.0
        %805 = vmatpush1.msra.mxu0 0.0
        %806 = vmatprep.subr.mxu0 0.0
        %807 = vmatpush1.msra.mxu0 0.0
        %808 = vmatprep.subr.mxu0 0.0
        %809 = vmatpush1.msra.mxu0 0.0
        %810 = vmatprep.subr.mxu0 0.0
        %811 = vmatpush1.msra.mxu0 0.0
        %812 = vmatprep.subr.mxu0 0.0
        %813 = vmatpush1.msra.mxu0 0.0
        %814 = vmatprep.subr.mxu0 0.0
        %815 = vmatpush1.msra.mxu0 0.0
        %816 = vmatprep.subr.mxu0 0.0
        %817 = vmatpush1.msra.mxu0 0.0
        %818 = vmatprep.subr.mxu0 0.0
        %819 = vmatpush1.msra.mxu0 0.0
        %820 = vmatprep.subr.mxu0 0.0
        %821 = vmatpush1.msra.mxu0 0.0
        %822 = vmatprep.mubr.f32.mxu0 0.0
        %v823 = vand.u32 %v466, 4294901760
        %v824 = vsub.f32 %v466, %v823
        %v825 = vand.u32 %v824, 4294901760
        %826 = vmatmul.mubr.f32.gmra.mrb[0].mxu0 %v825
        %v827 = vpop.f32.mrb[0].mxu0
        %v828 = vadd.f32 %v747, %v827
        %v829 = vpop.f32.mrb[0].mxu0
        %830 = vdwg.mxu0
        %831 = vmatprep.subr.mxu0 0.0
        %v832 = vand.u32 %v456, 4294901760
        %v833 = vsub.f32 %v456, %v832
        %v834 = vand.u32 %v833, 4294901760
        %835 = vmatpush1.msra.mxu0 %v834
        %836 = vmatprep.subr.mxu0 0.0
        %v837 = vand.u32 %v457, 4294901760
        %v838 = vsub.f32 %v457, %v837
        %v839 = vand.u32 %v838, 4294901760
        %840 = vmatpush1.msra.mxu0 %v839
        %841 = vmatprep.subr.mxu0 0.0
        %v842 = vand.u32 %v458, 4294901760
        %v843 = vsub.f32 %v458, %v842
        %v844 = vand.u32 %v843, 4294901760
        %845 = vmatpush1.msra.mxu0 %v844
        %846 = vmatprep.subr.mxu0 0.0
        %v847 = vand.u32 %v459, 4294901760
        %v848 = vsub.f32 %v459, %v847
        %v849 = vand.u32 %v848, 4294901760
        %850 = vmatpush1.msra.mxu0 %v849
        %851 = vmatprep.subr.mxu0 0.0
        %v852 = vand.u32 %v460, 4294901760
        %v853 = vsub.f32 %v460, %v852
        %v854 = vand.u32 %v853, 4294901760
        %855 = vmatpush1.msra.mxu0 %v854
        %856 = vmatprep.subr.mxu0 0.0
        %v857 = vand.u32 %v461, 4294901760
        %v858 = vsub.f32 %v461, %v857
        %v859 = vand.u32 %v858, 4294901760
        %860 = vmatpush1.msra.mxu0 %v859
        %861 = vmatprep.subr.mxu0 0.0
        %v862 = vand.u32 %v462, 4294901760
        %v863 = vsub.f32 %v462, %v862
        %v864 = vand.u32 %v863, 4294901760
        %865 = vmatpush1.msra.mxu0 %v864
        %866 = vmatprep.subr.mxu0 0.0
        %v867 = vand.u32 %v463, 4294901760
        %v868 = vsub.f32 %v463, %v867
        %v869 = vand.u32 %v868, 4294901760
        %870 = vmatpush1.msra.mxu0 %v869
        %871 = vmatprep.subr.mxu0 0.0
        %872 = vmatpush1.msra.mxu0 0.0
        %873 = vmatprep.subr.mxu0 0.0
        %874 = vmatpush1.msra.mxu0 0.0
        %875 = vmatprep.subr.mxu0 0.0
        %876 = vmatpush1.msra.mxu0 0.0
        %877 = vmatprep.subr.mxu0 0.0
        %878 = vmatpush1.msra.mxu0 0.0
        %879 = vmatprep.subr.mxu0 0.0
        %880 = vmatpush1.msra.mxu0 0.0
        %881 = vmatprep.subr.mxu0 0.0
        %882 = vmatpush1.msra.mxu0 0.0
        %883 = vmatprep.subr.mxu0 0.0
        %884 = vmatpush1.msra.mxu0 0.0
        %885 = vmatprep.subr.mxu0 0.0
        %886 = vmatpush1.msra.mxu0 0.0
        %887 = vmatprep.subr.mxu0 0.0
        %888 = vmatpush1.msra.mxu0 0.0
        %889 = vmatprep.subr.mxu0 0.0
        %890 = vmatpush1.msra.mxu0 0.0
        %891 = vmatprep.subr.mxu0 0.0
        %892 = vmatpush1.msra.mxu0 0.0
        %893 = vmatprep.subr.mxu0 0.0
        %894 = vmatpush1.msra.mxu0 0.0
        %895 = vmatprep.subr.mxu0 0.0
        %896 = vmatpush1.msra.mxu0 0.0
        %897 = vmatprep.subr.mxu0 0.0
        %898 = vmatpush1.msra.mxu0 0.0
        %899 = vmatprep.subr.mxu0 0.0
        %900 = vmatpush1.msra.mxu0 0.0
        %901 = vmatprep.subr.mxu0 0.0
        %902 = vmatpush1.msra.mxu0 0.0
        %903 = vmatprep.subr.mxu0 0.0
        %904 = vmatpush1.msra.mxu0 0.0
        %905 = vmatprep.subr.mxu0 0.0
        %906 = vmatpush1.msra.mxu0 0.0
        %907 = vmatprep.subr.mxu0 0.0
        %908 = vmatpush1.msra.mxu0 0.0
        %909 = vmatprep.subr.mxu0 0.0
        %910 = vmatpush1.msra.mxu0 0.0
        %911 = vmatprep.subr.mxu0 0.0
        %912 = vmatpush1.msra.mxu0 0.0
        %913 = vmatprep.subr.mxu0 0.0
        %914 = vmatpush1.msra.mxu0 0.0
        %915 = vmatprep.subr.mxu0 0.0
        %916 = vmatpush1.msra.mxu0 0.0
        %917 = vmatprep.subr.mxu0 0.0
        %918 = vmatpush1.msra.mxu0 0.0
        %919 = vmatprep.mubr.f32.mxu0 0.0
        %v920 = vand.u32 %v466, 4294901760
        %921 = vmatmul.mubr.f32.gmra.mrb[0].mxu0 %v920
        %v922 = vpop.f32.mrb[0].mxu0
        %v923 = vadd.f32 %v828, %v922
        %v924 = vpop.f32.mrb[0].mxu0
        %925 = vdwg.mxu0
        %926 = vmatprep.subr.mxu0 0.0
        %v927 = vand.u32 %v456, 4294901760
        %928 = vmatpush1.msra.mxu0 %v927
        %929 = vmatprep.subr.mxu0 0.0
        %v930 = vand.u32 %v457, 4294901760
        %931 = vmatpush1.msra.mxu0 %v930
        %932 = vmatprep.subr.mxu0 0.0
        %v933 = vand.u32 %v458, 4294901760
        %934 = vmatpush1.msra.mxu0 %v933
        %935 = vmatprep.subr.mxu0 0.0
        %v936 = vand.u32 %v459, 4294901760
        %937 = vmatpush1.msra.mxu0 %v936
        %938 = vmatprep.subr.mxu0 0.0
        %v939 = vand.u32 %v460, 4294901760
        %940 = vmatpush1.msra.mxu0 %v939
        %941 = vmatprep.subr.mxu0 0.0
        %v942 = vand.u32 %v461, 4294901760
        %943 = vmatpush1.msra.mxu0 %v942
        %944 = vmatprep.subr.mxu0 0.0
        %v945 = vand.u32 %v462, 4294901760
        %946 = vmatpush1.msra.mxu0 %v945
        %947 = vmatprep.subr.mxu0 0.0
        %v948 = vand.u32 %v463, 4294901760
        %949 = vmatpush1.msra.mxu0 %v948
        %950 = vmatprep.subr.mxu0 0.0
        %951 = vmatpush1.msra.mxu0 0.0
        %952 = vmatprep.subr.mxu0 0.0
        %953 = vmatpush1.msra.mxu0 0.0
        %954 = vmatprep.subr.mxu0 0.0
        %955 = vmatpush1.msra.mxu0 0.0
        %956 = vmatprep.subr.mxu0 0.0
        %957 = vmatpush1.msra.mxu0 0.0
        %958 = vmatprep.subr.mxu0 0.0
        %959 = vmatpush1.msra.mxu0 0.0
        %960 = vmatprep.subr.mxu0 0.0
        %961 = vmatpush1.msra.mxu0 0.0
        %962 = vmatprep.subr.mxu0 0.0
        %963 = vmatpush1.msra.mxu0 0.0
        %964 = vmatprep.subr.mxu0 0.0
        %965 = vmatpush1.msra.mxu0 0.0
        %966 = vmatprep.subr.mxu0 0.0
        %967 = vmatpush1.msra.mxu0 0.0
        %968 = vmatprep.subr.mxu0 0.0
        %969 = vmatpush1.msra.mxu0 0.0
        %970 = vmatprep.subr.mxu0 0.0
        %971 = vmatpush1.msra.mxu0 0.0
        %972 = vmatprep.subr.mxu0 0.0
        %973 = vmatpush1.msra.mxu0 0.0
        %974 = vmatprep.subr.mxu0 0.0
        %975 = vmatpush1.msra.mxu0 0.0
        %976 = vmatprep.subr.mxu0 0.0
        %977 = vmatpush1.msra.mxu0 0.0
        %978 = vmatprep.subr.mxu0 0.0
        %979 = vmatpush1.msra.mxu0 0.0
        %980 = vmatprep.subr.mxu0 0.0
        %981 = vmatpush1.msra.mxu0 0.0
        %982 = vmatprep.subr.mxu0 0.0
        %983 = vmatpush1.msra.mxu0 0.0
        %984 = vmatprep.subr.mxu0 0.0
        %985 = vmatpush1.msra.mxu0 0.0
        %986 = vmatprep.subr.mxu0 0.0
        %987 = vmatpush1.msra.mxu0 0.0
        %988 = vmatprep.subr.mxu0 0.0
        %989 = vmatpush1.msra.mxu0 0.0
        %990 = vmatprep.subr.mxu0 0.0
        %991 = vmatpush1.msra.mxu0 0.0
        %992 = vmatprep.subr.mxu0 0.0
        %993 = vmatpush1.msra.mxu0 0.0
        %994 = vmatprep.subr.mxu0 0.0
        %995 = vmatpush1.msra.mxu0 0.0
        %996 = vmatprep.subr.mxu0 0.0
        %997 = vmatpush1.msra.mxu0 0.0
        %998 = vmatprep.mubr.f32.mxu0 0.0
        %v999 = vand.u32 %v466, 4294901760
        %1000 = vmatmul.mubr.f32.gmra.mrb[0].mxu0 %v999
        %v1001 = vpop.f32.mrb[0].mxu0
        %v1002 = vadd.f32 %v923, %v1001
        %v1003 = vpop.f32.mrb[0].mxu0
        %1004 = vdwg.mxu0
        %v1005 = vmax.f32 %v1002, 0.0
        %v1006 = vld [vmem:[%s2] sm:$0xf]
        %vm1007 = vcmask 31744
        %v1009 = vsel %vm1007, %v1005, 0
        %vm1011 = vcmask 1043456
        %v1013 = vsel %vm1011, %v1006, 0
        %1015 = vmatprep.subr.mxu0 0.0
        %v1016 = vand.u32 %v1013, 4294901760
        %1017 = vmatpush1.msra.mxu0 %v1016
        %1018 = vmatprep.subr.mxu0 0.0
        %1019 = vmatpush1.msra.mxu0 0.0
        %1020 = vmatprep.subr.mxu0 0.0
        %1021 = vmatpush1.msra.mxu0 0.0
        %1022 = vmatprep.subr.mxu0 0.0
        %1023 = vmatpush1.msra.mxu0 0.0
        %1024 = vmatprep.subr.mxu0 0.0
        %1025 = vmatpush1.msra.mxu0 0.0
        %1026 = vmatprep.subr.mxu0 0.0
        %1027 = vmatpush1.msra.mxu0 0.0
        %1028 = vmatprep.subr.mxu0 0.0
        %1029 = vmatpush1.msra.mxu0 0.0
        %1030 = vmatprep.subr.mxu0 0.0
        %1031 = vmatpush1.msra.mxu0 0.0
        %1032 = vmatprep.subr.mxu0 0.0
        %1033 = vmatpush1.msra.mxu0 0.0
        %1034 = vmatprep.subr.mxu0 0.0
        %1035 = vmatpush1.msra.mxu0 0.0
        %1036 = vmatprep.subr.mxu0 0.0
        %1037 = vmatpush1.msra.mxu0 0.0
        %1038 = vmatprep.subr.mxu0 0.0
        %1039 = vmatpush1.msra.mxu0 0.0
        %1040 = vmatprep.subr.mxu0 0.0
        %1041 = vmatpush1.msra.mxu0 0.0
        %1042 = vmatprep.subr.mxu0 0.0
        %1043 = vmatpush1.msra.mxu0 0.0
        %1044 = vmatprep.subr.mxu0 0.0
        %1045 = vmatpush1.msra.mxu0 0.0
        %1046 = vmatprep.subr.mxu0 0.0
        %1047 = vmatpush1.msra.mxu0 0.0
        %1048 = vmatprep.subr.mxu0 0.0
        %1049 = vmatpush1.msra.mxu0 0.0
        %1050 = vmatprep.subr.mxu0 0.0
        %1051 = vmatpush1.msra.mxu0 0.0
        %1052 = vmatprep.subr.mxu0 0.0
        %1053 = vmatpush1.msra.mxu0 0.0
        %1054 = vmatprep.subr.mxu0 0.0
        %1055 = vmatpush1.msra.mxu0 0.0
        %1056 = vmatprep.subr.mxu0 0.0
        %1057 = vmatpush1.msra.mxu0 0.0
        %1058 = vmatprep.subr.mxu0 0.0
        %1059 = vmatpush1.msra.mxu0 0.0
        %1060 = vmatprep.subr.mxu0 0.0
        %1061 = vmatpush1.msra.mxu0 0.0
        %1062 = vmatprep.subr.mxu0 0.0
        %1063 = vmatpush1.msra.mxu0 0.0
        %1064 = vmatprep.subr.mxu0 0.0
        %1065 = vmatpush1.msra.mxu0 0.0
        %1066 = vmatprep.subr.mxu0 0.0
        %1067 = vmatpush1.msra.mxu0 0.0
        %1068 = vmatprep.subr.mxu0 0.0
        %1069 = vmatpush1.msra.mxu0 0.0
        %1070 = vmatprep.subr.mxu0 0.0
        %1071 = vmatpush1.msra.mxu0 0.0
        %1072 = vmatprep.subr.mxu0 0.0
        %1073 = vmatpush1.msra.mxu0 0.0
        %1074 = vmatprep.subr.mxu0 0.0
        %1075 = vmatpush1.msra.mxu0 0.0
        %1076 = vmatprep.subr.mxu0 0.0
        %1077 = vmatpush1.msra.mxu0 0.0
        %1078 = vmatprep.subr.mxu0 0.0
        %1079 = vmatpush1.msra.mxu0 0.0
        %1080 = vmatprep.mubr.f32.mxu0 0.0
        %v1081 = vand.u32 %v1009, 4294901760
        %v1082 = vsub.f32 %v1009, %v1081
        %v1083 = vand.u32 %v1082, 4294901760
        %v1084 = vsub.f32 %v1082, %v1083
        %v1085 = vand.u32 %v1084, 4294901760
        %1086 = vmatmul.mubr.f32.gmra.mrb[0].mxu0 %v1085
        %v1087 = vpop.f32.mrb[0].mxu0
        %v1088 = vadd.f32 0.0, %v1087
        %v1089 = vpop.f32.mrb[0].mxu0
        %1090 = vdwg.mxu0
        %1091 = vmatprep.subr.mxu0 0.0
        %v1092 = vand.u32 %v1013, 4294901760
        %v1093 = vsub.f32 %v1013, %v1092
        %v1094 = vand.u32 %v1093, 4294901760
        %v1095 = vsub.f32 %v1093, %v1094
        %v1096 = vand.u32 %v1095, 4294901760
        %1097 = vmatpush1.msra.mxu0 %v1096
        %1098 = vmatprep.subr.mxu0 0.0
        %1099 = vmatpush1.msra.mxu0 0.0
        %1100 = vmatprep.subr.mxu0 0.0
        %1101 = vmatpush1.msra.mxu0 0.0
        %1102 = vmatprep.subr.mxu0 0.0
        %1103 = vmatpush1.msra.mxu0 0.0
        %1104 = vmatprep.subr.mxu0 0.0
        %1105 = vmatpush1.msra.mxu0 0.0
        %1106 = vmatprep.subr.mxu0 0.0
        %1107 = vmatpush1.msra.mxu0 0.0
        %1108 = vmatprep.subr.mxu0 0.0
        %1109 = vmatpush1.msra.mxu0 0.0
        %1110 = vmatprep.subr.mxu0 0.0
        %1111 = vmatpush1.msra.mxu0 0.0
        %1112 = vmatprep.subr.mxu0 0.0
        %1113 = vmatpush1.msra.mxu0 0.0
        %1114 = vmatprep.subr.mxu0 0.0
        %1115 = vmatpush1.msra.mxu0 0.0
        %1116 = vmatprep.subr.mxu0 0.0
        %1117 = vmatpush1.msra.mxu0 0.0
        %1118 = vmatprep.subr.mxu0 0.0
        %1119 = vmatpush1.msra.mxu0 0.0
        %1120 = vmatprep.subr.mxu0 0.0
        %1121 = vmatpush1.msra.mxu0 0.0
        %1122 = vmatprep.subr.mxu0 0.0
        %1123 = vmatpush1.msra.mxu0 0.0
        %1124 = vmatprep.subr.mxu0 0.0
        %1125 = vmatpush1.msra.mxu0 0.0
        %1126 = vmatprep.subr.mxu0 0.0
        %1127 = vmatpush1.msra.mxu0 0.0
        %1128 = vmatprep.subr.mxu0 0.0
        %1129 = vmatpush1.msra.mxu0 0.0
        %1130 = vmatprep.subr.mxu0 0.0
        %1131 = vmatpush1.msra.mxu0 0.0
        %1132 = vmatprep.subr.mxu0 0.0
        %1133 = vmatpush1.msra.mxu0 0.0
        %1134 = vmatprep.subr.mxu0 0.0
        %1135 = vmatpush1.msra.mxu0 0.0
        %1136 = vmatprep.subr.mxu0 0.0
        %1137 = vmatpush1.msra.mxu0 0.0
        %1138 = vmatprep.subr.mxu0 0.0
        %1139 = vmatpush1.msra.mxu0 0.0
        %1140 = vmatprep.subr.mxu0 0.0
        %1141 = vmatpush1.msra.mxu0 0.0
        %1142 = vmatprep.subr.mxu0 0.0
        %1143 = vmatpush1.msra.mxu0 0.0
        %1144 = vmatprep.subr.mxu0 0.0
        %1145 = vmatpush1.msra.mxu0 0.0
        %1146 = vmatprep.subr.mxu0 0.0
        %1147 = vmatpush1.msra.mxu0 0.0
        %1148 = vmatprep.subr.mxu0 0.0
        %1149 = vmatpush1.msra.mxu0 0.0
        %1150 = vmatprep.subr.mxu0 0.0
        %1151 = vmatpush1.msra.mxu0 0.0
        %1152 = vmatprep.subr.mxu0 0.0
        %1153 = vmatpush1.msra.mxu0 0.0
        %1154 = vmatprep.subr.mxu0 0.0
        %1155 = vmatpush1.msra.mxu0 0.0
        %1156 = vmatprep.subr.mxu0 0.0
        %1157 = vmatpush1.msra.mxu0 0.0
        %1158 = vmatprep.subr.mxu0 0.0
        %1159 = vmatpush1.msra.mxu0 0.0
        %1160 = vmatprep.mubr.f32.mxu0 0.0
        %v1161 = vand.u32 %v1009, 4294901760
        %1162 = vmatmul.mubr.f32.gmra.mrb[0].mxu0 %v1161
        %v1163 = vpop.f32.mrb[0].mxu0
        %v1164 = vadd.f32 %v1088, %v1163
        %v1165 = vpop.f32.mrb[0].mxu0
        %1166 = vdwg.mxu0
        %1167 = vmatprep.subr.mxu0 0.0
        %v1168 = vand.u32 %v1013, 4294901760
        %v1169 = vsub.f32 %v1013, %v1168
        %1170 = vmatpush1.msra.mxu0 %v1169
        %1171 = vmatprep.subr.mxu0 0.0
        %1172 = vmatpush1.msra.mxu0 0.0
        %1173 = vmatprep.subr.mxu0 0.0
        %1174 = vmatpush1.msra.mxu0 0.0
        %1175 = vmatprep.subr.mxu0 0.0
        %1176 = vmatpush1.msra.mxu0 0.0
        %1177 = vmatprep.subr.mxu0 0.0
        %1178 = vmatpush1.msra.mxu0 0.0
        %1179 = vmatprep.subr.mxu0 0.0
        %1180 = vmatpush1.msra.mxu0 0.0
        %1181 = vmatprep.subr.mxu0 0.0
        %1182 = vmatpush1.msra.mxu0 0.0
        %1183 = vmatprep.subr.mxu0 0.0
        %1184 = vmatpush1.msra.mxu0 0.0
        %1185 = vmatprep.subr.mxu0 0.0
        %1186 = vmatpush1.msra.mxu0 0.0
        %1187 = vmatprep.subr.mxu0 0.0
        %1188 = vmatpush1.msra.mxu0 0.0
        %1189 = vmatprep.subr.mxu0 0.0
        %1190 = vmatpush1.msra.mxu0 0.0
        %1191 = vmatprep.subr.mxu0 0.0
        %1192 = vmatpush1.msra.mxu0 0.0
        %1193 = vmatprep.subr.mxu0 0.0
        %1194 = vmatpush1.msra.mxu0 0.0
        %1195 = vmatprep.subr.mxu0 0.0
        %1196 = vmatpush1.msra.mxu0 0.0
        %1197 = vmatprep.subr.mxu0 0.0
        %1198 = vmatpush1.msra.mxu0 0.0
        %1199 = vmatprep.subr.mxu0 0.0
        %1200 = vmatpush1.msra.mxu0 0.0
        %1201 = vmatprep.subr.mxu0 0.0
        %1202 = vmatpush1.msra.mxu0 0.0
        %1203 = vmatprep.subr.mxu0 0.0
        %1204 = vmatpush1.msra.mxu0 0.0
        %1205 = vmatprep.subr.mxu0 0.0
        %1206 = vmatpush1.msra.mxu0 0.0
        %1207 = vmatprep.subr.mxu0 0.0
        %1208 = vmatpush1.msra.mxu0 0.0
        %1209 = vmatprep.subr.mxu0 0.0
        %1210 = vmatpush1.msra.mxu0 0.0
        %1211 = vmatprep.subr.mxu0 0.0
        %1212 = vmatpush1.msra.mxu0 0.0
        %1213 = vmatprep.subr.mxu0 0.0
        %1214 = vmatpush1.msra.mxu0 0.0
        %1215 = vmatprep.subr.mxu0 0.0
        %1216 = vmatpush1.msra.mxu0 0.0
        %1217 = vmatprep.subr.mxu0 0.0
        %1218 = vmatpush1.msra.mxu0 0.0
        %1219 = vmatprep.subr.mxu0 0.0
        %1220 = vmatpush1.msra.mxu0 0.0
        %1221 = vmatprep.subr.mxu0 0.0
        %1222 = vmatpush1.msra.mxu0 0.0
        %1223 = vmatprep.subr.mxu0 0.0
        %1224 = vmatpush1.msra.mxu0 0.0
        %1225 = vmatprep.subr.mxu0 0.0
        %1226 = vmatpush1.msra.mxu0 0.0
        %1227 = vmatprep.subr.mxu0 0.0
        %1228 = vmatpush1.msra.mxu0 0.0
        %1229 = vmatprep.subr.mxu0 0.0
        %1230 = vmatpush1.msra.mxu0 0.0
        %1231 = vmatprep.subr.mxu0 0.0
        %1232 = vmatpush1.msra.mxu0 0.0
        %1233 = vmatprep.mubr.f32.mxu0 0.0
        %v1234 = vand.u32 %v1009, 4294901760
        %v1235 = vsub.f32 %v1009, %v1234
        %1236 = vmatmul.mubr.f32.gmra.mrb[0].mxu0 %v1235
        %v1237 = vpop.f32.mrb[0].mxu0
        %v1238 = vadd.f32 %v1164, %v1237
        %v1239 = vpop.f32.mrb[0].mxu0
        %1240 = vdwg.mxu0
        %1241 = vmatprep.subr.mxu0 0.0
        %v1242 = vand.u32 %v1013, 4294901760
        %1243 = vmatpush1.msra.mxu0 %v1242
        %1244 = vmatprep.subr.mxu0 0.0
        %1245 = vmatpush1.msra.mxu0 0.0
        %1246 = vmatprep.subr.mxu0 0.0
        %1247 = vmatpush1.msra.mxu0 0.0
        %1248 = vmatprep.subr.mxu0 0.0
        %1249 = vmatpush1.msra.mxu0 0.0
        %1250 = vmatprep.subr.mxu0 0.0
        %1251 = vmatpush1.msra.mxu0 0.0
        %1252 = vmatprep.subr.mxu0 0.0
        %1253 = vmatpush1.msra.mxu0 0.0
        %1254 = vmatprep.subr.mxu0 0.0
        %1255 = vmatpush1.msra.mxu0 0.0
        %1256 = vmatprep.subr.mxu0 0.0
        %1257 = vmatpush1.msra.mxu0 0.0
        %1258 = vmatprep.subr.mxu0 0.0
        %1259 = vmatpush1.msra.mxu0 0.0
        %1260 = vmatprep.subr.mxu0 0.0
        %1261 = vmatpush1.msra.mxu0 0.0
        %1262 = vmatprep.subr.mxu0 0.0
        %1263 = vmatpush1.msra.mxu0 0.0
        %1264 = vmatprep.subr.mxu0 0.0
        %1265 = vmatpush1.msra.mxu0 0.0
        %1266 = vmatprep.subr.mxu0 0.0
        %1267 = vmatpush1.msra.mxu0 0.0
        %1268 = vmatprep.subr.mxu0 0.0
        %1269 = vmatpush1.msra.mxu0 0.0
        %1270 = vmatprep.subr.mxu0 0.0
        %1271 = vmatpush1.msra.mxu0 0.0
        %1272 = vmatprep.subr.mxu0 0.0
        %1273 = vmatpush1.msra.mxu0 0.0
        %1274 = vmatprep.subr.mxu0 0.0
        %1275 = vmatpush1.msra.mxu0 0.0
        %1276 = vmatprep.subr.mxu0 0.0
        %1277 = vmatpush1.msra.mxu0 0.0
        %1278 = vmatprep.subr.mxu0 0.0
        %1279 = vmatpush1.msra.mxu0 0.0
        %1280 = vmatprep.subr.mxu0 0.0
        %1281 = vmatpush1.msra.mxu0 0.0
        %1282 = vmatprep.subr.mxu0 0.0
        %1283 = vmatpush1.msra.mxu0 0.0
        %1284 = vmatprep.subr.mxu0 0.0
        %1285 = vmatpush1.msra.mxu0 0.0
        %1286 = vmatprep.subr.mxu0 0.0
        %1287 = vmatpush1.msra.mxu0 0.0
        %1288 = vmatprep.subr.mxu0 0.0
        %1289 = vmatpush1.msra.mxu0 0.0
        %1290 = vmatprep.subr.mxu0 0.0
        %1291 = vmatpush1.msra.mxu0 0.0
        %1292 = vmatprep.subr.mxu0 0.0
        %1293 = vmatpush1.msra.mxu0 0.0
        %1294 = vmatprep.subr.mxu0 0.0
        %1295 = vmatpush1.msra.mxu0 0.0
        %1296 = vmatprep.subr.mxu0 0.0
        %1297 = vmatpush1.msra.mxu0 0.0
        %1298 = vmatprep.subr.mxu0 0.0
        %1299 = vmatpush1.msra.mxu0 0.0
        %1300 = vmatprep.subr.mxu0 0.0
        %1301 = vmatpush1.msra.mxu0 0.0
        %1302 = vmatprep.subr.mxu0 0.0
        %1303 = vmatpush1.msra.mxu0 0.0
        %1304 = vmatprep.subr.mxu0 0.0
        %1305 = vmatpush1.msra.mxu0 0.0
        %1306 = vmatprep.mubr.f32.mxu0 0.0
        %v1307 = vand.u32 %v1009, 4294901760
        %v1308 = vsub.f32 %v1009, %v1307
        %v1309 = vand.u32 %v1308, 4294901760
        %1310 = vmatmul.mubr.f32.gmra.mrb[0].mxu0 %v1309
        %v1311 = vpop.f32.mrb[0].mxu0
        %v1312 = vadd.f32 %v1238, %v1311
        %v1313 = vpop.f32.mrb[0].mxu0
        %1314 = vdwg.mxu0
        %1315 = vmatprep.subr.mxu0 0.0
        %v1316 = vand.u32 %v1013, 4294901760
        %v1317 = vsub.f32 %v1013, %v1316
        %v1318 = vand.u32 %v1317, 4294901760
        %1319 = vmatpush1.msra.mxu0 %v1318
        %1320 = vmatprep.subr.mxu0 0.0
        %1321 = vmatpush1.msra.mxu0 0.0
        %1322 = vmatprep.subr.mxu0 0.0
        %1323 = vmatpush1.msra.mxu0 0.0
        %1324 = vmatprep.subr.mxu0 0.0
        %1325 = vmatpush1.msra.mxu0 0.0
        %1326 = vmatprep.subr.mxu0 0.0
        %1327 = vmatpush1.msra.mxu0 0.0
        %1328 = vmatprep.subr.mxu0 0.0
        %1329 = vmatpush1.msra.mxu0 0.0
        %1330 = vmatprep.subr.mxu0 0.0
        %1331 = vmatpush1.msra.mxu0 0.0
        %1332 = vmatprep.subr.mxu0 0.0
        %1333 = vmatpush1.msra.mxu0 0.0
        %1334 = vmatprep.subr.mxu0 0.0
        %1335 = vmatpush1.msra.mxu0 0.0
        %1336 = vmatprep.subr.mxu0 0.0
        %1337 = vmatpush1.msra.mxu0 0.0
        %1338 = vmatprep.subr.mxu0 0.0
        %1339 = vmatpush1.msra.mxu0 0.0
        %1340 = vmatprep.subr.mxu0 0.0
        %1341 = vmatpush1.msra.mxu0 0.0
        %1342 = vmatprep.subr.mxu0 0.0
        %1343 = vmatpush1.msra.mxu0 0.0
        %1344 = vmatprep.subr.mxu0 0.0
        %1345 = vmatpush1.msra.mxu0 0.0
        %1346 = vmatprep.subr.mxu0 0.0
        %1347 = vmatpush1.msra.mxu0 0.0
        %1348 = vmatprep.subr.mxu0 0.0
        %1349 = vmatpush1.msra.mxu0 0.0
        %1350 = vmatprep.subr.mxu0 0.0
        %1351 = vmatpush1.msra.mxu0 0.0
        %1352 = vmatprep.subr.mxu0 0.0
        %1353 = vmatpush1.msra.mxu0 0.0
        %1354 = vmatprep.subr.mxu0 0.0
        %1355 = vmatpush1.msra.mxu0 0.0
        %1356 = vmatprep.subr.mxu0 0.0
        %1357 = vmatpush1.msra.mxu0 0.0
        %1358 = vmatprep.subr.mxu0 0.0
        %1359 = vmatpush1.msra.mxu0 0.0
        %1360 = vmatprep.subr.mxu0 0.0
        %1361 = vmatpush1.msra.mxu0 0.0
        %1362 = vmatprep.subr.mxu0 0.0
        %1363 = vmatpush1.msra.mxu0 0.0
        %1364 = vmatprep.subr.mxu0 0.0
        %1365 = vmatpush1.msra.mxu0 0.0
        %1366 = vmatprep.subr.mxu0 0.0
        %1367 = vmatpush1.msra.mxu0 0.0
        %1368 = vmatprep.subr.mxu0 0.0
        %1369 = vmatpush1.msra.mxu0 0.0
        %1370 = vmatprep.subr.mxu0 0.0
        %1371 = vmatpush1.msra.mxu0 0.0
        %1372 = vmatprep.subr.mxu0 0.0
        %1373 = vmatpush1.msra.mxu0 0.0
        %1374 = vmatprep.subr.mxu0 0.0
        %1375 = vmatpush1.msra.mxu0 0.0
        %1376 = vmatprep.subr.mxu0 0.0
        %1377 = vmatpush1.msra.mxu0 0.0
        %1378 = vmatprep.subr.mxu0 0.0
        %1379 = vmatpush1.msra.mxu0 0.0
        %1380 = vmatprep.subr.mxu0 0.0
        %1381 = vmatpush1.msra.mxu0 0.0
        %1382 = vmatprep.mubr.f32.mxu0 0.0
        %v1383 = vand.u32 %v1009, 4294901760
        %1384 = vmatmul.mubr.f32.gmra.mrb[0].mxu0 %v1383
        %v1385 = vpop.f32.mrb[0].mxu0
        %v1386 = vadd.f32 %v1312, %v1385
        %v1387 = vpop.f32.mrb[0].mxu0
        %1388 = vdwg.mxu0
        %1389 = vmatprep.subr.mxu0 0.0
        %v1390 = vand.u32 %v1013, 4294901760
        %1391 = vmatpush1.msra.mxu0 %v1390
        %1392 = vmatprep.subr.mxu0 0.0
        %1393 = vmatpush1.msra.mxu0 0.0
        %1394 = vmatprep.subr.mxu0 0.0
        %1395 = vmatpush1.msra.mxu0 0.0
        %1396 = vmatprep.subr.mxu0 0.0
        %1397 = vmatpush1.msra.mxu0 0.0
        %1398 = vmatprep.subr.mxu0 0.0
        %1399 = vmatpush1.msra.mxu0 0.0
        %1400 = vmatprep.subr.mxu0 0.0
        %1401 = vmatpush1.msra.mxu0 0.0
        %1402 = vmatprep.subr.mxu0 0.0
        %1403 = vmatpush1.msra.mxu0 0.0
        %1404 = vmatprep.subr.mxu0 0.0
        %1405 = vmatpush1.msra.mxu0 0.0
        %1406 = vmatprep.subr.mxu0 0.0
        %1407 = vmatpush1.msra.mxu0 0.0
        %1408 = vmatprep.subr.mxu0 0.0
        %1409 = vmatpush1.msra.mxu0 0.0
        %1410 = vmatprep.subr.mxu0 0.0
        %1411 = vmatpush1.msra.mxu0 0.0
        %1412 = vmatprep.subr.mxu0 0.0
        %1413 = vmatpush1.msra.mxu0 0.0
        %1414 = vmatprep.subr.mxu0 0.0
        %1415 = vmatpush1.msra.mxu0 0.0
        %1416 = vmatprep.subr.mxu0 0.0
        %1417 = vmatpush1.msra.mxu0 0.0
        %1418 = vmatprep.subr.mxu0 0.0
        %1419 = vmatpush1.msra.mxu0 0.0
        %1420 = vmatprep.subr.mxu0 0.0
        %1421 = vmatpush1.msra.mxu0 0.0
        %1422 = vmatprep.subr.mxu0 0.0
        %1423 = vmatpush1.msra.mxu0 0.0
        %1424 = vmatprep.subr.mxu0 0.0
        %1425 = vmatpush1.msra.mxu0 0.0
        %1426 = vmatprep.subr.mxu0 0.0
        %1427 = vmatpush1.msra.mxu0 0.0
        %1428 = vmatprep.subr.mxu0 0.0
        %1429 = vmatpush1.msra.mxu0 0.0
        %1430 = vmatprep.subr.mxu0 0.0
        %1431 = vmatpush1.msra.mxu0 0.0
        %1432 = vmatprep.subr.mxu0 0.0
        %1433 = vmatpush1.msra.mxu0 0.0
        %1434 = vmatprep.subr.mxu0 0.0
        %1435 = vmatpush1.msra.mxu0 0.0
        %1436 = vmatprep.subr.mxu0 0.0
        %1437 = vmatpush1.msra.mxu0 0.0
        %1438 = vmatprep.subr.mxu0 0.0
        %1439 = vmatpush1.msra.mxu0 0.0
        %1440 = vmatprep.subr.mxu0 0.0
        %1441 = vmatpush1.msra.mxu0 0.0
        %1442 = vmatprep.subr.mxu0 0.0
        %1443 = vmatpush1.msra.mxu0 0.0
        %1444 = vmatprep.subr.mxu0 0.0
        %1445 = vmatpush1.msra.mxu0 0.0
        %1446 = vmatprep.subr.mxu0 0.0
        %1447 = vmatpush1.msra.mxu0 0.0
        %1448 = vmatprep.subr.mxu0 0.0
        %1449 = vmatpush1.msra.mxu0 0.0
        %1450 = vmatprep.subr.mxu0 0.0
        %1451 = vmatpush1.msra.mxu0 0.0
        %1452 = vmatprep.subr.mxu0 0.0
        %1453 = vmatpush1.msra.mxu0 0.0
        %1454 = vmatprep.mubr.f32.mxu0 0.0
        %v1455 = vand.u32 %v1009, 4294901760
        %1456 = vmatmul.mubr.f32.gmra.mrb[0].mxu0 %v1455
        %v1457 = vpop.f32.mrb[0].mxu0
        %v1458 = vadd.f32 %v1386, %v1457
        %v1459 = vpop.f32.mrb[0].mxu0
        %1460 = vdwg.mxu0
        %v1462 = vrot.slane %v1458, 1
        %v1464 = vadd.f32 %v1458, %v1462
        %v1465 = vxor.u32 %v1464, 2147483648
        %v1466 = vmul.f32 %v1465, 1.442695
        %v1467 = vpow.pop %v1466
        %v1468 = vadd.f32 %v1467, 1.0
        %v1469 = vrcp.pop %v1468
        %v1470 = vmul.f32 1.0, %v1469
        %v1471 = vlaneseq
        %v1472 = vshrl.u32 %v1471, 7
        %v1473 = vsub.s32 0, %v1472
        %v1474 = vrot.slane %v1470, %v1473
        %1476 = vbcast.lane.b32.xlu0 %v1474, 256
        %v1477 = vpop.permute.xlu0 %1476
        %s1479 = sor.u32 256, 8
        %1480 = vbcast.lane.b32.xlu0 %v1474, %s1479
        %v1481 = vpop.permute.xlu0 %1480
        %s1483 = sor.u32 256, 16
        %1484 = vbcast.lane.b32.xlu0 %v1474, %s1483
        %v1485 = vpop.permute.xlu0 %1484
        %s1487 = sor.u32 256, 24
        %1488 = vbcast.lane.b32.xlu0 %v1474, %s1487
        %v1489 = vpop.permute.xlu0 %1488
        %s1491 = sor.u32 256, 32
        %1492 = vbcast.lane.b32.xlu0 %v1474, %s1491
        %v1493 = vpop.permute.xlu0 %1492
        %s1495 = sor.u32 256, 40
        %1496 = vbcast.lane.b32.xlu0 %v1474, %s1495
        %v1497 = vpop.permute.xlu0 %1496
        %s1499 = sor.u32 256, 48
        %1500 = vbcast.lane.b32.xlu0 %v1474, %s1499
        %v1501 = vpop.permute.xlu0 %1500
        %s1503 = sor.u32 256, 56
        %1504 = vbcast.lane.b32.xlu0 %v1474, %s1503
        %v1505 = vpop.permute.xlu0 %1504
        %v1506 = vmul.f32 %v270, %v1477
        %v1507 = vmul.f32 %v271, %v1477
        %v1508 = vmul.f32 %v272, %v1481
        %v1509 = vmul.f32 %v273, %v1481
        %v1510 = vmul.f32 %v274, %v1485
        %v1511 = vmul.f32 %v275, %v1485
        %v1512 = vmul.f32 %v276, %v1489
        %v1513 = vmul.f32 %v277, %v1489
        %v1514 = vmul.f32 %v278, %v1493
        %v1515 = vmul.f32 %v279, %v1493
        %v1516 = vmul.f32 %v280, %v1497
        %v1517 = vmul.f32 %v281, %v1497
        %v1518 = vmul.f32 %v282, %v1501
        %v1519 = vmul.f32 %v283, %v1501
        %v1520 = vmul.f32 %v284, %v1505
        %v1521 = vmul.f32 %v285, %v1505
        %1522 = vst [vmem:[%s269] sm:$0xff] %v1506
        %1523 = vst [vmem:[%s269 + $0x8] sm:$0xff] %v1507
        %1524 = vst [vmem:[%s269 + $0x10] sm:$0xff] %v1508
        %1525 = vst [vmem:[%s269 + $0x18] sm:$0xff] %v1509
        %1526 = vst [vmem:[%s269 + $0x20] sm:$0xff] %v1510
        %1527 = vst [vmem:[%s269 + $0x28] sm:$0xff] %v1511
        %1528 = vst [vmem:[%s269 + $0x30] sm:$0xff] %v1512
        %1529 = vst [vmem:[%s269 + $0x38] sm:$0xff] %v1513
        %1530 = vst [vmem:[%s269 + $0x40] sm:$0xff] %v1514
        %1531 = vst [vmem:[%s269 + $0x48] sm:$0xff] %v1515
        %1532 = vst [vmem:[%s269 + $0x50] sm:$0xff] %v1516
        %1533 = vst [vmem:[%s269 + $0x58] sm:$0xff] %v1517
        %1534 = vst [vmem:[%s269 + $0x60] sm:$0xff] %v1518
        %1535 = vst [vmem:[%s269 + $0x68] sm:$0xff] %v1519
        %1536 = vst [vmem:[%s269 + $0x70] sm:$0xff] %v1520
        %1537 = vst [vmem:[%s269 + $0x78] sm:$0xff] %v1521
        %v1538 = vld [vmem:[%s269] sm:$0xff]
        %v1539 = vld [vmem:[%s269 + $0x8] sm:$0xff]
        %v1540 = vld [vmem:[%s269 + $0x10] sm:$0xff]
        %v1541 = vld [vmem:[%s269 + $0x18] sm:$0xff]
        %v1542 = vld [vmem:[%s269 + $0x20] sm:$0xff]
        %v1543 = vld [vmem:[%s269 + $0x28] sm:$0xff]
        %v1544 = vld [vmem:[%s269 + $0x30] sm:$0xff]
        %v1545 = vld [vmem:[%s269 + $0x38] sm:$0xff]
        %v1546 = vld [vmem:[%s269 + $0x40] sm:$0xff]
        %v1547 = vld [vmem:[%s269 + $0x48] sm:$0xff]
        %v1548 = vld [vmem:[%s269 + $0x50] sm:$0xff]
        %v1549 = vld [vmem:[%s269 + $0x58] sm:$0xff]
        %v1550 = vld [vmem:[%s269 + $0x60] sm:$0xff]
        %v1551 = vld [vmem:[%s269 + $0x68] sm:$0xff]
        %v1552 = vld [vmem:[%s269 + $0x70] sm:$0xff]
        %v1553 = vld [vmem:[%s269 + $0x78] sm:$0xff]
        %v1554 = vmax.f32 %v1538, %v1542
        %v1555 = vmax.f32 %v1540, %v1544
        %v1556 = vmax.f32 %v1554, %v1546
        %v1557 = vmax.f32 %v1555, %v1548
        %v1558 = vmax.f32 %v1556, %v1550
        %v1559 = vmax.f32 %v1557, %v1552
        %v1560 = vmax.f32 %v1558, %v1559
        %v1561 = vrot.slane %v1560, 4
        %v1562 = vmax.f32 %v1560, %v1561
        %v1563 = vrot.slane %v1562, 2
        %v1564 = vmax.f32 %v1562, %v1563
        %v1565 = vrot.slane %v1564, 1
        %v1566 = vmax.f32 %v1564, %v1565
        %v1567 = vmax.f32 %v1539, %v1543
        %v1568 = vmax.f32 %v1541, %v1545
        %v1569 = vmax.f32 %v1567, %v1547
        %v1570 = vmax.f32 %v1568, %v1549
        %v1571 = vmax.f32 %v1569, %v1551
        %v1572 = vmax.f32 %v1570, %v1553
        %v1573 = vmax.f32 %v1571, %v1572
        %v1574 = vrot.slane %v1573, 4
        %v1575 = vmax.f32 %v1573, %v1574
        %v1576 = vrot.slane %v1575, 2
        %v1577 = vmax.f32 %v1575, %v1576
        %v1578 = vrot.slane %v1577, 1
        %v1579 = vmax.f32 %v1577, %v1578
        %v1580 = vadd.f32 %v1538, %v1540
        %v1581 = vadd.f32 %v1580, %v1542
        %v1582 = vadd.f32 %v1581, %v1544
        %v1583 = vadd.f32 %v1582, %v1546
        %v1584 = vadd.f32 %v1583, %v1548
        %v1585 = vadd.f32 %v1584, %v1550
        %v1586 = vadd.f32 %v1585, %v1552
        %v1587 = vrot.slane %v1586, 4
        %v1588 = vadd.f32 %v1586, %v1587
        %v1589 = vrot.slane %v1588, 2
        %v1590 = vadd.f32 %v1588, %v1589
        %v1591 = vrot.slane %v1590, 1
        %v1592 = vadd.f32 %v1590, %v1591
        %v1593 = vadd.f32 %v1539, %v1541
        %v1594 = vadd.f32 %v1593, %v1543
        %v1595 = vadd.f32 %v1594, %v1545
        %v1596 = vadd.f32 %v1595, %v1547
        %v1597 = vadd.f32 %v1596, %v1549
        %v1598 = vadd.f32 %v1597, %v1551
        %v1599 = vadd.f32 %v1598, %v1553
        %v1600 = vrot.slane %v1599, 4
        %v1601 = vadd.f32 %v1599, %v1600
        %v1602 = vrot.slane %v1601, 2
        %v1603 = vadd.f32 %v1601, %v1602
        %v1604 = vrot.slane %v1603, 1
        %v1605 = vadd.f32 %v1603, %v1604
        %v1606 = vmul.f32 %v1592, 0.015625
        %v1607 = vmul.f32 %v1605, 0.015625
        %1610 = vrot.lane.b32.xlu0 %v1566, 64
        %v1611 = vpop.permute.xlu0 %1610
        %1612 = vrot.lane.b32.xlu0 %v1579, 64
        %v1613 = vpop.permute.xlu0 %1612
        %v1614 = vsel %vm464, %v1611, %v1613
        %v1618 = vsel %vm464, 0.0, %v1611
        %v1619 = vsel %vm464, %v1613, 0.0
        %1622 = vrot.lane.b32.xlu0 %v1606, 64
        %v1623 = vpop.permute.xlu0 %1622
        %1624 = vrot.lane.b32.xlu0 %v1607, 64
        %v1625 = vpop.permute.xlu0 %1624
        %v1626 = vsel %vm464, %v1623, %v1625
        %v1630 = vsel %vm464, 0.0, %v1623
        %v1631 = vsel %vm464, %v1625, 0.0
        %v1632 = vadd.s32 %v351, 128
        %vm1633 = vcmp.lt.s32.totalorder %v351, 0
        %v1634 = vsub.s32 0, %v351
        %v1635 = vsel %vm1633, %v1634, %v351
        %v1636 = vshrl.u32 %v1635, 4
        %v1637 = vand.u32 %v1635, 15
        %v1638 = vsub.s32 0, %v1637
        %v1639 = vsel %vm1633, %v1638, %v1637
        %vm1640 = vcmp.lt.s32.totalorder %v1632, 0
        %v1641 = vsub.s32 0, %v1632
        %v1642 = vsel %vm1640, %v1641, %v1632
        %v1643 = vshrl.u32 %v1642, 4
        %v1644 = vand.u32 %v1642, 15
        %v1645 = vsub.s32 0, %v1644
        %v1646 = vsel %vm1640, %v1645, %v1644
        %vm1647 = vcmp.ne.s32.totalorder %v1639, 0
        %vm1648 = vcmp.ne.s32.totalorder %v1646, 0
        %vm1649 = vcmp.lt.s32.totalorder %v1639, 0
        %vm1650 = vcmp.lt.s32.totalorder %v1646, 0
        %vm1651 = vmand %vm1649, %vm1647
        %vm1652 = vmand %vm1650, %vm1648
        %v1653 = vadd.s32 %v1639, 16
        %v1654 = vadd.s32 %v1646, 16
        %v1655 = vsel %vm1651, %v1653, %v1639
        %v1656 = vsel %vm1652, %v1654, %v1646
        %v1657 = vadd.s32 %v1655, 4294967293
        %v1658 = vadd.s32 %v1656, 4294967293
        %vm1659 = vcmp.ge.s32.totalorder %v1657, 0
        %vm1660 = vcmp.ge.s32.totalorder %v1658, 0
        %vm1661 = vcmp.lt.s32.totalorder %v1657, 16
        %vm1662 = vcmp.lt.s32.totalorder %v1658, 16
        %vm1663 = vmand %vm1659, %vm1661
        %vm1664 = vmand %vm1660, %vm1662
        %s1665 = sld [smem:[#allocation6]]
        %v1666 = vstv %s1665
        %v1667 = vmul.f32 %v1666, %v1618
        %v1668 = vmul.f32 %v1666, %v1614
        %v1669 = vmul.f32 %v1666, %v1619
        %v1670 = vadd.f32 %v1667, 0.0
        %v1671 = vadd.f32 %v1668, 0.0
        %v1672 = vadd.f32 %v1669, 0.0
        %s1673 = sld [smem:[#allocation6 + $0x7]]
        %v1674 = vstv %s1673
        %v1675 = vmul.f32 %v1674, %v1618
        %v1676 = vmul.f32 %v1674, %v1614
        %v1677 = vmul.f32 %v1674, %v1619
        %v1678 = vadd.f32 %v1675, 0.0
        %v1679 = vadd.f32 %v1676, 0.0
        %v1680 = vadd.f32 %v1677, 0.0
        %s1681 = sld [smem:[#allocation6 + $0xe]]
        %v1682 = vstv %s1681
        %v1683 = vmul.f32 %v1682, %v1618
        %v1684 = vmul.f32 %v1682, %v1614
        %v1685 = vmul.f32 %v1682, %v1619
        %1689 = vrot.lane.b32.xlu0 %v1683, 96
        %v1690 = vpop.permute.xlu0 %1689
        %1691 = vrot.lane.b32.xlu0 %v1684, 96
        %v1692 = vpop.permute.xlu0 %1691
        %1693 = vrot.lane.b32.xlu0 %v1685, 96
        %v1694 = vpop.permute.xlu0 %1693
        %vm1695 = vcmask 785408
        %v1696 = vsel %vm1695, %v1690, %v1692
        %v1697 = vsel %vm1695, %v1692, %v1694
        %v1701 = vadd.f32 %v1670, %v1696
        %v1702 = vadd.f32 %v1671, %v1697
        %v1703 = vadd.f32 %v1672, %v1694
        %s1704 = sld [smem:[#allocation6 + $0x15]]
        %v1705 = vstv %s1704
        %v1706 = vmul.f32 %v1705, %v1618
        %v1707 = vmul.f32 %v1705, %v1614
        %v1708 = vmul.f32 %v1705, %v1619
        %1712 = vrot.lane.b32.xlu0 %v1706, 96
        %v1713 = vpop.permute.xlu0 %1712
        %1714 = vrot.lane.b32.xlu0 %v1707, 96
        %v1715 = vpop.permute.xlu0 %1714
        %1716 = vrot.lane.b32.xlu0 %v1708, 96
        %v1717 = vpop.permute.xlu0 %1716
        %v1718 = vsel %vm1695, %v1713, %v1715
        %v1719 = vsel %vm1695, %v1715, %v1717
        %v1723 = vadd.f32 %v1678, %v1718
        %v1724 = vadd.f32 %v1679, %v1719
        %v1725 = vadd.f32 %v1680, %v1717
        %s1726 = sld [smem:[#allocation6 + $0x1c]]
        %v1727 = vstv %s1726
        %v1728 = vmul.f32 %v1727, %v1618
        %v1729 = vmul.f32 %v1727, %v1614
        %v1730 = vmul.f32 %v1727, %v1619
        %1734 = vrot.lane.b32.xlu0 %v1728, 64
        %v1735 = vpop.permute.xlu0 %1734
        %1736 = vrot.lane.b32.xlu0 %v1729, 64
        %v1737 = vpop.permute.xlu0 %1736
        %1738 = vrot.lane.b32.xlu0 %v1730, 64
        %v1739 = vpop.permute.xlu0 %1738
        %v1740 = vsel %vm464, %v1735, %v1737
        %v1741 = vsel %vm464, %v1737, %v1739
        %v1745 = vadd.f32 %v1701, %v1740
        %v1746 = vadd.f32 %v1702, %v1741
        %v1747 = vadd.f32 %v1703, %v1739
        %s1748 = sld [smem:[#allocation6 + $0x23]]
        %v1749 = vstv %s1748
        %v1750 = vmul.f32 %v1749, %v1618
        %v1751 = vmul.f32 %v1749, %v1614
        %v1752 = vmul.f32 %v1749, %v1619
        %1756 = vrot.lane.b32.xlu0 %v1750, 64
        %v1757 = vpop.permute.xlu0 %1756
        %1758 = vrot.lane.b32.xlu0 %v1751, 64
        %v1759 = vpop.permute.xlu0 %1758
        %1760 = vrot.lane.b32.xlu0 %v1752, 64
        %v1761 = vpop.permute.xlu0 %1760
        %v1762 = vsel %vm464, %v1757, %v1759
        %v1763 = vsel %vm464, %v1759, %v1761
        %v1767 = vadd.f32 %v1723, %v1762
        %v1768 = vadd.f32 %v1724, %v1763
        %v1769 = vadd.f32 %v1725, %v1761
        %s1770 = sld [smem:[#allocation6 + $0x2a]]
        %v1771 = vstv %s1770
        %v1772 = vmul.f32 %v1771, %v1618
        %v1773 = vmul.f32 %v1771, %v1614
        %v1774 = vmul.f32 %v1771, %v1619
        %1778 = vrot.lane.b32.xlu0 %v1772, 32
        %v1779 = vpop.permute.xlu0 %1778
        %1780 = vrot.lane.b32.xlu0 %v1773, 32
        %v1781 = vpop.permute.xlu0 %1780
        %1782 = vrot.lane.b32.xlu0 %v1774, 32
        %v1783 = vpop.permute.xlu0 %1782
        %vm1784 = vcmask 261120
        %v1785 = vsel %vm1784, %v1779, %v1781
        %v1786 = vsel %vm1784, %v1781, %v1783
        %v1790 = vadd.f32 %v1745, %v1785
        %v1791 = vadd.f32 %v1746, %v1786
        %v1792 = vadd.f32 %v1747, %v1783
        %s1793 = sld [smem:[#allocation6 + $0x31]]
        %v1794 = vstv %s1793
        %v1795 = vmul.f32 %v1794, %v1630
        %v1796 = vmul.f32 %v1794, %v1626
        %v1797 = vmul.f32 %v1794, %v1631
        %v1798 = vadd.f32 %v1790, %v1795
        %v1799 = vadd.f32 %v1791, %v1796
        %v1800 = vadd.f32 %v1792, %v1797
        %s1801 = sld [smem:[#allocation6 + $0x38]]
        %v1802 = vstv %s1801
        %v1803 = vmul.f32 %v1802, %v1630
        %v1804 = vmul.f32 %v1802, %v1626
        %v1805 = vmul.f32 %v1802, %v1631
        %v1806 = vadd.f32 %v1767, %v1803
        %v1807 = vadd.f32 %v1768, %v1804
        %v1808 = vadd.f32 %v1769, %v1805
        %s1809 = sld [smem:[#allocation6 + $0x3f]]
        %v1810 = vstv %s1809
        %v1811 = vmul.f32 %v1810, %v1630
        %v1812 = vmul.f32 %v1810, %v1626
        %v1813 = vmul.f32 %v1810, %v1631
        %1817 = vrot.lane.b32.xlu0 %v1811, 96
        %v1818 = vpop.permute.xlu0 %1817
        %1819 = vrot.lane.b32.xlu0 %v1812, 96
        %v1820 = vpop.permute.xlu0 %1819
        %1821 = vrot.lane.b32.xlu0 %v1813, 96
        %v1822 = vpop.permute.xlu0 %1821
        %v1823 = vsel %vm1695, %v1818, %v1820
        %v1824 = vsel %vm1695, %v1820, %v1822
        %v1828 = vadd.f32 %v1798, %v1823
        %v1829 = vadd.f32 %v1799, %v1824
        %v1830 = vadd.f32 %v1800, %v1822
        %s1831 = sld [smem:[#allocation6 + $0x46]]
        %v1832 = vstv %s1831
        %v1833 = vmul.f32 %v1832, %v1630
        %v1834 = vmul.f32 %v1832, %v1626
        %v1835 = vmul.f32 %v1832, %v1631
        %1839 = vrot.lane.b32.xlu0 %v1833, 96
        %v1840 = vpop.permute.xlu0 %1839
        %1841 = vrot.lane.b32.xlu0 %v1834, 96
        %v1842 = vpop.permute.xlu0 %1841
        %1843 = vrot.lane.b32.xlu0 %v1835, 96
        %v1844 = vpop.permute.xlu0 %1843
        %v1845 = vsel %vm1695, %v1840, %v1842
        %v1846 = vsel %vm1695, %v1842, %v1844
        %v1850 = vadd.f32 %v1806, %v1845
        %v1851 = vadd.f32 %v1807, %v1846
        %v1852 = vadd.f32 %v1808, %v1844
        %s1853 = sld [smem:[#allocation6 + $0x4d]]
        %v1854 = vstv %s1853
        %v1855 = vmul.f32 %v1854, %v1630
        %v1856 = vmul.f32 %v1854, %v1626
        %v1857 = vmul.f32 %v1854, %v1631
        %1861 = vrot.lane.b32.xlu0 %v1855, 64
        %v1862 = vpop.permute.xlu0 %1861
        %1863 = vrot.lane.b32.xlu0 %v1856, 64
        %v1864 = vpop.permute.xlu0 %1863
        %1865 = vrot.lane.b32.xlu0 %v1857, 64
        %v1866 = vpop.permute.xlu0 %1865
        %v1867 = vsel %vm464, %v1862, %v1864
        %v1868 = vsel %vm464, %v1864, %v1866
        %v1872 = vadd.f32 %v1828, %v1867
        %v1873 = vadd.f32 %v1829, %v1868
        %v1874 = vadd.f32 %v1830, %v1866
        %s1875 = sld [smem:[#allocation6 + $0x54]]
        %v1876 = vstv %s1875
        %v1877 = vmul.f32 %v1876, %v1630
        %v1878 = vmul.f32 %v1876, %v1626
        %v1879 = vmul.f32 %v1876, %v1631
        %1883 = vrot.lane.b32.xlu0 %v1877, 64
        %v1884 = vpop.permute.xlu0 %1883
        %1885 = vrot.lane.b32.xlu0 %v1878, 64
        %v1886 = vpop.permute.xlu0 %1885
        %1887 = vrot.lane.b32.xlu0 %v1879, 64
        %v1888 = vpop.permute.xlu0 %1887
        %v1889 = vsel %vm464, %v1884, %v1886
        %v1890 = vsel %vm464, %v1886, %v1888
        %v1894 = vadd.f32 %v1850, %v1889
        %v1895 = vadd.f32 %v1851, %v1890
        %v1896 = vadd.f32 %v1852, %v1888
        %s1897 = sld [smem:[#allocation6 + $0x5b]]
        %v1898 = vstv %s1897
        %v1899 = vmul.f32 %v1898, %v1630
        %v1900 = vmul.f32 %v1898, %v1626
        %v1901 = vmul.f32 %v1898, %v1631
        %1905 = vrot.lane.b32.xlu0 %v1899, 32
        %v1906 = vpop.permute.xlu0 %1905
        %1907 = vrot.lane.b32.xlu0 %v1900, 32
        %v1908 = vpop.permute.xlu0 %1907
        %1909 = vrot.lane.b32.xlu0 %v1901, 32
        %v1910 = vpop.permute.xlu0 %1909
        %v1911 = vsel %vm1784, %v1906, %v1908
        %v1912 = vsel %vm1784, %v1908, %v1910
        %v1916 = vadd.f32 %v1872, %v1911
        %v1917 = vadd.f32 %v1873, %v1912
        %v1918 = vadd.f32 %v1874, %v1910
        %1922 = vrot.lane.b32.xlu0 %v1894, 112
        %v1923 = vpop.permute.xlu0 %1922
        %1924 = vrot.lane.b32.xlu0 %v1895, 112
        %v1925 = vpop.permute.xlu0 %1924
        %1926 = vrot.lane.b32.xlu0 %v1896, 112
        %v1927 = vpop.permute.xlu0 %1926
        %vm1928 = vcmask 916480
        %v1929 = vsel %vm1928, %v1923, %v1925
        %v1930 = vsel %vm1928, %v1925, %v1927
        %v1934 = vadd.f32 %v1916, %v1929
        %v1935 = vadd.f32 %v1917, %v1930
        %v1936 = vadd.f32 %v1918, %v1927
        %1940 = vrot.lane.b32.xlu0 %v1934, 115
        %v1941 = vpop.permute.xlu0 %1940
        %1942 = vrot.lane.b32.xlu0 %v1935, 115
        %v1943 = vpop.permute.xlu0 %1942
        %1944 = vrot.lane.b32.xlu0 %v1936, 115
        %v1945 = vpop.permute.xlu0 %1944
        %vm1946 = vcmask 941056
        %v1947 = vsel %vm1946, %v1941, %v1943
        %v1948 = vsel %vm1946, %v1943, %v1945
        %v1951 = vsel %vm1663, %v1947, 0.0
        %v1952 = vsel %vm1664, %v1948, 0.0
        %v1953 = vadd.f32 %v1951, 0.0
        %v1954 = vadd.f32 %v1952, 0.0
        %v1955 = vadd.s32 %v1655, 4294967294
        %v1956 = vadd.s32 %v1656, 4294967294
        %vm1957 = vcmp.ge.s32.totalorder %v1955, 0
        %vm1958 = vcmp.ge.s32.totalorder %v1956, 0
        %vm1959 = vcmp.lt.s32.totalorder %v1955, 16
        %vm1960 = vcmp.lt.s32.totalorder %v1956, 16
        %vm1961 = vmand %vm1957, %vm1959
        %vm1962 = vmand %vm1958, %vm1960
        %s1963 = sld [smem:[#allocation6 + $0x1]]
        %v1964 = vstv %s1963
        %v1965 = vmul.f32 %v1964, %v1618
        %v1966 = vmul.f32 %v1964, %v1614
        %v1967 = vmul.f32 %v1964, %v1619
        %v1968 = vadd.f32 %v1965, 0.0
        %v1969 = vadd.f32 %v1966, 0.0
        %v1970 = vadd.f32 %v1967, 0.0
        %s1971 = sld [smem:[#allocation6 + $0x8]]
        %v1972 = vstv %s1971
        %v1973 = vmul.f32 %v1972, %v1618
        %v1974 = vmul.f32 %v1972, %v1614
        %v1975 = vmul.f32 %v1972, %v1619
        %v1976 = vadd.f32 %v1973, 0.0
        %v1977 = vadd.f32 %v1974, 0.0
        %v1978 = vadd.f32 %v1975, 0.0
        %s1979 = sld [smem:[#allocation6 + $0xf]]
        %v1980 = vstv %s1979
        %v1981 = vmul.f32 %v1980, %v1618
        %v1982 = vmul.f32 %v1980, %v1614
        %v1983 = vmul.f32 %v1980, %v1619
        %1987 = vrot.lane.b32.xlu0 %v1981, 96
        %v1988 = vpop.permute.xlu0 %1987
        %1989 = vrot.lane.b32.xlu0 %v1982, 96
        %v1990 = vpop.permute.xlu0 %1989
        %1991 = vrot.lane.b32.xlu0 %v1983, 96
        %v1992 = vpop.permute.xlu0 %1991
        %v1993 = vsel %vm1695, %v1988, %v1990
        %v1994 = vsel %vm1695, %v1990, %v1992
        %v1998 = vadd.f32 %v1968, %v1993
        %v1999 = vadd.f32 %v1969, %v1994
        %v2000 = vadd.f32 %v1970, %v1992
        %s2001 = sld [smem:[#allocation6 + $0x16]]
        %v2002 = vstv %s2001
        %v2003 = vmul.f32 %v2002, %v1618
        %v2004 = vmul.f32 %v2002, %v1614
        %v2005 = vmul.f32 %v2002, %v1619
        %2009 = vrot.lane.b32.xlu0 %v2003, 96
        %v2010 = vpop.permute.xlu0 %2009
        %2011 = vrot.lane.b32.xlu0 %v2004, 96
        %v2012 = vpop.permute.xlu0 %2011
        %2013 = vrot.lane.b32.xlu0 %v2005, 96
        %v2014 = vpop.permute.xlu0 %2013
        %v2015 = vsel %vm1695, %v2010, %v2012
        %v2016 = vsel %vm1695, %v2012, %v2014
        %v2020 = vadd.f32 %v1976, %v2015
        %v2021 = vadd.f32 %v1977, %v2016
        %v2022 = vadd.f32 %v1978, %v2014
        %s2023 = sld [smem:[#allocation6 + $0x1d]]
        %v2024 = vstv %s2023
        %v2025 = vmul.f32 %v2024, %v1618
        %v2026 = vmul.f32 %v2024, %v1614
        %v2027 = vmul.f32 %v2024, %v1619
        %2031 = vrot.lane.b32.xlu0 %v2025, 64
        %v2032 = vpop.permute.xlu0 %2031
        %2033 = vrot.lane.b32.xlu0 %v2026, 64
        %v2034 = vpop.permute.xlu0 %2033
        %2035 = vrot.lane.b32.xlu0 %v2027, 64
        %v2036 = vpop.permute.xlu0 %2035
        %v2037 = vsel %vm464, %v2032, %v2034
        %v2038 = vsel %vm464, %v2034, %v2036
        %v2042 = vadd.f32 %v1998, %v2037
        %v2043 = vadd.f32 %v1999, %v2038
        %v2044 = vadd.f32 %v2000, %v2036
        %s2045 = sld [smem:[#allocation6 + $0x24]]
        %v2046 = vstv %s2045
        %v2047 = vmul.f32 %v2046, %v1618
        %v2048 = vmul.f32 %v2046, %v1614
        %v2049 = vmul.f32 %v2046, %v1619
        %2053 = vrot.lane.b32.xlu0 %v2047, 64
        %v2054 = vpop.permute.xlu0 %2053
        %2055 = vrot.lane.b32.xlu0 %v2048, 64
        %v2056 = vpop.permute.xlu0 %2055
        %2057 = vrot.lane.b32.xlu0 %v2049, 64
        %v2058 = vpop.permute.xlu0 %2057
        %v2059 = vsel %vm464, %v2054, %v2056
        %v2060 = vsel %vm464, %v2056, %v2058
        %v2064 = vadd.f32 %v2020, %v2059
        %v2065 = vadd.f32 %v2021, %v2060
        %v2066 = vadd.f32 %v2022, %v2058
        %s2067 = sld [smem:[#allocation6 + $0x2b]]
        %v2068 = vstv %s2067
        %v2069 = vmul.f32 %v2068, %v1618
        %v2070 = vmul.f32 %v2068, %v1614
        %v2071 = vmul.f32 %v2068, %v1619
        %2075 = vrot.lane.b32.xlu0 %v2069, 32
        %v2076 = vpop.permute.xlu0 %2075
        %2077 = vrot.lane.b32.xlu0 %v2070, 32
        %v2078 = vpop.permute.xlu0 %2077
        %2079 = vrot.lane.b32.xlu0 %v2071, 32
        %v2080 = vpop.permute.xlu0 %2079
        %v2081 = vsel %vm1784, %v2076, %v2078
        %v2082 = vsel %vm1784, %v2078, %v2080
        %v2086 = vadd.f32 %v2042, %v2081
        %v2087 = vadd.f32 %v2043, %v2082
        %v2088 = vadd.f32 %v2044, %v2080
        %s2089 = sld [smem:[#allocation6 + $0x32]]
        %v2090 = vstv %s2089
        %v2091 = vmul.f32 %v2090, %v1630
        %v2092 = vmul.f32 %v2090, %v1626
        %v2093 = vmul.f32 %v2090, %v1631
        %v2094 = vadd.f32 %v2086, %v2091
        %v2095 = vadd.f32 %v2087, %v2092
        %v2096 = vadd.f32 %v2088, %v2093
        %s2097 = sld [smem:[#allocation6 + $0x39]]
        %v2098 = vstv %s2097
        %v2099 = vmul.f32 %v2098, %v1630
        %v2100 = vmul.f32 %v2098, %v1626
        %v2101 = vmul.f32 %v2098, %v1631
        %v2102 = vadd.f32 %v2064, %v2099
        %v2103 = vadd.f32 %v2065, %v2100
        %v2104 = vadd.f32 %v2066, %v2101
        %s2105 = sld [smem:[#allocation6 + $0x40]]
        %v2106 = vstv %s2105
        %v2107 = vmul.f32 %v2106, %v1630
        %v2108 = vmul.f32 %v2106, %v1626
        %v2109 = vmul.f32 %v2106, %v1631
        %2113 = vrot.lane.b32.xlu0 %v2107, 96
        %v2114 = vpop.permute.xlu0 %2113
        %2115 = vrot.lane.b32.xlu0 %v2108, 96
        %v2116 = vpop.permute.xlu0 %2115
        %2117 = vrot.lane.b32.xlu0 %v2109, 96
        %v2118 = vpop.permute.xlu0 %2117
        %v2119 = vsel %vm1695, %v2114, %v2116
        %v2120 = vsel %vm1695, %v2116, %v2118
        %v2124 = vadd.f32 %v2094, %v2119
        %v2125 = vadd.f32 %v2095, %v2120
        %v2126 = vadd.f32 %v2096, %v2118
        %s2127 = sld [smem:[#allocation6 + $0x47]]
        %v2128 = vstv %s2127
        %v2129 = vmul.f32 %v2128, %v1630
        %v2130 = vmul.f32 %v2128, %v1626
        %v2131 = vmul.f32 %v2128, %v1631
        %2135 = vrot.lane.b32.xlu0 %v2129, 96
        %v2136 = vpop.permute.xlu0 %2135
        %2137 = vrot.lane.b32.xlu0 %v2130, 96
        %v2138 = vpop.permute.xlu0 %2137
        %2139 = vrot.lane.b32.xlu0 %v2131, 96
        %v2140 = vpop.permute.xlu0 %2139
        %v2141 = vsel %vm1695, %v2136, %v2138
        %v2142 = vsel %vm1695, %v2138, %v2140
        %v2146 = vadd.f32 %v2102, %v2141
        %v2147 = vadd.f32 %v2103, %v2142
        %v2148 = vadd.f32 %v2104, %v2140
        %s2149 = sld [smem:[#allocation6 + $0x4e]]
        %v2150 = vstv %s2149
        %v2151 = vmul.f32 %v2150, %v1630
        %v2152 = vmul.f32 %v2150, %v1626
        %v2153 = vmul.f32 %v2150, %v1631
        %2157 = vrot.lane.b32.xlu0 %v2151, 64
        %v2158 = vpop.permute.xlu0 %2157
        %2159 = vrot.lane.b32.xlu0 %v2152, 64
        %v2160 = vpop.permute.xlu0 %2159
        %2161 = vrot.lane.b32.xlu0 %v2153, 64
        %v2162 = vpop.permute.xlu0 %2161
        %v2163 = vsel %vm464, %v2158, %v2160
        %v2164 = vsel %vm464, %v2160, %v2162
        %v2168 = vadd.f32 %v2124, %v2163
        %v2169 = vadd.f32 %v2125, %v2164
        %v2170 = vadd.f32 %v2126, %v2162
        %s2171 = sld [smem:[#allocation6 + $0x55]]
        %v2172 = vstv %s2171
        %v2173 = vmul.f32 %v2172, %v1630
        %v2174 = vmul.f32 %v2172, %v1626
        %v2175 = vmul.f32 %v2172, %v1631
        %2179 = vrot.lane.b32.xlu0 %v2173, 64
        %v2180 = vpop.permute.xlu0 %2179
        %2181 = vrot.lane.b32.xlu0 %v2174, 64
        %v2182 = vpop.permute.xlu0 %2181
        %2183 = vrot.lane.b32.xlu0 %v2175, 64
        %v2184 = vpop.permute.xlu0 %2183
        %v2185 = vsel %vm464, %v2180, %v2182
        %v2186 = vsel %vm464, %v2182, %v2184
        %v2190 = vadd.f32 %v2146, %v2185
        %v2191 = vadd.f32 %v2147, %v2186
        %v2192 = vadd.f32 %v2148, %v2184
        %s2193 = sld [smem:[#allocation6 + $0x5c]]
        %v2194 = vstv %s2193
        %v2195 = vmul.f32 %v2194, %v1630
        %v2196 = vmul.f32 %v2194, %v1626
        %v2197 = vmul.f32 %v2194, %v1631
        %2201 = vrot.lane.b32.xlu0 %v2195, 32
        %v2202 = vpop.permute.xlu0 %2201
        %2203 = vrot.lane.b32.xlu0 %v2196, 32
        %v2204 = vpop.permute.xlu0 %2203
        %2205 = vrot.lane.b32.xlu0 %v2197, 32
        %v2206 = vpop.permute.xlu0 %2205
        %v2207 = vsel %vm1784, %v2202, %v2204
        %v2208 = vsel %vm1784, %v2204, %v2206
        %v2212 = vadd.f32 %v2168, %v2207
        %v2213 = vadd.f32 %v2169, %v2208
        %v2214 = vadd.f32 %v2170, %v2206
        %2218 = vrot.lane.b32.xlu0 %v2190, 112
        %v2219 = vpop.permute.xlu0 %2218
        %2220 = vrot.lane.b32.xlu0 %v2191, 112
        %v2221 = vpop.permute.xlu0 %2220
        %2222 = vrot.lane.b32.xlu0 %v2192, 112
        %v2223 = vpop.permute.xlu0 %2222
        %v2224 = vsel %vm1928, %v2219, %v2221
        %v2225 = vsel %vm1928, %v2221, %v2223
        %v2229 = vadd.f32 %v2212, %v2224
        %v2230 = vadd.f32 %v2213, %v2225
        %v2231 = vadd.f32 %v2214, %v2223
        %2235 = vrot.lane.b32.xlu0 %v2229, 114
        %v2236 = vpop.permute.xlu0 %2235
        %2237 = vrot.lane.b32.xlu0 %v2230, 114
        %v2238 = vpop.permute.xlu0 %2237
        %2239 = vrot.lane.b32.xlu0 %v2231, 114
        %v2240 = vpop.permute.xlu0 %2239
        %vm2241 = vcmask 932864
        %v2242 = vsel %vm2241, %v2236, %v2238
        %v2243 = vsel %vm2241, %v2238, %v2240
        %v2246 = vsel %vm1961, %v2242, 0.0
        %v2247 = vsel %vm1962, %v2243, 0.0
        %v2248 = vadd.f32 %v2246, 0.0
        %v2249 = vadd.f32 %v2247, 0.0
        %v2250 = vadd.s32 %v1655, 4294967295
        %v2251 = vadd.s32 %v1656, 4294967295
        %vm2252 = vcmp.ge.s32.totalorder %v2250, 0
        %vm2253 = vcmp.ge.s32.totalorder %v2251, 0
        %vm2254 = vcmp.lt.s32.totalorder %v2250, 16
        %vm2255 = vcmp.lt.s32.totalorder %v2251, 16
        %vm2256 = vmand %vm2252, %vm2254
        %vm2257 = vmand %vm2253, %vm2255
        %s2258 = sld [smem:[#allocation6 + $0x2]]
        %v2259 = vstv %s2258
        %v2260 = vmul.f32 %v2259, %v1618
        %v2261 = vmul.f32 %v2259, %v1614
        %v2262 = vmul.f32 %v2259, %v1619
        %v2263 = vadd.f32 %v2260, 0.0
        %v2264 = vadd.f32 %v2261, 0.0
        %v2265 = vadd.f32 %v2262, 0.0
        %s2266 = sld [smem:[#allocation6 + $0x9]]
        %v2267 = vstv %s2266
        %v2268 = vmul.f32 %v2267, %v1618
        %v2269 = vmul.f32 %v2267, %v1614
        %v2270 = vmul.f32 %v2267, %v1619
        %v2271 = vadd.f32 %v2268, 0.0
        %v2272 = vadd.f32 %v2269, 0.0
        %v2273 = vadd.f32 %v2270, 0.0
        %s2274 = sld [smem:[#allocation6 + $0x10]]
        %v2275 = vstv %s2274
        %v2276 = vmul.f32 %v2275, %v1618
        %v2277 = vmul.f32 %v2275, %v1614
        %v2278 = vmul.f32 %v2275, %v1619
        %2282 = vrot.lane.b32.xlu0 %v2276, 96
        %v2283 = vpop.permute.xlu0 %2282
        %2284 = vrot.lane.b32.xlu0 %v2277, 96
        %v2285 = vpop.permute.xlu0 %2284
        %2286 = vrot.lane.b32.xlu0 %v2278, 96
        %v2287 = vpop.permute.xlu0 %2286
        %v2288 = vsel %vm1695, %v2283, %v2285
        %v2289 = vsel %vm1695, %v2285, %v2287
        %v2293 = vadd.f32 %v2263, %v2288
        %v2294 = vadd.f32 %v2264, %v2289
        %v2295 = vadd.f32 %v2265, %v2287
        %s2296 = sld [smem:[#allocation6 + $0x17]]
        %v2297 = vstv %s2296
        %v2298 = vmul.f32 %v2297, %v1618
        %v2299 = vmul.f32 %v2297, %v1614
        %v2300 = vmul.f32 %v2297, %v1619
        %2304 = vrot.lane.b32.xlu0 %v2298, 96
        %v2305 = vpop.permute.xlu0 %2304
        %2306 = vrot.lane.b32.xlu0 %v2299, 96
        %v2307 = vpop.permute.xlu0 %2306
        %2308 = vrot.lane.b32.xlu0 %v2300, 96
        %v2309 = vpop.permute.xlu0 %2308
        %v2310 = vsel %vm1695, %v2305, %v2307
        %v2311 = vsel %vm1695, %v2307, %v2309
        %v2315 = vadd.f32 %v2271, %v2310
        %v2316 = vadd.f32 %v2272, %v2311
        %v2317 = vadd.f32 %v2273, %v2309
        %s2318 = sld [smem:[#allocation6 + $0x1e]]
        %v2319 = vstv %s2318
        %v2320 = vmul.f32 %v2319, %v1618
        %v2321 = vmul.f32 %v2319, %v1614
        %v2322 = vmul.f32 %v2319, %v1619
        %2326 = vrot.lane.b32.xlu0 %v2320, 64
        %v2327 = vpop.permute.xlu0 %2326
        %2328 = vrot.lane.b32.xlu0 %v2321, 64
        %v2329 = vpop.permute.xlu0 %2328
        %2330 = vrot.lane.b32.xlu0 %v2322, 64
        %v2331 = vpop.permute.xlu0 %2330
        %v2332 = vsel %vm464, %v2327, %v2329
        %v2333 = vsel %vm464, %v2329, %v2331
        %v2337 = vadd.f32 %v2293, %v2332
        %v2338 = vadd.f32 %v2294, %v2333
        %v2339 = vadd.f32 %v2295, %v2331
        %s2340 = sld [smem:[#allocation6 + $0x25]]
        %v2341 = vstv %s2340
        %v2342 = vmul.f32 %v2341, %v1618
        %v2343 = vmul.f32 %v2341, %v1614
        %v2344 = vmul.f32 %v2341, %v1619
        %2348 = vrot.lane.b32.xlu0 %v2342, 64
        %v2349 = vpop.permute.xlu0 %2348
        %2350 = vrot.lane.b32.xlu0 %v2343, 64
        %v2351 = vpop.permute.xlu0 %2350
        %2352 = vrot.lane.b32.xlu0 %v2344, 64
        %v2353 = vpop.permute.xlu0 %2352
        %v2354 = vsel %vm464, %v2349, %v2351
        %v2355 = vsel %vm464, %v2351, %v2353
        %v2359 = vadd.f32 %v2315, %v2354
        %v2360 = vadd.f32 %v2316, %v2355
        %v2361 = vadd.f32 %v2317, %v2353
        %s2362 = sld [smem:[#allocation6 + $0x2c]]
        %v2363 = vstv %s2362
        %v2364 = vmul.f32 %v2363, %v1618
        %v2365 = vmul.f32 %v2363, %v1614
        %v2366 = vmul.f32 %v2363, %v1619
        %2370 = vrot.lane.b32.xlu0 %v2364, 32
        %v2371 = vpop.permute.xlu0 %2370
        %2372 = vrot.lane.b32.xlu0 %v2365, 32
        %v2373 = vpop.permute.xlu0 %2372
        %2374 = vrot.lane.b32.xlu0 %v2366, 32
        %v2375 = vpop.permute.xlu0 %2374
        %v2376 = vsel %vm1784, %v2371, %v2373
        %v2377 = vsel %vm1784, %v2373, %v2375
        %v2381 = vadd.f32 %v2337, %v2376
        %v2382 = vadd.f32 %v2338, %v2377
        %v2383 = vadd.f32 %v2339, %v2375
        %s2384 = sld [smem:[#allocation6 + $0x33]]
        %v2385 = vstv %s2384
        %v2386 = vmul.f32 %v2385, %v1630
        %v2387 = vmul.f32 %v2385, %v1626
        %v2388 = vmul.f32 %v2385, %v1631
        %v2389 = vadd.f32 %v2381, %v2386
        %v2390 = vadd.f32 %v2382, %v2387
        %v2391 = vadd.f32 %v2383, %v2388
        %s2392 = sld [smem:[#allocation6 + $0x3a]]
        %v2393 = vstv %s2392
        %v2394 = vmul.f32 %v2393, %v1630
        %v2395 = vmul.f32 %v2393, %v1626
        %v2396 = vmul.f32 %v2393, %v1631
        %v2397 = vadd.f32 %v2359, %v2394
        %v2398 = vadd.f32 %v2360, %v2395
        %v2399 = vadd.f32 %v2361, %v2396
        %s2400 = sld [smem:[#allocation6 + $0x41]]
        %v2401 = vstv %s2400
        %v2402 = vmul.f32 %v2401, %v1630
        %v2403 = vmul.f32 %v2401, %v1626
        %v2404 = vmul.f32 %v2401, %v1631
        %2408 = vrot.lane.b32.xlu0 %v2402, 96
        %v2409 = vpop.permute.xlu0 %2408
        %2410 = vrot.lane.b32.xlu0 %v2403, 96
        %v2411 = vpop.permute.xlu0 %2410
        %2412 = vrot.lane.b32.xlu0 %v2404, 96
        %v2413 = vpop.permute.xlu0 %2412
        %v2414 = vsel %vm1695, %v2409, %v2411
        %v2415 = vsel %vm1695, %v2411, %v2413
        %v2419 = vadd.f32 %v2389, %v2414
        %v2420 = vadd.f32 %v2390, %v2415
        %v2421 = vadd.f32 %v2391, %v2413
        %s2422 = sld [smem:[#allocation6 + $0x48]]
        %v2423 = vstv %s2422
        %v2424 = vmul.f32 %v2423, %v1630
        %v2425 = vmul.f32 %v2423, %v1626
        %v2426 = vmul.f32 %v2423, %v1631
        %2430 = vrot.lane.b32.xlu0 %v2424, 96
        %v2431 = vpop.permute.xlu0 %2430
        %2432 = vrot.lane.b32.xlu0 %v2425, 96
        %v2433 = vpop.permute.xlu0 %2432
        %2434 = vrot.lane.b32.xlu0 %v2426, 96
        %v2435 = vpop.permute.xlu0 %2434
        %v2436 = vsel %vm1695, %v2431, %v2433
        %v2437 = vsel %vm1695, %v2433, %v2435
        %v2441 = vadd.f32 %v2397, %v2436
        %v2442 = vadd.f32 %v2398, %v2437
        %v2443 = vadd.f32 %v2399, %v2435
        %s2444 = sld [smem:[#allocation6 + $0x4f]]
        %v2445 = vstv %s2444
        %v2446 = vmul.f32 %v2445, %v1630
        %v2447 = vmul.f32 %v2445, %v1626
        %v2448 = vmul.f32 %v2445, %v1631
        %2452 = vrot.lane.b32.xlu0 %v2446, 64
        %v2453 = vpop.permute.xlu0 %2452
        %2454 = vrot.lane.b32.xlu0 %v2447, 64
        %v2455 = vpop.permute.xlu0 %2454
        %2456 = vrot.lane.b32.xlu0 %v2448, 64
        %v2457 = vpop.permute.xlu0 %2456
        %v2458 = vsel %vm464, %v2453, %v2455
        %v2459 = vsel %vm464, %v2455, %v2457
        %v2463 = vadd.f32 %v2419, %v2458
        %v2464 = vadd.f32 %v2420, %v2459
        %v2465 = vadd.f32 %v2421, %v2457
        %s2466 = sld [smem:[#allocation6 + $0x56]]
        %v2467 = vstv %s2466
        %v2468 = vmul.f32 %v2467, %v1630
        %v2469 = vmul.f32 %v2467, %v1626
        %v2470 = vmul.f32 %v2467, %v1631
        %2474 = vrot.lane.b32.xlu0 %v2468, 64
        %v2475 = vpop.permute.xlu0 %2474
        %2476 = vrot.lane.b32.xlu0 %v2469, 64
        %v2477 = vpop.permute.xlu0 %2476
        %2478 = vrot.lane.b32.xlu0 %v2470, 64
        %v2479 = vpop.permute.xlu0 %2478
        %v2480 = vsel %vm464, %v2475, %v2477
        %v2481 = vsel %vm464, %v2477, %v2479
        %v2485 = vadd.f32 %v2441, %v2480
        %v2486 = vadd.f32 %v2442, %v2481
        %v2487 = vadd.f32 %v2443, %v2479
        %s2488 = sld [smem:[#allocation6 + $0x5d]]
        %v2489 = vstv %s2488
        %v2490 = vmul.f32 %v2489, %v1630
        %v2491 = vmul.f32 %v2489, %v1626
        %v2492 = vmul.f32 %v2489, %v1631
        %2496 = vrot.lane.b32.xlu0 %v2490, 32
        %v2497 = vpop.permute.xlu0 %2496
        %2498 = vrot.lane.b32.xlu0 %v2491, 32
        %v2499 = vpop.permute.xlu0 %2498
        %2500 = vrot.lane.b32.xlu0 %v2492, 32
        %v2501 = vpop.permute.xlu0 %2500
        %v2502 = vsel %vm1784, %v2497, %v2499
        %v2503 = vsel %vm1784, %v2499, %v2501
        %v2507 = vadd.f32 %v2463, %v2502
        %v2508 = vadd.f32 %v2464, %v2503
        %v2509 = vadd.f32 %v2465, %v2501
        %2513 = vrot.lane.b32.xlu0 %v2485, 112
        %v2514 = vpop.permute.xlu0 %2513
        %2515 = vrot.lane.b32.xlu0 %v2486, 112
        %v2516 = vpop.permute.xlu0 %2515
        %2517 = vrot.lane.b32.xlu0 %v2487, 112
        %v2518 = vpop.permute.xlu0 %2517
        %v2519 = vsel %vm1928, %v2514, %v2516
        %v2520 = vsel %vm1928, %v2516, %v2518
        %v2524 = vadd.f32 %v2507, %v2519
        %v2525 = vadd.f32 %v2508, %v2520
        %v2526 = vadd.f32 %v2509, %v2518
        %2530 = vrot.lane.b32.xlu0 %v2524, 113
        %v2531 = vpop.permute.xlu0 %2530
        %2532 = vrot.lane.b32.xlu0 %v2525, 113
        %v2533 = vpop.permute.xlu0 %2532
        %2534 = vrot.lane.b32.xlu0 %v2526, 113
        %v2535 = vpop.permute.xlu0 %2534
        %vm2536 = vcmask 924672
        %v2537 = vsel %vm2536, %v2531, %v2533
        %v2538 = vsel %vm2536, %v2533, %v2535
        %v2541 = vsel %vm2256, %v2537, 0.0
        %v2542 = vsel %vm2257, %v2538, 0.0
        %v2543 = vadd.f32 %v1953, %v2541
        %v2544 = vadd.f32 %v1954, %v2542
        %vm2545 = vcmp.ge.s32.totalorder %v1655, 0
        %vm2546 = vcmp.ge.s32.totalorder %v1656, 0
        %vm2547 = vcmp.lt.s32.totalorder %v1655, 16
        %vm2548 = vcmp.lt.s32.totalorder %v1656, 16
        %vm2549 = vmand %vm2545, %vm2547
        %vm2550 = vmand %vm2546, %vm2548
        %s2551 = sld [smem:[#allocation6 + $0x3]]
        %v2552 = vstv %s2551
        %v2553 = vmul.f32 %v2552, %v1618
        %v2554 = vmul.f32 %v2552, %v1614
        %v2555 = vmul.f32 %v2552, %v1619
        %v2556 = vadd.f32 %v2553, 0.0
        %v2557 = vadd.f32 %v2554, 0.0
        %v2558 = vadd.f32 %v2555, 0.0
        %s2559 = sld [smem:[#allocation6 + $0xa]]
        %v2560 = vstv %s2559
        %v2561 = vmul.f32 %v2560, %v1618
        %v2562 = vmul.f32 %v2560, %v1614
        %v2563 = vmul.f32 %v2560, %v1619
        %v2564 = vadd.f32 %v2561, 0.0
        %v2565 = vadd.f32 %v2562, 0.0
        %v2566 = vadd.f32 %v2563, 0.0
        %s2567 = sld [smem:[#allocation6 + $0x11]]
        %v2568 = vstv %s2567
        %v2569 = vmul.f32 %v2568, %v1618
        %v2570 = vmul.f32 %v2568, %v1614
        %v2571 = vmul.f32 %v2568, %v1619
        %2575 = vrot.lane.b32.xlu0 %v2569, 96
        %v2576 = vpop.permute.xlu0 %2575
        %2577 = vrot.lane.b32.xlu0 %v2570, 96
        %v2578 = vpop.permute.xlu0 %2577
        %2579 = vrot.lane.b32.xlu0 %v2571, 96
        %v2580 = vpop.permute.xlu0 %2579
        %v2581 = vsel %vm1695, %v2576, %v2578
        %v2582 = vsel %vm1695, %v2578, %v2580
        %v2586 = vadd.f32 %v2556, %v2581
        %v2587 = vadd.f32 %v2557, %v2582
        %v2588 = vadd.f32 %v2558, %v2580
        %s2589 = sld [smem:[#allocation6 + $0x18]]
        %v2590 = vstv %s2589
        %v2591 = vmul.f32 %v2590, %v1618
        %v2592 = vmul.f32 %v2590, %v1614
        %v2593 = vmul.f32 %v2590, %v1619
        %2597 = vrot.lane.b32.xlu0 %v2591, 96
        %v2598 = vpop.permute.xlu0 %2597
        %2599 = vrot.lane.b32.xlu0 %v2592, 96
        %v2600 = vpop.permute.xlu0 %2599
        %2601 = vrot.lane.b32.xlu0 %v2593, 96
        %v2602 = vpop.permute.xlu0 %2601
        %v2603 = vsel %vm1695, %v2598, %v2600
        %v2604 = vsel %vm1695, %v2600, %v2602
        %v2608 = vadd.f32 %v2564, %v2603
        %v2609 = vadd.f32 %v2565, %v2604
        %v2610 = vadd.f32 %v2566, %v2602
        %s2611 = sld [smem:[#allocation6 + $0x1f]]
        %v2612 = vstv %s2611
        %v2613 = vmul.f32 %v2612, %v1618
        %v2614 = vmul.f32 %v2612, %v1614
        %v2615 = vmul.f32 %v2612, %v1619
        %2619 = vrot.lane.b32.xlu0 %v2613, 64
        %v2620 = vpop.permute.xlu0 %2619
        %2621 = vrot.lane.b32.xlu0 %v2614, 64
        %v2622 = vpop.permute.xlu0 %2621
        %2623 = vrot.lane.b32.xlu0 %v2615, 64
        %v2624 = vpop.permute.xlu0 %2623
        %v2625 = vsel %vm464, %v2620, %v2622
        %v2626 = vsel %vm464, %v2622, %v2624
        %v2630 = vadd.f32 %v2586, %v2625
        %v2631 = vadd.f32 %v2587, %v2626
        %v2632 = vadd.f32 %v2588, %v2624
        %s2633 = sld [smem:[#allocation6 + $0x26]]
        %v2634 = vstv %s2633
        %v2635 = vmul.f32 %v2634, %v1618
        %v2636 = vmul.f32 %v2634, %v1614
        %v2637 = vmul.f32 %v2634, %v1619
        %2641 = vrot.lane.b32.xlu0 %v2635, 64
        %v2642 = vpop.permute.xlu0 %2641
        %2643 = vrot.lane.b32.xlu0 %v2636, 64
        %v2644 = vpop.permute.xlu0 %2643
        %2645 = vrot.lane.b32.xlu0 %v2637, 64
        %v2646 = vpop.permute.xlu0 %2645
        %v2647 = vsel %vm464, %v2642, %v2644
        %v2648 = vsel %vm464, %v2644, %v2646
        %v2652 = vadd.f32 %v2608, %v2647
        %v2653 = vadd.f32 %v2609, %v2648
        %v2654 = vadd.f32 %v2610, %v2646
        %s2655 = sld [smem:[#allocation6 + $0x2d]]
        %v2656 = vstv %s2655
        %v2657 = vmul.f32 %v2656, %v1618
        %v2658 = vmul.f32 %v2656, %v1614
        %v2659 = vmul.f32 %v2656, %v1619
        %2663 = vrot.lane.b32.xlu0 %v2657, 32
        %v2664 = vpop.permute.xlu0 %2663
        %2665 = vrot.lane.b32.xlu0 %v2658, 32
        %v2666 = vpop.permute.xlu0 %2665
        %2667 = vrot.lane.b32.xlu0 %v2659, 32
        %v2668 = vpop.permute.xlu0 %2667
        %v2669 = vsel %vm1784, %v2664, %v2666
        %v2670 = vsel %vm1784, %v2666, %v2668
        %v2674 = vadd.f32 %v2630, %v2669
        %v2675 = vadd.f32 %v2631, %v2670
        %v2676 = vadd.f32 %v2632, %v2668
        %s2677 = sld [smem:[#allocation6 + $0x34]]
        %v2678 = vstv %s2677
        %v2679 = vmul.f32 %v2678, %v1630
        %v2680 = vmul.f32 %v2678, %v1626
        %v2681 = vmul.f32 %v2678, %v1631
        %v2682 = vadd.f32 %v2674, %v2679
        %v2683 = vadd.f32 %v2675, %v2680
        %v2684 = vadd.f32 %v2676, %v2681
        %s2685 = sld [smem:[#allocation6 + $0x3b]]
        %v2686 = vstv %s2685
        %v2687 = vmul.f32 %v2686, %v1630
        %v2688 = vmul.f32 %v2686, %v1626
        %v2689 = vmul.f32 %v2686, %v1631
        %v2690 = vadd.f32 %v2652, %v2687
        %v2691 = vadd.f32 %v2653, %v2688
        %v2692 = vadd.f32 %v2654, %v2689
        %s2693 = sld [smem:[#allocation6 + $0x42]]
        %v2694 = vstv %s2693
        %v2695 = vmul.f32 %v2694, %v1630
        %v2696 = vmul.f32 %v2694, %v1626
        %v2697 = vmul.f32 %v2694, %v1631
        %2701 = vrot.lane.b32.xlu0 %v2695, 96
        %v2702 = vpop.permute.xlu0 %2701
        %2703 = vrot.lane.b32.xlu0 %v2696, 96
        %v2704 = vpop.permute.xlu0 %2703
        %2705 = vrot.lane.b32.xlu0 %v2697, 96
        %v2706 = vpop.permute.xlu0 %2705
        %v2707 = vsel %vm1695, %v2702, %v2704
        %v2708 = vsel %vm1695, %v2704, %v2706
        %v2712 = vadd.f32 %v2682, %v2707
        %v2713 = vadd.f32 %v2683, %v2708
        %v2714 = vadd.f32 %v2684, %v2706
        %s2715 = sld [smem:[#allocation6 + $0x49]]
        %v2716 = vstv %s2715
        %v2717 = vmul.f32 %v2716, %v1630
        %v2718 = vmul.f32 %v2716, %v1626
        %v2719 = vmul.f32 %v2716, %v1631
        %2723 = vrot.lane.b32.xlu0 %v2717, 96
        %v2724 = vpop.permute.xlu0 %2723
        %2725 = vrot.lane.b32.xlu0 %v2718, 96
        %v2726 = vpop.permute.xlu0 %2725
        %2727 = vrot.lane.b32.xlu0 %v2719, 96
        %v2728 = vpop.permute.xlu0 %2727
        %v2729 = vsel %vm1695, %v2724, %v2726
        %v2730 = vsel %vm1695, %v2726, %v2728
        %v2734 = vadd.f32 %v2690, %v2729
        %v2735 = vadd.f32 %v2691, %v2730
        %v2736 = vadd.f32 %v2692, %v2728
        %s2737 = sld [smem:[#allocation6 + $0x50]]
        %v2738 = vstv %s2737
        %v2739 = vmul.f32 %v2738, %v1630
        %v2740 = vmul.f32 %v2738, %v1626
        %v2741 = vmul.f32 %v2738, %v1631
        %2745 = vrot.lane.b32.xlu0 %v2739, 64
        %v2746 = vpop.permute.xlu0 %2745
        %2747 = vrot.lane.b32.xlu0 %v2740, 64
        %v2748 = vpop.permute.xlu0 %2747
        %2749 = vrot.lane.b32.xlu0 %v2741, 64
        %v2750 = vpop.permute.xlu0 %2749
        %v2751 = vsel %vm464, %v2746, %v2748
        %v2752 = vsel %vm464, %v2748, %v2750
        %v2756 = vadd.f32 %v2712, %v2751
        %v2757 = vadd.f32 %v2713, %v2752
        %v2758 = vadd.f32 %v2714, %v2750
        %s2759 = sld [smem:[#allocation6 + $0x57]]
        %v2760 = vstv %s2759
        %v2761 = vmul.f32 %v2760, %v1630
        %v2762 = vmul.f32 %v2760, %v1626
        %v2763 = vmul.f32 %v2760, %v1631
        %2767 = vrot.lane.b32.xlu0 %v2761, 64
        %v2768 = vpop.permute.xlu0 %2767
        %2769 = vrot.lane.b32.xlu0 %v2762, 64
        %v2770 = vpop.permute.xlu0 %2769
        %2771 = vrot.lane.b32.xlu0 %v2763, 64
        %v2772 = vpop.permute.xlu0 %2771
        %v2773 = vsel %vm464, %v2768, %v2770
        %v2774 = vsel %vm464, %v2770, %v2772
        %v2778 = vadd.f32 %v2734, %v2773
        %v2779 = vadd.f32 %v2735, %v2774
        %v2780 = vadd.f32 %v2736, %v2772
        %s2781 = sld [smem:[#allocation6 + $0x5e]]
        %v2782 = vstv %s2781
        %v2783 = vmul.f32 %v2782, %v1630
        %v2784 = vmul.f32 %v2782, %v1626
        %v2785 = vmul.f32 %v2782, %v1631
        %2789 = vrot.lane.b32.xlu0 %v2783, 32
        %v2790 = vpop.permute.xlu0 %2789
        %2791 = vrot.lane.b32.xlu0 %v2784, 32
        %v2792 = vpop.permute.xlu0 %2791
        %2793 = vrot.lane.b32.xlu0 %v2785, 32
        %v2794 = vpop.permute.xlu0 %2793
        %v2795 = vsel %vm1784, %v2790, %v2792
        %v2796 = vsel %vm1784, %v2792, %v2794
        %v2800 = vadd.f32 %v2756, %v2795
        %v2801 = vadd.f32 %v2757, %v2796
        %v2802 = vadd.f32 %v2758, %v2794
        %2806 = vrot.lane.b32.xlu0 %v2778, 112
        %v2807 = vpop.permute.xlu0 %2806
        %2808 = vrot.lane.b32.xlu0 %v2779, 112
        %v2809 = vpop.permute.xlu0 %2808
        %2810 = vrot.lane.b32.xlu0 %v2780, 112
        %v2811 = vpop.permute.xlu0 %2810
        %v2812 = vsel %vm1928, %v2807, %v2809
        %v2813 = vsel %vm1928, %v2809, %v2811
        %v2817 = vadd.f32 %v2800, %v2812
        %v2818 = vadd.f32 %v2801, %v2813
        %v2819 = vadd.f32 %v2802, %v2811
        %2823 = vrot.lane.b32.xlu0 %v2817, 112
        %v2824 = vpop.permute.xlu0 %2823
        %2825 = vrot.lane.b32.xlu0 %v2818, 112
        %v2826 = vpop.permute.xlu0 %2825
        %2827 = vrot.lane.b32.xlu0 %v2819, 112
        %v2828 = vpop.permute.xlu0 %2827
        %v2829 = vsel %vm1928, %v2824, %v2826
        %v2830 = vsel %vm1928, %v2826, %v2828
        %v2833 = vsel %vm2549, %v2829, 0.0
        %v2834 = vsel %vm2550, %v2830, 0.0
        %v2835 = vadd.f32 %v2248, %v2833
        %v2836 = vadd.f32 %v2249, %v2834
        %v2837 = vadd.s32 %v1655, 1
        %v2838 = vadd.s32 %v1656, 1
        %vm2839 = vcmp.ge.s32.totalorder %v2837, 0
        %vm2840 = vcmp.ge.s32.totalorder %v2838, 0
        %vm2841 = vcmp.lt.s32.totalorder %v2837, 16
        %vm2842 = vcmp.lt.s32.totalorder %v2838, 16
        %vm2843 = vmand %vm2839, %vm2841
        %vm2844 = vmand %vm2840, %vm2842
        %s2845 = sld [smem:[#allocation6 + $0x4]]
        %v2846 = vstv %s2845
        %v2847 = vmul.f32 %v2846, %v1618
        %v2848 = vmul.f32 %v2846, %v1614
        %v2849 = vmul.f32 %v2846, %v1619
        %v2850 = vadd.f32 %v2847, 0.0
        %v2851 = vadd.f32 %v2848, 0.0
        %v2852 = vadd.f32 %v2849, 0.0
        %s2853 = sld [smem:[#allocation6 + $0xb]]
        %v2854 = vstv %s2853
        %v2855 = vmul.f32 %v2854, %v1618
        %v2856 = vmul.f32 %v2854, %v1614
        %v2857 = vmul.f32 %v2854, %v1619
        %v2858 = vadd.f32 %v2855, 0.0
        %v2859 = vadd.f32 %v2856, 0.0
        %v2860 = vadd.f32 %v2857, 0.0
        %s2861 = sld [smem:[#allocation6 + $0x12]]
        %v2862 = vstv %s2861
        %v2863 = vmul.f32 %v2862, %v1618
        %v2864 = vmul.f32 %v2862, %v1614
        %v2865 = vmul.f32 %v2862, %v1619
        %2869 = vrot.lane.b32.xlu0 %v2863, 96
        %v2870 = vpop.permute.xlu0 %2869
        %2871 = vrot.lane.b32.xlu0 %v2864, 96
        %v2872 = vpop.permute.xlu0 %2871
        %2873 = vrot.lane.b32.xlu0 %v2865, 96
        %v2874 = vpop.permute.xlu0 %2873
        %v2875 = vsel %vm1695, %v2870, %v2872
        %v2876 = vsel %vm1695, %v2872, %v2874
        %v2880 = vadd.f32 %v2850, %v2875
        %v2881 = vadd.f32 %v2851, %v2876
        %v2882 = vadd.f32 %v2852, %v2874
        %s2883 = sld [smem:[#allocation6 + $0x19]]
        %v2884 = vstv %s2883
        %v2885 = vmul.f32 %v2884, %v1618
        %v2886 = vmul.f32 %v2884, %v1614
        %v2887 = vmul.f32 %v2884, %v1619
        %2891 = vrot.lane.b32.xlu0 %v2885, 96
        %v2892 = vpop.permute.xlu0 %2891
        %2893 = vrot.lane.b32.xlu0 %v2886, 96
        %v2894 = vpop.permute.xlu0 %2893
        %2895 = vrot.lane.b32.xlu0 %v2887, 96
        %v2896 = vpop.permute.xlu0 %2895
        %v2897 = vsel %vm1695, %v2892, %v2894
        %v2898 = vsel %vm1695, %v2894, %v2896
        %v2902 = vadd.f32 %v2858, %v2897
        %v2903 = vadd.f32 %v2859, %v2898
        %v2904 = vadd.f32 %v2860, %v2896
        %s2905 = sld [smem:[#allocation6 + $0x20]]
        %v2906 = vstv %s2905
        %v2907 = vmul.f32 %v2906, %v1618
        %v2908 = vmul.f32 %v2906, %v1614
        %v2909 = vmul.f32 %v2906, %v1619
        %2913 = vrot.lane.b32.xlu0 %v2907, 64
        %v2914 = vpop.permute.xlu0 %2913
        %2915 = vrot.lane.b32.xlu0 %v2908, 64
        %v2916 = vpop.permute.xlu0 %2915
        %2917 = vrot.lane.b32.xlu0 %v2909, 64
        %v2918 = vpop.permute.xlu0 %2917
        %v2919 = vsel %vm464, %v2914, %v2916
        %v2920 = vsel %vm464, %v2916, %v2918
        %v2924 = vadd.f32 %v2880, %v2919
        %v2925 = vadd.f32 %v2881, %v2920
        %v2926 = vadd.f32 %v2882, %v2918
        %s2927 = sld [smem:[#allocation6 + $0x27]]
        %v2928 = vstv %s2927
        %v2929 = vmul.f32 %v2928, %v1618
        %v2930 = vmul.f32 %v2928, %v1614
        %v2931 = vmul.f32 %v2928, %v1619
        %2935 = vrot.lane.b32.xlu0 %v2929, 64
        %v2936 = vpop.permute.xlu0 %2935
        %2937 = vrot.lane.b32.xlu0 %v2930, 64
        %v2938 = vpop.permute.xlu0 %2937
        %2939 = vrot.lane.b32.xlu0 %v2931, 64
        %v2940 = vpop.permute.xlu0 %2939
        %v2941 = vsel %vm464, %v2936, %v2938
        %v2942 = vsel %vm464, %v2938, %v2940
        %v2946 = vadd.f32 %v2902, %v2941
        %v2947 = vadd.f32 %v2903, %v2942
        %v2948 = vadd.f32 %v2904, %v2940
        %s2949 = sld [smem:[#allocation6 + $0x2e]]
        %v2950 = vstv %s2949
        %v2951 = vmul.f32 %v2950, %v1618
        %v2952 = vmul.f32 %v2950, %v1614
        %v2953 = vmul.f32 %v2950, %v1619
        %2957 = vrot.lane.b32.xlu0 %v2951, 32
        %v2958 = vpop.permute.xlu0 %2957
        %2959 = vrot.lane.b32.xlu0 %v2952, 32
        %v2960 = vpop.permute.xlu0 %2959
        %2961 = vrot.lane.b32.xlu0 %v2953, 32
        %v2962 = vpop.permute.xlu0 %2961
        %v2963 = vsel %vm1784, %v2958, %v2960
        %v2964 = vsel %vm1784, %v2960, %v2962
        %v2968 = vadd.f32 %v2924, %v2963
        %v2969 = vadd.f32 %v2925, %v2964
        %v2970 = vadd.f32 %v2926, %v2962
        %s2971 = sld [smem:[#allocation6 + $0x35]]
        %v2972 = vstv %s2971
        %v2973 = vmul.f32 %v2972, %v1630
        %v2974 = vmul.f32 %v2972, %v1626
        %v2975 = vmul.f32 %v2972, %v1631
        %v2976 = vadd.f32 %v2968, %v2973
        %v2977 = vadd.f32 %v2969, %v2974
        %v2978 = vadd.f32 %v2970, %v2975
        %s2979 = sld [smem:[#allocation6 + $0x3c]]
        %v2980 = vstv %s2979
        %v2981 = vmul.f32 %v2980, %v1630
        %v2982 = vmul.f32 %v2980, %v1626
        %v2983 = vmul.f32 %v2980, %v1631
        %v2984 = vadd.f32 %v2946, %v2981
        %v2985 = vadd.f32 %v2947, %v2982
        %v2986 = vadd.f32 %v2948, %v2983
        %s2987 = sld [smem:[#allocation6 + $0x43]]
        %v2988 = vstv %s2987
        %v2989 = vmul.f32 %v2988, %v1630
        %v2990 = vmul.f32 %v2988, %v1626
        %v2991 = vmul.f32 %v2988, %v1631
        %2995 = vrot.lane.b32.xlu0 %v2989, 96
        %v2996 = vpop.permute.xlu0 %2995
        %2997 = vrot.lane.b32.xlu0 %v2990, 96
        %v2998 = vpop.permute.xlu0 %2997
        %2999 = vrot.lane.b32.xlu0 %v2991, 96
        %v3000 = vpop.permute.xlu0 %2999
        %v3001 = vsel %vm1695, %v2996, %v2998
        %v3002 = vsel %vm1695, %v2998, %v3000
        %v3006 = vadd.f32 %v2976, %v3001
        %v3007 = vadd.f32 %v2977, %v3002
        %v3008 = vadd.f32 %v2978, %v3000
        %s3009 = sld [smem:[#allocation6 + $0x4a]]
        %v3010 = vstv %s3009
        %v3011 = vmul.f32 %v3010, %v1630
        %v3012 = vmul.f32 %v3010, %v1626
        %v3013 = vmul.f32 %v3010, %v1631
        %3017 = vrot.lane.b32.xlu0 %v3011, 96
        %v3018 = vpop.permute.xlu0 %3017
        %3019 = vrot.lane.b32.xlu0 %v3012, 96
        %v3020 = vpop.permute.xlu0 %3019
        %3021 = vrot.lane.b32.xlu0 %v3013, 96
        %v3022 = vpop.permute.xlu0 %3021
        %v3023 = vsel %vm1695, %v3018, %v3020
        %v3024 = vsel %vm1695, %v3020, %v3022
        %v3028 = vadd.f32 %v2984, %v3023
        %v3029 = vadd.f32 %v2985, %v3024
        %v3030 = vadd.f32 %v2986, %v3022
        %s3031 = sld [smem:[#allocation6 + $0x51]]
        %v3032 = vstv %s3031
        %v3033 = vmul.f32 %v3032, %v1630
        %v3034 = vmul.f32 %v3032, %v1626
        %v3035 = vmul.f32 %v3032, %v1631
        %3039 = vrot.lane.b32.xlu0 %v3033, 64
        %v3040 = vpop.permute.xlu0 %3039
        %3041 = vrot.lane.b32.xlu0 %v3034, 64
        %v3042 = vpop.permute.xlu0 %3041
        %3043 = vrot.lane.b32.xlu0 %v3035, 64
        %v3044 = vpop.permute.xlu0 %3043
        %v3045 = vsel %vm464, %v3040, %v3042
        %v3046 = vsel %vm464, %v3042, %v3044
        %v3050 = vadd.f32 %v3006, %v3045
        %v3051 = vadd.f32 %v3007, %v3046
        %v3052 = vadd.f32 %v3008, %v3044
        %s3053 = sld [smem:[#allocation6 + $0x58]]
        %v3054 = vstv %s3053
        %v3055 = vmul.f32 %v3054, %v1630
        %v3056 = vmul.f32 %v3054, %v1626
        %v3057 = vmul.f32 %v3054, %v1631
        %3061 = vrot.lane.b32.xlu0 %v3055, 64
        %v3062 = vpop.permute.xlu0 %3061
        %3063 = vrot.lane.b32.xlu0 %v3056, 64
        %v3064 = vpop.permute.xlu0 %3063
        %3065 = vrot.lane.b32.xlu0 %v3057, 64
        %v3066 = vpop.permute.xlu0 %3065
        %v3067 = vsel %vm464, %v3062, %v3064
        %v3068 = vsel %vm464, %v3064, %v3066
        %v3072 = vadd.f32 %v3028, %v3067
        %v3073 = vadd.f32 %v3029, %v3068
        %v3074 = vadd.f32 %v3030, %v3066
        %s3075 = sld [smem:[#allocation6 + $0x5f]]
        %v3076 = vstv %s3075
        %v3077 = vmul.f32 %v3076, %v1630
        %v3078 = vmul.f32 %v3076, %v1626
        %v3079 = vmul.f32 %v3076, %v1631
        %3083 = vrot.lane.b32.xlu0 %v3077, 32
        %v3084 = vpop.permute.xlu0 %3083
        %3085 = vrot.lane.b32.xlu0 %v3078, 32
        %v3086 = vpop.permute.xlu0 %3085
        %3087 = vrot.lane.b32.xlu0 %v3079, 32
        %v3088 = vpop.permute.xlu0 %3087
        %v3089 = vsel %vm1784, %v3084, %v3086
        %v3090 = vsel %vm1784, %v3086, %v3088
        %v3094 = vadd.f32 %v3050, %v3089
        %v3095 = vadd.f32 %v3051, %v3090
        %v3096 = vadd.f32 %v3052, %v3088
        %3100 = vrot.lane.b32.xlu0 %v3072, 112
        %v3101 = vpop.permute.xlu0 %3100
        %3102 = vrot.lane.b32.xlu0 %v3073, 112
        %v3103 = vpop.permute.xlu0 %3102
        %3104 = vrot.lane.b32.xlu0 %v3074, 112
        %v3105 = vpop.permute.xlu0 %3104
        %v3106 = vsel %vm1928, %v3101, %v3103
        %v3107 = vsel %vm1928, %v3103, %v3105
        %v3111 = vadd.f32 %v3094, %v3106
        %v3112 = vadd.f32 %v3095, %v3107
        %v3113 = vadd.f32 %v3096, %v3105
        %3117 = vrot.lane.b32.xlu0 %v3111, 111
        %v3118 = vpop.permute.xlu0 %3117
        %3119 = vrot.lane.b32.xlu0 %v3112, 111
        %v3120 = vpop.permute.xlu0 %3119
        %3121 = vrot.lane.b32.xlu0 %v3113, 111
        %v3122 = vpop.permute.xlu0 %3121
        %vm3123 = vcmask 908288
        %v3124 = vsel %vm3123, %v3118, %v3120
        %v3125 = vsel %vm3123, %v3120, %v3122
        %v3128 = vsel %vm2843, %v3124, 0.0
        %v3129 = vsel %vm2844, %v3125, 0.0
        %v3130 = vadd.f32 %v2543, %v3128
        %v3131 = vadd.f32 %v2544, %v3129
        %v3132 = vadd.s32 %v1655, 2
        %v3133 = vadd.s32 %v1656, 2
        %vm3134 = vcmp.ge.s32.totalorder %v3132, 0
        %vm3135 = vcmp.ge.s32.totalorder %v3133, 0
        %vm3136 = vcmp.lt.s32.totalorder %v3132, 16
        %vm3137 = vcmp.lt.s32.totalorder %v3133, 16
        %vm3138 = vmand %vm3134, %vm3136
        %vm3139 = vmand %vm3135, %vm3137
        %s3140 = sld [smem:[#allocation6 + $0x5]]
        %v3141 = vstv %s3140
        %v3142 = vmul.f32 %v3141, %v1618
        %v3143 = vmul.f32 %v3141, %v1614
        %v3144 = vmul.f32 %v3141, %v1619
        %v3145 = vadd.f32 %v3142, 0.0
        %v3146 = vadd.f32 %v3143, 0.0
        %v3147 = vadd.f32 %v3144, 0.0
        %s3148 = sld [smem:[#allocation6 + $0xc]]
        %v3149 = vstv %s3148
        %v3150 = vmul.f32 %v3149, %v1618
        %v3151 = vmul.f32 %v3149, %v1614
        %v3152 = vmul.f32 %v3149, %v1619
        %v3153 = vadd.f32 %v3150, 0.0
        %v3154 = vadd.f32 %v3151, 0.0
        %v3155 = vadd.f32 %v3152, 0.0
        %s3156 = sld [smem:[#allocation6 + $0x13]]
        %v3157 = vstv %s3156
        %v3158 = vmul.f32 %v3157, %v1618
        %v3159 = vmul.f32 %v3157, %v1614
        %v3160 = vmul.f32 %v3157, %v1619
        %3164 = vrot.lane.b32.xlu0 %v3158, 96
        %v3165 = vpop.permute.xlu0 %3164
        %3166 = vrot.lane.b32.xlu0 %v3159, 96
        %v3167 = vpop.permute.xlu0 %3166
        %3168 = vrot.lane.b32.xlu0 %v3160, 96
        %v3169 = vpop.permute.xlu0 %3168
        %v3170 = vsel %vm1695, %v3165, %v3167
        %v3171 = vsel %vm1695, %v3167, %v3169
        %v3175 = vadd.f32 %v3145, %v3170
        %v3176 = vadd.f32 %v3146, %v3171
        %v3177 = vadd.f32 %v3147, %v3169
        %s3178 = sld [smem:[#allocation6 + $0x1a]]
        %v3179 = vstv %s3178
        %v3180 = vmul.f32 %v3179, %v1618
        %v3181 = vmul.f32 %v3179, %v1614
        %v3182 = vmul.f32 %v3179, %v1619
        %3186 = vrot.lane.b32.xlu0 %v3180, 96
        %v3187 = vpop.permute.xlu0 %3186
        %3188 = vrot.lane.b32.xlu0 %v3181, 96
        %v3189 = vpop.permute.xlu0 %3188
        %3190 = vrot.lane.b32.xlu0 %v3182, 96
        %v3191 = vpop.permute.xlu0 %3190
        %v3192 = vsel %vm1695, %v3187, %v3189
        %v3193 = vsel %vm1695, %v3189, %v3191
        %v3197 = vadd.f32 %v3153, %v3192
        %v3198 = vadd.f32 %v3154, %v3193
        %v3199 = vadd.f32 %v3155, %v3191
        %s3200 = sld [smem:[#allocation6 + $0x21]]
        %v3201 = vstv %s3200
        %v3202 = vmul.f32 %v3201, %v1618
        %v3203 = vmul.f32 %v3201, %v1614
        %v3204 = vmul.f32 %v3201, %v1619
        %3208 = vrot.lane.b32.xlu0 %v3202, 64
        %v3209 = vpop.permute.xlu0 %3208
        %3210 = vrot.lane.b32.xlu0 %v3203, 64
        %v3211 = vpop.permute.xlu0 %3210
        %3212 = vrot.lane.b32.xlu0 %v3204, 64
        %v3213 = vpop.permute.xlu0 %3212
        %v3214 = vsel %vm464, %v3209, %v3211
        %v3215 = vsel %vm464, %v3211, %v3213
        %v3219 = vadd.f32 %v3175, %v3214
        %v3220 = vadd.f32 %v3176, %v3215
        %v3221 = vadd.f32 %v3177, %v3213
        %s3222 = sld [smem:[#allocation6 + $0x28]]
        %v3223 = vstv %s3222
        %v3224 = vmul.f32 %v3223, %v1618
        %v3225 = vmul.f32 %v3223, %v1614
        %v3226 = vmul.f32 %v3223, %v1619
        %3230 = vrot.lane.b32.xlu0 %v3224, 64
        %v3231 = vpop.permute.xlu0 %3230
        %3232 = vrot.lane.b32.xlu0 %v3225, 64
        %v3233 = vpop.permute.xlu0 %3232
        %3234 = vrot.lane.b32.xlu0 %v3226, 64
        %v3235 = vpop.permute.xlu0 %3234
        %v3236 = vsel %vm464, %v3231, %v3233
        %v3237 = vsel %vm464, %v3233, %v3235
        %v3241 = vadd.f32 %v3197, %v3236
        %v3242 = vadd.f32 %v3198, %v3237
        %v3243 = vadd.f32 %v3199, %v3235
        %s3244 = sld [smem:[#allocation6 + $0x2f]]
        %v3245 = vstv %s3244
        %v3246 = vmul.f32 %v3245, %v1618
        %v3247 = vmul.f32 %v3245, %v1614
        %v3248 = vmul.f32 %v3245, %v1619
        %3252 = vrot.lane.b32.xlu0 %v3246, 32
        %v3253 = vpop.permute.xlu0 %3252
        %3254 = vrot.lane.b32.xlu0 %v3247, 32
        %v3255 = vpop.permute.xlu0 %3254
        %3256 = vrot.lane.b32.xlu0 %v3248, 32
        %v3257 = vpop.permute.xlu0 %3256
        %v3258 = vsel %vm1784, %v3253, %v3255
        %v3259 = vsel %vm1784, %v3255, %v3257
        %v3263 = vadd.f32 %v3219, %v3258
        %v3264 = vadd.f32 %v3220, %v3259
        %v3265 = vadd.f32 %v3221, %v3257
        %s3266 = sld [smem:[#allocation6 + $0x36]]
        %v3267 = vstv %s3266
        %v3268 = vmul.f32 %v3267, %v1630
        %v3269 = vmul.f32 %v3267, %v1626
        %v3270 = vmul.f32 %v3267, %v1631
        %v3271 = vadd.f32 %v3263, %v3268
        %v3272 = vadd.f32 %v3264, %v3269
        %v3273 = vadd.f32 %v3265, %v3270
        %s3274 = sld [smem:[#allocation6 + $0x3d]]
        %v3275 = vstv %s3274
        %v3276 = vmul.f32 %v3275, %v1630
        %v3277 = vmul.f32 %v3275, %v1626
        %v3278 = vmul.f32 %v3275, %v1631
        %v3279 = vadd.f32 %v3241, %v3276
        %v3280 = vadd.f32 %v3242, %v3277
        %v3281 = vadd.f32 %v3243, %v3278
        %s3282 = sld [smem:[#allocation6 + $0x44]]
        %v3283 = vstv %s3282
        %v3284 = vmul.f32 %v3283, %v1630
        %v3285 = vmul.f32 %v3283, %v1626
        %v3286 = vmul.f32 %v3283, %v1631
        %3290 = vrot.lane.b32.xlu0 %v3284, 96
        %v3291 = vpop.permute.xlu0 %3290
        %3292 = vrot.lane.b32.xlu0 %v3285, 96
        %v3293 = vpop.permute.xlu0 %3292
        %3294 = vrot.lane.b32.xlu0 %v3286, 96
        %v3295 = vpop.permute.xlu0 %3294
        %v3296 = vsel %vm1695, %v3291, %v3293
        %v3297 = vsel %vm1695, %v3293, %v3295
        %v3301 = vadd.f32 %v3271, %v3296
        %v3302 = vadd.f32 %v3272, %v3297
        %v3303 = vadd.f32 %v3273, %v3295
        %s3304 = sld [smem:[#allocation6 + $0x4b]]
        %v3305 = vstv %s3304
        %v3306 = vmul.f32 %v3305, %v1630
        %v3307 = vmul.f32 %v3305, %v1626
        %v3308 = vmul.f32 %v3305, %v1631
        %3312 = vrot.lane.b32.xlu0 %v3306, 96
        %v3313 = vpop.permute.xlu0 %3312
        %3314 = vrot.lane.b32.xlu0 %v3307, 96
        %v3315 = vpop.permute.xlu0 %3314
        %3316 = vrot.lane.b32.xlu0 %v3308, 96
        %v3317 = vpop.permute.xlu0 %3316
        %v3318 = vsel %vm1695, %v3313, %v3315
        %v3319 = vsel %vm1695, %v3315, %v3317
        %v3323 = vadd.f32 %v3279, %v3318
        %v3324 = vadd.f32 %v3280, %v3319
        %v3325 = vadd.f32 %v3281, %v3317
        %s3326 = sld [smem:[#allocation6 + $0x52]]
        %v3327 = vstv %s3326
        %v3328 = vmul.f32 %v3327, %v1630
        %v3329 = vmul.f32 %v3327, %v1626
        %v3330 = vmul.f32 %v3327, %v1631
        %3334 = vrot.lane.b32.xlu0 %v3328, 64
        %v3335 = vpop.permute.xlu0 %3334
        %3336 = vrot.lane.b32.xlu0 %v3329, 64
        %v3337 = vpop.permute.xlu0 %3336
        %3338 = vrot.lane.b32.xlu0 %v3330, 64
        %v3339 = vpop.permute.xlu0 %3338
        %v3340 = vsel %vm464, %v3335, %v3337
        %v3341 = vsel %vm464, %v3337, %v3339
        %v3345 = vadd.f32 %v3301, %v3340
        %v3346 = vadd.f32 %v3302, %v3341
        %v3347 = vadd.f32 %v3303, %v3339
        %s3348 = sld [smem:[#allocation6 + $0x59]]
        %v3349 = vstv %s3348
        %v3350 = vmul.f32 %v3349, %v1630
        %v3351 = vmul.f32 %v3349, %v1626
        %v3352 = vmul.f32 %v3349, %v1631
        %3356 = vrot.lane.b32.xlu0 %v3350, 64
        %v3357 = vpop.permute.xlu0 %3356
        %3358 = vrot.lane.b32.xlu0 %v3351, 64
        %v3359 = vpop.permute.xlu0 %3358
        %3360 = vrot.lane.b32.xlu0 %v3352, 64
        %v3361 = vpop.permute.xlu0 %3360
        %v3362 = vsel %vm464, %v3357, %v3359
        %v3363 = vsel %vm464, %v3359, %v3361
        %v3367 = vadd.f32 %v3323, %v3362
        %v3368 = vadd.f32 %v3324, %v3363
        %v3369 = vadd.f32 %v3325, %v3361
        %s3370 = sld [smem:[#allocation6 + $0x60]]
        %v3371 = vstv %s3370
        %v3372 = vmul.f32 %v3371, %v1630
        %v3373 = vmul.f32 %v3371, %v1626
        %v3374 = vmul.f32 %v3371, %v1631
        %3378 = vrot.lane.b32.xlu0 %v3372, 32
        %v3379 = vpop.permute.xlu0 %3378
        %3380 = vrot.lane.b32.xlu0 %v3373, 32
        %v3381 = vpop.permute.xlu0 %3380
        %3382 = vrot.lane.b32.xlu0 %v3374, 32
        %v3383 = vpop.permute.xlu0 %3382
        %v3384 = vsel %vm1784, %v3379, %v3381
        %v3385 = vsel %vm1784, %v3381, %v3383
        %v3389 = vadd.f32 %v3345, %v3384
        %v3390 = vadd.f32 %v3346, %v3385
        %v3391 = vadd.f32 %v3347, %v3383
        %3395 = vrot.lane.b32.xlu0 %v3367, 112
        %v3396 = vpop.permute.xlu0 %3395
        %3397 = vrot.lane.b32.xlu0 %v3368, 112
        %v3398 = vpop.permute.xlu0 %3397
        %3399 = vrot.lane.b32.xlu0 %v3369, 112
        %v3400 = vpop.permute.xlu0 %3399
        %v3401 = vsel %vm1928, %v3396, %v3398
        %v3402 = vsel %vm1928, %v3398, %v3400
        %v3406 = vadd.f32 %v3389, %v3401
        %v3407 = vadd.f32 %v3390, %v3402
        %v3408 = vadd.f32 %v3391, %v3400
        %3412 = vrot.lane.b32.xlu0 %v3406, 110
        %v3413 = vpop.permute.xlu0 %3412
        %3414 = vrot.lane.b32.xlu0 %v3407, 110
        %v3415 = vpop.permute.xlu0 %3414
        %3416 = vrot.lane.b32.xlu0 %v3408, 110
        %v3417 = vpop.permute.xlu0 %3416
        %vm3418 = vcmask 900096
        %v3419 = vsel %vm3418, %v3413, %v3415
        %v3420 = vsel %vm3418, %v3415, %v3417
        %v3423 = vsel %vm3138, %v3419, 0.0
        %v3424 = vsel %vm3139, %v3420, 0.0
        %v3425 = vadd.f32 %v2835, %v3423
        %v3426 = vadd.f32 %v2836, %v3424
        %v3427 = vadd.s32 %v1655, 3
        %v3428 = vadd.s32 %v1656, 3
        %vm3429 = vcmp.ge.s32.totalorder %v3427, 0
        %vm3430 = vcmp.ge.s32.totalorder %v3428, 0
        %vm3431 = vcmp.lt.s32.totalorder %v3427, 16
        %vm3432 = vcmp.lt.s32.totalorder %v3428, 16
        %vm3433 = vmand %vm3429, %vm3431
        %vm3434 = vmand %vm3430, %vm3432
        %s3435 = sld [smem:[#allocation6 + $0x6]]
        %v3436 = vstv %s3435
        %v3437 = vmul.f32 %v3436, %v1618
        %v3438 = vmul.f32 %v3436, %v1614
        %v3439 = vmul.f32 %v3436, %v1619
        %v3440 = vadd.f32 %v3437, 0.0
        %v3441 = vadd.f32 %v3438, 0.0
        %v3442 = vadd.f32 %v3439, 0.0
        %s3443 = sld [smem:[#allocation6 + $0xd]]
        %v3444 = vstv %s3443
        %v3445 = vmul.f32 %v3444, %v1618
        %v3446 = vmul.f32 %v3444, %v1614
        %v3447 = vmul.f32 %v3444, %v1619
        %v3448 = vadd.f32 %v3445, 0.0
        %v3449 = vadd.f32 %v3446, 0.0
        %v3450 = vadd.f32 %v3447, 0.0
        %s3451 = sld [smem:[#allocation6 + $0x14]]
        %v3452 = vstv %s3451
        %v3453 = vmul.f32 %v3452, %v1618
        %v3454 = vmul.f32 %v3452, %v1614
        %v3455 = vmul.f32 %v3452, %v1619
        %3459 = vrot.lane.b32.xlu0 %v3453, 96
        %v3460 = vpop.permute.xlu0 %3459
        %3461 = vrot.lane.b32.xlu0 %v3454, 96
        %v3462 = vpop.permute.xlu0 %3461
        %3463 = vrot.lane.b32.xlu0 %v3455, 96
        %v3464 = vpop.permute.xlu0 %3463
        %v3465 = vsel %vm1695, %v3460, %v3462
        %v3466 = vsel %vm1695, %v3462, %v3464
        %v3470 = vadd.f32 %v3440, %v3465
        %v3471 = vadd.f32 %v3441, %v3466
        %v3472 = vadd.f32 %v3442, %v3464
        %s3473 = sld [smem:[#allocation6 + $0x1b]]
        %v3474 = vstv %s3473
        %v3475 = vmul.f32 %v3474, %v1618
        %v3476 = vmul.f32 %v3474, %v1614
        %v3477 = vmul.f32 %v3474, %v1619
        %3481 = vrot.lane.b32.xlu0 %v3475, 96
        %v3482 = vpop.permute.xlu0 %3481
        %3483 = vrot.lane.b32.xlu0 %v3476, 96
        %v3484 = vpop.permute.xlu0 %3483
        %3485 = vrot.lane.b32.xlu0 %v3477, 96
        %v3486 = vpop.permute.xlu0 %3485
        %v3487 = vsel %vm1695, %v3482, %v3484
        %v3488 = vsel %vm1695, %v3484, %v3486
        %v3492 = vadd.f32 %v3448, %v3487
        %v3493 = vadd.f32 %v3449, %v3488
        %v3494 = vadd.f32 %v3450, %v3486
        %s3495 = sld [smem:[#allocation6 + $0x22]]
        %v3496 = vstv %s3495
        %v3497 = vmul.f32 %v3496, %v1618
        %v3498 = vmul.f32 %v3496, %v1614
        %v3499 = vmul.f32 %v3496, %v1619
        %3503 = vrot.lane.b32.xlu0 %v3497, 64
        %v3504 = vpop.permute.xlu0 %3503
        %3505 = vrot.lane.b32.xlu0 %v3498, 64
        %v3506 = vpop.permute.xlu0 %3505
        %3507 = vrot.lane.b32.xlu0 %v3499, 64
        %v3508 = vpop.permute.xlu0 %3507
        %v3509 = vsel %vm464, %v3504, %v3506
        %v3510 = vsel %vm464, %v3506, %v3508
        %v3514 = vadd.f32 %v3470, %v3509
        %v3515 = vadd.f32 %v3471, %v3510
        %v3516 = vadd.f32 %v3472, %v3508
        %s3517 = sld [smem:[#allocation6 + $0x29]]
        %v3518 = vstv %s3517
        %v3519 = vmul.f32 %v3518, %v1618
        %v3520 = vmul.f32 %v3518, %v1614
        %v3521 = vmul.f32 %v3518, %v1619
        %3525 = vrot.lane.b32.xlu0 %v3519, 64
        %v3526 = vpop.permute.xlu0 %3525
        %3527 = vrot.lane.b32.xlu0 %v3520, 64
        %v3528 = vpop.permute.xlu0 %3527
        %3529 = vrot.lane.b32.xlu0 %v3521, 64
        %v3530 = vpop.permute.xlu0 %3529
        %v3531 = vsel %vm464, %v3526, %v3528
        %v3532 = vsel %vm464, %v3528, %v3530
        %v3536 = vadd.f32 %v3492, %v3531
        %v3537 = vadd.f32 %v3493, %v3532
        %v3538 = vadd.f32 %v3494, %v3530
        %s3539 = sld [smem:[#allocation6 + $0x30]]
        %v3540 = vstv %s3539
        %v3541 = vmul.f32 %v3540, %v1618
        %v3542 = vmul.f32 %v3540, %v1614
        %v3543 = vmul.f32 %v3540, %v1619
        %3547 = vrot.lane.b32.xlu0 %v3541, 32
        %v3548 = vpop.permute.xlu0 %3547
        %3549 = vrot.lane.b32.xlu0 %v3542, 32
        %v3550 = vpop.permute.xlu0 %3549
        %3551 = vrot.lane.b32.xlu0 %v3543, 32
        %v3552 = vpop.permute.xlu0 %3551
        %v3553 = vsel %vm1784, %v3548, %v3550
        %v3554 = vsel %vm1784, %v3550, %v3552
        %v3558 = vadd.f32 %v3514, %v3553
        %v3559 = vadd.f32 %v3515, %v3554
        %v3560 = vadd.f32 %v3516, %v3552
        %s3561 = sld [smem:[#allocation6 + $0x37]]
        %v3562 = vstv %s3561
        %v3563 = vmul.f32 %v3562, %v1630
        %v3564 = vmul.f32 %v3562, %v1626
        %v3565 = vmul.f32 %v3562, %v1631
        %v3566 = vadd.f32 %v3558, %v3563
        %v3567 = vadd.f32 %v3559, %v3564
        %v3568 = vadd.f32 %v3560, %v3565
        %s3569 = sld [smem:[#allocation6 + $0x3e]]
        %v3570 = vstv %s3569
        %v3571 = vmul.f32 %v3570, %v1630
        %v3572 = vmul.f32 %v3570, %v1626
        %v3573 = vmul.f32 %v3570, %v1631
        %v3574 = vadd.f32 %v3536, %v3571
        %v3575 = vadd.f32 %v3537, %v3572
        %v3576 = vadd.f32 %v3538, %v3573
        %s3577 = sld [smem:[#allocation6 + $0x45]]
        %v3578 = vstv %s3577
        %v3579 = vmul.f32 %v3578, %v1630
        %v3580 = vmul.f32 %v3578, %v1626
        %v3581 = vmul.f32 %v3578, %v1631
        %3585 = vrot.lane.b32.xlu0 %v3579, 96
        %v3586 = vpop.permute.xlu0 %3585
        %3587 = vrot.lane.b32.xlu0 %v3580, 96
        %v3588 = vpop.permute.xlu0 %3587
        %3589 = vrot.lane.b32.xlu0 %v3581, 96
        %v3590 = vpop.permute.xlu0 %3589
        %v3591 = vsel %vm1695, %v3586, %v3588
        %v3592 = vsel %vm1695, %v3588, %v3590
        %v3596 = vadd.f32 %v3566, %v3591
        %v3597 = vadd.f32 %v3567, %v3592
        %v3598 = vadd.f32 %v3568, %v3590
        %s3599 = sld [smem:[#allocation6 + $0x4c]]
        %v3600 = vstv %s3599
        %v3601 = vmul.f32 %v3600, %v1630
        %v3602 = vmul.f32 %v3600, %v1626
        %v3603 = vmul.f32 %v3600, %v1631
        %3607 = vrot.lane.b32.xlu0 %v3601, 96
        %v3608 = vpop.permute.xlu0 %3607
        %3609 = vrot.lane.b32.xlu0 %v3602, 96
        %v3610 = vpop.permute.xlu0 %3609
        %3611 = vrot.lane.b32.xlu0 %v3603, 96
        %v3612 = vpop.permute.xlu0 %3611
        %v3613 = vsel %vm1695, %v3608, %v3610
        %v3614 = vsel %vm1695, %v3610, %v3612
        %v3618 = vadd.f32 %v3574, %v3613
        %v3619 = vadd.f32 %v3575, %v3614
        %v3620 = vadd.f32 %v3576, %v3612
        %s3621 = sld [smem:[#allocation6 + $0x53]]
        %v3622 = vstv %s3621
        %v3623 = vmul.f32 %v3622, %v1630
        %v3624 = vmul.f32 %v3622, %v1626
        %v3625 = vmul.f32 %v3622, %v1631
        %3629 = vrot.lane.b32.xlu0 %v3623, 64
        %v3630 = vpop.permute.xlu0 %3629
        %3631 = vrot.lane.b32.xlu0 %v3624, 64
        %v3632 = vpop.permute.xlu0 %3631
        %3633 = vrot.lane.b32.xlu0 %v3625, 64
        %v3634 = vpop.permute.xlu0 %3633
        %v3635 = vsel %vm464, %v3630, %v3632
        %v3636 = vsel %vm464, %v3632, %v3634
        %v3640 = vadd.f32 %v3596, %v3635
        %v3641 = vadd.f32 %v3597, %v3636
        %v3642 = vadd.f32 %v3598, %v3634
        %s3643 = sld [smem:[#allocation6 + $0x5a]]
        %v3644 = vstv %s3643
        %v3645 = vmul.f32 %v3644, %v1630
        %v3646 = vmul.f32 %v3644, %v1626
        %v3647 = vmul.f32 %v3644, %v1631
        %3651 = vrot.lane.b32.xlu0 %v3645, 64
        %v3652 = vpop.permute.xlu0 %3651
        %3653 = vrot.lane.b32.xlu0 %v3646, 64
        %v3654 = vpop.permute.xlu0 %3653
        %3655 = vrot.lane.b32.xlu0 %v3647, 64
        %v3656 = vpop.permute.xlu0 %3655
        %v3657 = vsel %vm464, %v3652, %v3654
        %v3658 = vsel %vm464, %v3654, %v3656
        %v3662 = vadd.f32 %v3618, %v3657
        %v3663 = vadd.f32 %v3619, %v3658
        %v3664 = vadd.f32 %v3620, %v3656
        %s3665 = sld [smem:[#allocation6 + $0x61]]
        %v3666 = vstv %s3665
        %v3667 = vmul.f32 %v3666, %v1630
        %v3668 = vmul.f32 %v3666, %v1626
        %v3669 = vmul.f32 %v3666, %v1631
        %3673 = vrot.lane.b32.xlu0 %v3667, 32
        %v3674 = vpop.permute.xlu0 %3673
        %3675 = vrot.lane.b32.xlu0 %v3668, 32
        %v3676 = vpop.permute.xlu0 %3675
        %3677 = vrot.lane.b32.xlu0 %v3669, 32
        %v3678 = vpop.permute.xlu0 %3677
        %v3679 = vsel %vm1784, %v3674, %v3676
        %v3680 = vsel %vm1784, %v3676, %v3678
        %v3684 = vadd.f32 %v3640, %v3679
        %v3685 = vadd.f32 %v3641, %v3680
        %v3686 = vadd.f32 %v3642, %v3678
        %3690 = vrot.lane.b32.xlu0 %v3662, 112
        %v3691 = vpop.permute.xlu0 %3690
        %3692 = vrot.lane.b32.xlu0 %v3663, 112
        %v3693 = vpop.permute.xlu0 %3692
        %3694 = vrot.lane.b32.xlu0 %v3664, 112
        %v3695 = vpop.permute.xlu0 %3694
        %v3696 = vsel %vm1928, %v3691, %v3693
        %v3697 = vsel %vm1928, %v3693, %v3695
        %v3701 = vadd.f32 %v3684, %v3696
        %v3702 = vadd.f32 %v3685, %v3697
        %v3703 = vadd.f32 %v3686, %v3695
        %3707 = vrot.lane.b32.xlu0 %v3701, 109
        %v3708 = vpop.permute.xlu0 %3707
        %3709 = vrot.lane.b32.xlu0 %v3702, 109
        %v3710 = vpop.permute.xlu0 %3709
        %3711 = vrot.lane.b32.xlu0 %v3703, 109
        %v3712 = vpop.permute.xlu0 %3711
        %vm3713 = vcmask 891904
        %v3714 = vsel %vm3713, %v3708, %v3710
        %v3715 = vsel %vm3713, %v3710, %v3712
        %v3718 = vsel %vm3433, %v3714, 0.0
        %v3719 = vsel %vm3434, %v3715, 0.0
        %v3720 = vadd.f32 %v3130, %v3718
        %v3721 = vadd.f32 %v3131, %v3719
        %v3722 = vadd.f32 %v3720, %v3425
        %v3723 = vadd.f32 %v3721, %v3426
        %s3724 = sld [smem:[#allocation7]]
        %s3725 = sld [smem:[#allocation7 + $0x1]]
        %s3726 = sld [smem:[#allocation7 + $0x2]]
        %s3727 = sld [smem:[#allocation7 + $0x3]]
        %v3728 = vstv %s3726
        %v3729 = vsub.f32 %v3722, %v3728
        %v3730 = vsub.f32 %v3723, %v3728
        %s3731 = sadd.f32 %s3727, 1e-05
        %v3732 = vstv %s3731
        %v3733 = vrsqrt.pop %v3732
        %s3734 = vtos %v3733
        %v3735 = vstv %s3734
        %v3736 = vmul.f32 %v3729, %v3735
        %v3737 = vmul.f32 %v3730, %v3735
        %v3738 = vstv %s3724
        %v3739 = vmul.f32 %v3736, %v3738
        %v3740 = vmul.f32 %v3737, %v3738
        %v3741 = vstv %s3725
        %v3742 = vadd.f32 %v3739, %v3741
        %v3743 = vadd.f32 %v3740, %v3741
        %v3744 = vxor.u32 %v3742, 2147483648
        %v3745 = vxor.u32 %v3743, 2147483648
        %v3746 = vmul.f32 %v3744, 1.442695
        %v3747 = vpow.pop %v3746
        %v3748 = vmul.f32 %v3745, 1.442695
        %v3749 = vpow.pop %v3748
        %v3750 = vadd.f32 %v3747, 1.0
        %v3751 = vadd.f32 %v3749, 1.0
        %v3752 = vrcp.pop %v3750
        %v3753 = vmul.f32 1.0, %v3752
        %v3754 = vrcp.pop %v3751
        %v3755 = vmul.f32 1.0, %v3754
        %v3756 = vlaneseq
        %v3757 = vshrl.u32 %v3756, 7
        %v3758 = vsub.s32 0, %v3757
        %v3759 = vrot.slane %v3753, %v3758
        %v3760 = vlaneseq
        %v3761 = vshrl.u32 %v3760, 7
        %v3762 = vsub.s32 0, %v3761
        %v3763 = vrot.slane %v3755, %v3762
        %v3764 = vmul.f32 %v1538, %v3759
        %v3765 = vmul.f32 %v1539, %v3763
        %v3766 = vmul.f32 %v1540, %v3759
        %v3767 = vmul.f32 %v1541, %v3763
        %v3768 = vmul.f32 %v1542, %v3759
        %v3769 = vmul.f32 %v1543, %v3763
        %v3770 = vmul.f32 %v1544, %v3759
        %v3771 = vmul.f32 %v1545, %v3763
        %v3772 = vmul.f32 %v1546, %v3759
        %v3773 = vmul.f32 %v1547, %v3763
        %v3774 = vmul.f32 %v1548, %v3759
        %v3775 = vmul.f32 %v1549, %v3763
        %v3776 = vmul.f32 %v1550, %v3759
        %v3777 = vmul.f32 %v1551, %v3763
        %v3778 = vmul.f32 %v1552, %v3759
        %v3779 = vmul.f32 %v1553, %v3763
        %3780 = vst [vmem:[%s269] sm:$0xff] %v3764
        %3781 = vst [vmem:[%s269 + $0x8] sm:$0xff] %v3765
        %3782 = vst [vmem:[%s269 + $0x10] sm:$0xff] %v3766
        %3783 = vst [vmem:[%s269 + $0x18] sm:$0xff] %v3767
        %3784 = vst [vmem:[%s269 + $0x20] sm:$0xff] %v3768
        %3785 = vst [vmem:[%s269 + $0x28] sm:$0xff] %v3769
        %3786 = vst [vmem:[%s269 + $0x30] sm:$0xff] %v3770
        %3787 = vst [vmem:[%s269 + $0x38] sm:$0xff] %v3771
        %3788 = vst [vmem:[%s269 + $0x40] sm:$0xff] %v3772
        %3789 = vst [vmem:[%s269 + $0x48] sm:$0xff] %v3773
        %3790 = vst [vmem:[%s269 + $0x50] sm:$0xff] %v3774
        %3791 = vst [vmem:[%s269 + $0x58] sm:$0xff] %v3775
        %3792 = vst [vmem:[%s269 + $0x60] sm:$0xff] %v3776
        %3793 = vst [vmem:[%s269 + $0x68] sm:$0xff] %v3777
        %3794 = vst [vmem:[%s269 + $0x70] sm:$0xff] %v3778
        %3795 = vst [vmem:[%s269 + $0x78] sm:$0xff] %v3779
        %s3796 = sand.u32 %s142, 1
        %s3797 = scalar_lea.sflag [#allocation4], %s3796
        %s3798 = sand.u32 %s142, 1
        %s3799 = smul.addr %s3798, 128
        %s3800 = scalar_lea.vmem [#allocation9], %s3799
        // Predicated region
        $region53: #{tpu_custom_call.1} parent=39 // pred_check
          %p3801 = pneg %p152
        $region54: #{tpu_custom_call.1} parent=39 // pred_check_branch
          %3803 = sbr.rel (%p3801) target = $region56
        $region55: #{tpu_custom_call.1} parent=39 // pred_region
          %s3805 = ssub.s32 2048, 2048
          %3806 = vsyncadd %s3797, %s3805
          %s3807 = smul.addr %s24, 16
          %s3808 = smul.addr %s3807, 128
          %s3809 = scalar_lea.hbm %s5, %s3808
          %s3810 = sshll.u32 %s3800, 4
          %s3811 = int_to_ptr.vmem [resolvable:$true] %s3810
          %3816 = dma.vmem_to_hbm [thread:$0]  %s3811, 2048, %s3809, %s3797, 256, 256, 16
        $region56: #{tpu_custom_call.1} parent=39 // pred_fallthru
          _
      $region40: #{tpu_custom_call.1} parent=5 // pred_fallthru
        _
      %p3817 = scmp.le.s32.totalorder 2, %s19
      // Predicated region
      $region57: #{tpu_custom_call.1} parent=5 // pred_check
        %p3818 = pneg %p3817
      $region58: #{tpu_custom_call.1} parent=5 // pred_check_branch
        %3820 = sbr.rel (%p3818) target = $region60
      $region59: #{tpu_custom_call.1} parent=5 // pred_region
        %s3821 = ssub.s32 %s19, 2
        // Predicated region
        $region61: #{tpu_custom_call.1} parent=59 // pred_check
          %p3822 = pneg %p158
        $region62: #{tpu_custom_call.1} parent=59 // pred_check_branch
          %3824 = sbr.rel (%p3822) target = $region64
        $region63: #{tpu_custom_call.1} parent=59 // pred_region
          %s3825 = sand.u32 %s143, 1
          %s3826 = scalar_lea.sflag [#allocation4], %s3825
          %s3827 = sand.u32 %s143, 1
          %s3828 = smul.addr %s3827, 128
          %s3829 = scalar_lea.vmem [#allocation9], %s3828
          %3830 = dma.done %s3826, 2048
        $region64: #{tpu_custom_call.1} parent=59 // pred_fallthru
          _
      $region60: #{tpu_custom_call.1} parent=5 // pred_fallthru
        _
    $region6: #{tpu_custom_call.1} parent=1 // loop_footer
      %s23 = sadd.s32 1, %s19
    $region7: #{tpu_custom_call.1} parent=1 // loop_footer_branch
      %18 = sbr.rel target = $region3
    $region8: #{tpu_custom_call.1} parent=1 // loop_exit
      _
    %3831 = vsyncpa [#allocation3], 1
    %s3832 = scalar_lea.sflag [#allocation3], 1
    %3833 = vsyncpa %s3832, 1
    %3834 = vsyncpa [#allocation4], 1
    %s3835 = scalar_lea.sflag [#allocation4], 1
    %3836 = vsyncpa %s3835, 1
    %3837 = vsyncpa [#allocation5], 1
    %s3838 = scalar_lea.sflag [#allocation5], 1
    %3839 = vsyncpa %s3838, 1
    %3840 = vsyncpa [#allocation8], 1

</llo_original>
